<compile_context>
chip_gen: v6e
topology: v6e:2x2x1
jax: 0.10.0
libtpu: 0.0.40
codegen_flags: <defaults>
</compile_context>

<pallas_src>
import jax
import jax.numpy as jnp
from jax import lax
from jax.experimental import pallas as pl
from jax.experimental.pallas import tpu as pltpu

H = 128        # embedding / hidden dim, fixed by the module definition
OUT_PAD = 128  # Linear(128, 2) output padded to a full lane width for dense stores


def lstm_att_kernel(x_ref, wih_ref, whh_ref, b_ref, wlin_ref, blin_ref,
                    out_ref, gx_ref, outs_ref):
    """One batch tile.

    x_ref   : (Bt, T, H)   embedded inputs, batch-major (contiguous DMA), matmul dtype
    wih_ref : (H, 4H)      input->gates weights (pre-transposed, matmul dtype)
    whh_ref : (H, 4H)      hidden->gates weights (pre-transposed, matmul dtype)
    b_ref   : (1, 4H)      b_ih + b_hh (f32)
    wlin_ref: (H, 128)     final linear weight, zero-padded from (H, 2) (f32)
    blin_ref: (1, 128)     final linear bias, zero-padded (f32)
    out_ref : (Bt, 128)    lane-dense output block (columns 0..1 are real)
    gx_ref  : (T, Bt, 4H)  scratch: precomputed input projections (time-major)
    outs_ref: (T, Bt, H)   scratch: LSTM outputs for attention (time-major)
    """
    Bt, T, _ = x_ref.shape
    Hd = whh_ref.shape[0]
    mm_dtype = whh_ref.dtype                           # bf16 (default) or f32, set by wrapper

    wih = wih_ref[...]                                 # already matmul dtype (pre-cast once)
    whh = whh_ref[...]                                 # hoisted, reused every step
    bias = b_ref[...]                                  # (1, 4H) f32

    # --- input projection hoisted off the serial recurrence: T independent matmuls
    # (static t => static slices of the batch-major block) writing the time-major gx
    # scratch directly; the recurrence then only reads gx_ref[t] (leading-dim offset).
    for t in range(T):
        xt = x_ref[:, t, :]                            # (Bt, H) static strided VMEM read
        gx_ref[t] = jnp.dot(xt, wih, preferred_element_type=jnp.float32) + bias

    def sigmoid(v):
        # one EUP push (tanh) instead of exp + reciprocal; extra mul/add land in idle VALU slots
        return 0.5 * jnp.tanh(0.5 * v) + 0.5

    # --- serial recurrence: only h @ W_hh + f32 gate math on the critical path.
    def step(t, carry):
        h, c = carry
        gates = gx_ref[t] + jnp.dot(h.astype(mm_dtype), whh,
                                    preferred_element_type=jnp.float32)   # (Bt, 4H)
        i = sigmoid(gates[:, 0:Hd])
        f = sigmoid(gates[:, Hd:2 * Hd])
        g = jnp.tanh(gates[:, 2 * Hd:3 * Hd])
        o = sigmoid(gates[:, 3 * Hd:4 * Hd])
        c_new = f * c + i * g
        h_new = o * jnp.tanh(c_new)
        outs_ref[t] = h_new                            # stash lstm output for attention
        return (h_new, c_new)

    h0 = jnp.zeros((Bt, Hd), jnp.float32)
    c0 = jnp.zeros((Bt, Hd), jnp.float32)
    h_fin, _ = lax.fori_loop(0, T, step, (h0, c0),
                             unroll=True if T <= 16 else 8)   # cap unroll for long sequences

    # --- attention: logits_t = <out_t, h_final>, softmax over T, weighted sum.
    # Batch stays on sublanes ((Bt, 1) columns only); no lanes<->sublanes relayout, and the
    # (T, Bt, H) outputs are streamed per-t from VMEM instead of held live in vregs.
    logit_cols = [jnp.sum(outs_ref[t] * h_fin, axis=-1, keepdims=True)   # (Bt, 1)
                  for t in range(T)]
    m = logit_cols[0]
    for t in range(1, T):
        m = jnp.maximum(m, logit_cols[t])
    den = jnp.zeros_like(m)
    att = jnp.zeros((Bt, Hd), jnp.float32)
    for t in range(T):
        w = jnp.exp(logit_cols[t] - m)                 # (Bt, 1)
        den = den + w
        att = att + w * outs_ref[t]                    # stride-0 lane broadcast of w
    att = att * (1.0 / den)                            # exact divide (outside the recurrence)

    # Lane-dense head: (Bt, 128) unmasked stores; columns 0..1 are the real logits.
    out_ref[...] = (jnp.dot(att, wlin_ref[...], preferred_element_type=jnp.float32)
                    + blin_ref[...])


def _round_up(x, m):
    return ((x + m - 1) // m) * m


def prepare_params(params, matmul_dtype=jnp.bfloat16):
    """One-time param prep: cast MXU operands, pad the output head to a lane-dense (128, 128)."""
    emb, wih, whh, b, wlin, blin = params
    n_out = wlin.shape[1]
    wlin_p = jnp.zeros((H, OUT_PAD), jnp.float32).at[:, :n_out].set(wlin)
    blin_p = jnp.zeros((1, OUT_PAD), jnp.float32).at[:, :n_out].set(blin)
    return (emb.astype(matmul_dtype),      # embedded activations come out in matmul dtype
            wih.astype(matmul_dtype),
            whh.astype(matmul_dtype),
            b.astype(jnp.float32),         # bias / gate math stay f32
            wlin_p, blin_p)


def lstm_att_forward(tokens, kparams, *, batch_tile=256):
    """tokens: (B, T) int32. kparams: output of prepare_params. Returns (B, 2) float32."""
    emb, wih, whh, b, wlin_p, blin_p = kparams
    B, T = tokens.shape

    # Embedding lookup stays in XLA (single fused gather, already in the MXU dtype so the
    # materialized activation is half the bytes of f32 when bf16 params are used).
    # TODO(synk): fold the gather into the kernel (scalar-prefetched token ids + DMA row gather
    # from an HBM-resident table) to avoid materializing (B, T, 128) in HBM at all.
    x = jnp.take(emb, tokens, axis=0)                  # (B, T, H) batch-major — no transpose pass

    # Batch tile: multiple of 8 sublanes; aim for >= 2 grid steps so the "parallel" grid axis
    # can shard batch tiles across the two v7x TensorCores; capped for VMEM.
    tb = min(batch_tile, max(8, _round_up((B + 1) // 2, 8)))
    B_pad = _round_up(B, tb)
    if B_pad != B:
        x = jnp.pad(x, ((0, B_pad - B), (0, 0), (0, 0)))

    out = pl.pallas_call(
        lstm_att_kernel,
        out_shape=jax.ShapeDtypeStruct((B_pad, OUT_PAD), jnp.float32),
        grid_spec=pltpu.PrefetchScalarGridSpec(
            num_scalar_prefetch=0,
            grid=(B_pad // tb,),
            in_specs=[
                pl.BlockSpec((tb, T, H), lambda i: (i, 0, 0)),     # x: contiguous batch tile
                pl.BlockSpec((H, 4 * H), lambda i: (0, 0)),        # W_ih^T
                pl.BlockSpec((H, 4 * H), lambda i: (0, 0)),        # W_hh^T
                pl.BlockSpec((1, 4 * H), lambda i: (0, 0)),        # b_ih + b_hh
                pl.BlockSpec((H, OUT_PAD), lambda i: (0, 0)),      # W_lin^T (padded)
                pl.BlockSpec((1, OUT_PAD), lambda i: (0, 0)),      # b_lin (padded)
            ],
            out_specs=pl.BlockSpec((tb, OUT_PAD), lambda i: (i, 0)),
            scratch_shapes=[
                # TODO(synk): for long sequences store gx in bf16 / chunk over time to stay
                # inside v7x's 64 MiB physical VMEM; at T=8 f32 is cheap and more accurate.
                pltpu.VMEM((T, tb, 4 * H), jnp.float32),           # precomputed input gates
                pltpu.VMEM((T, tb, H), jnp.float32),               # lstm outputs for attention
            ],
        ),
        compiler_params=pltpu.CompilerParams(
            dimension_semantics=("parallel",),                     # shards batch tiles over TCs
            vmem_limit_bytes=32 * 1024 * 1024,
        ),
    )(x, wih, whh, b, wlin_p, blin_p)

    return out[:B, :2]


def make_params(vocab_size, key):
    """Deterministic synthetic parameters matching the PyTorch module's shapes."""
    ks = jax.random.split(key, 7)
    bound = 1.0 / jnp.sqrt(H)
    emb = jax.random.normal(ks[0], (vocab_size + 1, H), jnp.float32) * 0.1
    emb = emb.at[vocab_size].set(0.0)                 # padding_idx row is zero
    # PyTorch LSTM weights: weight_ih (4H, D), weight_hh (4H, H), biases (4H,) each.
    w_ih = jax.random.uniform(ks[1], (4 * H, H), jnp.float32, -bound, bound)
    w_hh = jax.random.uniform(ks[2], (4 * H, H), jnp.float32, -bound, bound)
    b_ih = jax.random.uniform(ks[3], (4 * H,), jnp.float32, -bound, bound)
    b_hh = jax.random.uniform(ks[4], (4 * H,), jnp.float32, -bound, bound)
    w_lin = jax.random.uniform(ks[5], (2, H), jnp.float32, -bound, bound)
    b_lin = jax.random.uniform(ks[6], (2,), jnp.float32, -bound, bound)
    # Pre-transpose / fold for the kernel.
    wih = w_ih.T                                      # (H, 4H)
    whh = w_hh.T                                      # (H, 4H)
    b = (b_ih + b_hh).reshape(1, 4 * H)
    wlin = w_lin.T                                    # (H, 2)
    blin = b_lin.reshape(1, 2)
    return emb, wih, whh, b, wlin, blin


def reference_forward(tokens, params):
    """Pure-JAX reference of the PyTorch forward, for the correctness check."""
    emb, wih, whh, b, wlin, blin = params
    x = emb[tokens]                                   # (B, T, H)
    B, T, _ = x.shape

    def cell(carry, x_t):
        h, c = carry
        gates = x_t @ wih + h @ whh + b
        i = jax.nn.sigmoid(gates[:, 0:H])
        f = jax.nn.sigmoid(gates[:, H:2 * H])
        g = jnp.tanh(gates[:, 2 * H:3 * H])
        o = jax.nn.sigmoid(gates[:, 3 * H:4 * H])
        c = f * c + i * g
        h = o * jnp.tanh(c)
        return (h, c), h

    (h_fin, _), outs = lax.scan(cell,
                                (jnp.zeros((B, H)), jnp.zeros((B, H))),
                                jnp.transpose(x, (1, 0, 2)))
    outs = jnp.transpose(outs, (1, 0, 2))             # (B, T, H)
    w = jnp.einsum('bth,bh->bt', outs, h_fin)
    soft = jax.nn.softmax(w, axis=1)
    att = jnp.einsum('bth,bt->bh', outs, soft)
    return att @ wlin + blin


if __name__ == "__main__":
    key = jax.random.PRNGKey(0)
    vocab_size = 50
    B, T = 2, 8

    pk, tk = jax.random.split(key)
    params = make_params(vocab_size, pk)
    tokens = jax.random.randint(tk, (B, T), 0, vocab_size, dtype=jnp.int32)
    tokens = tokens.at[1, T - 1].set(vocab_size)      # exercise the padding index

    ref = reference_forward(tokens, params)

    # f32 MXU operands: tight correctness check against the pure-JAX reference.
    kp_f32 = prepare_params(params, matmul_dtype=jnp.float32)
    out_f32 = jax.block_until_ready(lstm_att_forward(tokens, kp_f32))
    assert out_f32.shape == (B, 2)
    assert jnp.allclose(out_f32, ref, atol=1e-3, rtol=1e-3), (out_f32, ref)

    # bf16 MXU operands (recommended default on v5e/v6e/v7x); f32 accumulation + f32 gate math.
    kp_bf16 = prepare_params(params, matmul_dtype=jnp.bfloat16)
    out_bf16 = jax.block_until_ready(lstm_att_forward(tokens, kp_bf16))
    assert out_bf16.shape == (B, 2)
    assert jnp.allclose(out_bf16, ref, atol=1e-1, rtol=1e-1), (out_bf16, ref)

    print("KERNEL_OK")
</pallas_src>

<mosaic_0001>
module attributes {stable_mosaic.version = 11 : i64} {
  func.func @lstm_att_kernel(%arg0: i32, %arg1: memref<8x8x128xf32, #tpu.memory_space<vmem>>, %arg2: memref<128x512xf32, #tpu.memory_space<vmem>>, %arg3: memref<128x512xf32, #tpu.memory_space<vmem>>, %arg4: memref<1x512xf32, #tpu.memory_space<vmem>>, %arg5: memref<128x128xf32, #tpu.memory_space<vmem>>, %arg6: memref<1x128xf32, #tpu.memory_space<vmem>>, %arg7: memref<8x128xf32, #tpu.memory_space<vmem>>, %arg8: memref<8x8x512xf32, #tpu.memory_space<vmem>>, %arg9: memref<8x8x128xf32, #tpu.memory_space<vmem>>) attributes {dimension_semantics = [#tpu.dimension_semantics<parallel>], iteration_bounds = array<i64: 1>, scalar_prefetch = 0 : i64, scratch_operands = 2 : i64, tpu.core_type = #tpu.core_type<tc>, window_params = [{transform_indices = @transform_0, window_bounds = array<i64: 8, 8, 128>}, {pipeline_mode = #tpu.pipeline_mode<synchronous>, transform_indices = @transform_1, window_bounds = array<i64: 128, 512>}, {pipeline_mode = #tpu.pipeline_mode<synchronous>, transform_indices = @transform_2, window_bounds = array<i64: 128, 512>}, {pipeline_mode = #tpu.pipeline_mode<synchronous>, transform_indices = @transform_3, window_bounds = array<i64: 1, 512>}, {pipeline_mode = #tpu.pipeline_mode<synchronous>, transform_indices = @transform_4, window_bounds = array<i64: 128, 128>}, {pipeline_mode = #tpu.pipeline_mode<synchronous>, transform_indices = @transform_5, window_bounds = array<i64: 1, 128>}, {transform_indices = @transform_6, window_bounds = array<i64: 8, 128>}]} {
    %c0 = arith.constant 0 : index
    %c0_0 = arith.constant 0 : index
    %0 = vector.load %arg2[%c0, %c0_0] : memref<128x512xf32, #tpu.memory_space<vmem>>, vector<128x512xf32>
    %c0_1 = arith.constant 0 : index
    %c0_2 = arith.constant 0 : index
    %1 = vector.load %arg3[%c0_1, %c0_2] : memref<128x512xf32, #tpu.memory_space<vmem>>, vector<128x512xf32>
    %c0_3 = arith.constant 0 : index
    %c0_4 = arith.constant 0 : index
    %2 = vector.load %arg4[%c0_3, %c0_4] : memref<1x512xf32, #tpu.memory_space<vmem>>, vector<1x512xf32>
    %c0_5 = arith.constant 0 : index
    %c0_6 = arith.constant 0 : index
    %c0_7 = arith.constant 0 : index
    %3 = vector.load %arg1[%c0_5, %c0_6, %c0_7] : memref<8x8x128xf32, #tpu.memory_space<vmem>>, vector<8x1x128xf32>
    %4 = vector.shape_cast %3 : vector<8x1x128xf32> to vector<8x128xf32>
    %cst = arith.constant dense<0.000000e+00> : vector<8x512xf32>
    %5 = tpu.matmul %4, %0, %cst {dimension_numbers = #tpu.dot_dimension_numbers<[1], [0], [0], [1], [0, 0, 1, 1], [], []>} : vector<8x128xf32>, vector<128x512xf32>, vector<8x512xf32> -> vector<8x512xf32>
    %6 = vector.broadcast %2 : vector<1x512xf32> to vector<8x512xf32>
    %7 = arith.addf %5, %6 : vector<8x512xf32>
    %c0_8 = arith.constant 0 : index
    %c0_9 = arith.constant 0 : index
    %c0_10 = arith.constant 0 : index
    %8 = vector.load %arg8[%c0_8, %c0_9, %c0_10] : memref<8x8x512xf32, #tpu.memory_space<vmem>>, vector<1x8x512xf32>
    %9 = vector.shape_cast %8 : vector<1x8x512xf32> to vector<8x512xf32>
    %10 = vector.shape_cast %7 : vector<8x512xf32> to vector<1x8x512xf32>
    tpu.vector_store %arg8[%c0_8, %c0_9, %c0_10], %10 {strides = array<i32>} : memref<8x8x512xf32, #tpu.memory_space<vmem>>, vector<1x8x512xf32>,
    %c0_11 = arith.constant 0 : index
    %c1 = arith.constant 1 : index
    %c0_12 = arith.constant 0 : index
    %11 = vector.load %arg1[%c0_11, %c1, %c0_12] : memref<8x8x128xf32, #tpu.memory_space<vmem>>, vector<8x1x128xf32>
    %12 = vector.shape_cast %11 : vector<8x1x128xf32> to vector<8x128xf32>
    %cst_13 = arith.constant dense<0.000000e+00> : vector<8x512xf32>
    %13 = tpu.matmul %12, %0, %cst_13 {dimension_numbers = #tpu.dot_dimension_numbers<[1], [0], [0], [1], [0, 0, 1, 1], [], []>} : vector<8x128xf32>, vector<128x512xf32>, vector<8x512xf32> -> vector<8x512xf32>
    %14 = vector.broadcast %2 : vector<1x512xf32> to vector<8x512xf32>
    %15 = arith.addf %13, %14 : vector<8x512xf32>
    %c1_14 = arith.constant 1 : index
    %c0_15 = arith.constant 0 : index
    %c0_16 = arith.constant 0 : index
    %16 = vector.load %arg8[%c1_14, %c0_15, %c0_16] : memref<8x8x512xf32, #tpu.memory_space<vmem>>, vector<1x8x512xf32>
    %17 = vector.shape_cast %16 : vector<1x8x512xf32> to vector<8x512xf32>
    %18 = vector.shape_cast %15 : vector<8x512xf32> to vector<1x8x512xf32>
    tpu.vector_store %arg8[%c1_14, %c0_15, %c0_16], %18 {strides = array<i32>} : memref<8x8x512xf32, #tpu.memory_space<vmem>>, vector<1x8x512xf32>,
    %c0_17 = arith.constant 0 : index
    %c2 = arith.constant 2 : index
    %c0_18 = arith.constant 0 : index
    %19 = vector.load %arg1[%c0_17, %c2, %c0_18] : memref<8x8x128xf32, #tpu.memory_space<vmem>>, vector<8x1x128xf32>
    %20 = vector.shape_cast %19 : vector<8x1x128xf32> to vector<8x128xf32>
    %cst_19 = arith.constant dense<0.000000e+00> : vector<8x512xf32>
    %21 = tpu.matmul %20, %0, %cst_19 {dimension_numbers = #tpu.dot_dimension_numbers<[1], [0], [0], [1], [0, 0, 1, 1], [], []>} : vector<8x128xf32>, vector<128x512xf32>, vector<8x512xf32> -> vector<8x512xf32>
    %22 = vector.broadcast %2 : vector<1x512xf32> to vector<8x512xf32>
    %23 = arith.addf %21, %22 : vector<8x512xf32>
    %c2_20 = arith.constant 2 : index
    %c0_21 = arith.constant 0 : index
    %c0_22 = arith.constant 0 : index
    %24 = vector.load %arg8[%c2_20, %c0_21, %c0_22] : memref<8x8x512xf32, #tpu.memory_space<vmem>>, vector<1x8x512xf32>
    %25 = vector.shape_cast %24 : vector<1x8x512xf32> to vector<8x512xf32>
    %26 = vector.shape_cast %23 : vector<8x512xf32> to vector<1x8x512xf32>
    tpu.vector_store %arg8[%c2_20, %c0_21, %c0_22], %26 {strides = array<i32>} : memref<8x8x512xf32, #tpu.memory_space<vmem>>, vector<1x8x512xf32>,
    %c0_23 = arith.constant 0 : index
    %c3 = arith.constant 3 : index
    %c0_24 = arith.constant 0 : index
    %27 = vector.load %arg1[%c0_23, %c3, %c0_24] : memref<8x8x128xf32, #tpu.memory_space<vmem>>, vector<8x1x128xf32>
    %28 = vector.shape_cast %27 : vector<8x1x128xf32> to vector<8x128xf32>
    %cst_25 = arith.constant dense<0.000000e+00> : vector<8x512xf32>
    %29 = tpu.matmul %28, %0, %cst_25 {dimension_numbers = #tpu.dot_dimension_numbers<[1], [0], [0], [1], [0, 0, 1, 1], [], []>} : vector<8x128xf32>, vector<128x512xf32>, vector<8x512xf32> -> vector<8x512xf32>
    %30 = vector.broadcast %2 : vector<1x512xf32> to vector<8x512xf32>
    %31 = arith.addf %29, %30 : vector<8x512xf32>
    %c3_26 = arith.constant 3 : index
    %c0_27 = arith.constant 0 : index
    %c0_28 = arith.constant 0 : index
    %32 = vector.load %arg8[%c3_26, %c0_27, %c0_28] : memref<8x8x512xf32, #tpu.memory_space<vmem>>, vector<1x8x512xf32>
    %33 = vector.shape_cast %32 : vector<1x8x512xf32> to vector<8x512xf32>
    %34 = vector.shape_cast %31 : vector<8x512xf32> to vector<1x8x512xf32>
    tpu.vector_store %arg8[%c3_26, %c0_27, %c0_28], %34 {strides = array<i32>} : memref<8x8x512xf32, #tpu.memory_space<vmem>>, vector<1x8x512xf32>,
    %c0_29 = arith.constant 0 : index
    %c4 = arith.constant 4 : index
    %c0_30 = arith.constant 0 : index
    %35 = vector.load %arg1[%c0_29, %c4, %c0_30] : memref<8x8x128xf32, #tpu.memory_space<vmem>>, vector<8x1x128xf32>
    %36 = vector.shape_cast %35 : vector<8x1x128xf32> to vector<8x128xf32>
    %cst_31 = arith.constant dense<0.000000e+00> : vector<8x512xf32>
    %37 = tpu.matmul %36, %0, %cst_31 {dimension_numbers = #tpu.dot_dimension_numbers<[1], [0], [0], [1], [0, 0, 1, 1], [], []>} : vector<8x128xf32>, vector<128x512xf32>, vector<8x512xf32> -> vector<8x512xf32>
    %38 = vector.broadcast %2 : vector<1x512xf32> to vector<8x512xf32>
    %39 = arith.addf %37, %38 : vector<8x512xf32>
    %c4_32 = arith.constant 4 : index
    %c0_33 = arith.constant 0 : index
    %c0_34 = arith.constant 0 : index
    %40 = vector.load %arg8[%c4_32, %c0_33, %c0_34] : memref<8x8x512xf32, #tpu.memory_space<vmem>>, vector<1x8x512xf32>
    %41 = vector.shape_cast %40 : vector<1x8x512xf32> to vector<8x512xf32>
    %42 = vector.shape_cast %39 : vector<8x512xf32> to vector<1x8x512xf32>
    tpu.vector_store %arg8[%c4_32, %c0_33, %c0_34], %42 {strides = array<i32>} : memref<8x8x512xf32, #tpu.memory_space<vmem>>, vector<1x8x512xf32>,
    %c0_35 = arith.constant 0 : index
    %c5 = arith.constant 5 : index
    %c0_36 = arith.constant 0 : index
    %43 = vector.load %arg1[%c0_35, %c5, %c0_36] : memref<8x8x128xf32, #tpu.memory_space<vmem>>, vector<8x1x128xf32>
    %44 = vector.shape_cast %43 : vector<8x1x128xf32> to vector<8x128xf32>
    %cst_37 = arith.constant dense<0.000000e+00> : vector<8x512xf32>
    %45 = tpu.matmul %44, %0, %cst_37 {dimension_numbers = #tpu.dot_dimension_numbers<[1], [0], [0], [1], [0, 0, 1, 1], [], []>} : vector<8x128xf32>, vector<128x512xf32>, vector<8x512xf32> -> vector<8x512xf32>
    %46 = vector.broadcast %2 : vector<1x512xf32> to vector<8x512xf32>
    %47 = arith.addf %45, %46 : vector<8x512xf32>
    %c5_38 = arith.constant 5 : index
    %c0_39 = arith.constant 0 : index
    %c0_40 = arith.constant 0 : index
    %48 = vector.load %arg8[%c5_38, %c0_39, %c0_40] : memref<8x8x512xf32, #tpu.memory_space<vmem>>, vector<1x8x512xf32>
    %49 = vector.shape_cast %48 : vector<1x8x512xf32> to vector<8x512xf32>
    %50 = vector.shape_cast %47 : vector<8x512xf32> to vector<1x8x512xf32>
    tpu.vector_store %arg8[%c5_38, %c0_39, %c0_40], %50 {strides = array<i32>} : memref<8x8x512xf32, #tpu.memory_space<vmem>>, vector<1x8x512xf32>,
    %c0_41 = arith.constant 0 : index
    %c6 = arith.constant 6 : index
    %c0_42 = arith.constant 0 : index
    %51 = vector.load %arg1[%c0_41, %c6, %c0_42] : memref<8x8x128xf32, #tpu.memory_space<vmem>>, vector<8x1x128xf32>
    %52 = vector.shape_cast %51 : vector<8x1x128xf32> to vector<8x128xf32>
    %cst_43 = arith.constant dense<0.000000e+00> : vector<8x512xf32>
    %53 = tpu.matmul %52, %0, %cst_43 {dimension_numbers = #tpu.dot_dimension_numbers<[1], [0], [0], [1], [0, 0, 1, 1], [], []>} : vector<8x128xf32>, vector<128x512xf32>, vector<8x512xf32> -> vector<8x512xf32>
    %54 = vector.broadcast %2 : vector<1x512xf32> to vector<8x512xf32>
    %55 = arith.addf %53, %54 : vector<8x512xf32>
    %c6_44 = arith.constant 6 : index
    %c0_45 = arith.constant 0 : index
    %c0_46 = arith.constant 0 : index
    %56 = vector.load %arg8[%c6_44, %c0_45, %c0_46] : memref<8x8x512xf32, #tpu.memory_space<vmem>>, vector<1x8x512xf32>
    %57 = vector.shape_cast %56 : vector<1x8x512xf32> to vector<8x512xf32>
    %58 = vector.shape_cast %55 : vector<8x512xf32> to vector<1x8x512xf32>
    tpu.vector_store %arg8[%c6_44, %c0_45, %c0_46], %58 {strides = array<i32>} : memref<8x8x512xf32, #tpu.memory_space<vmem>>, vector<1x8x512xf32>,
    %c0_47 = arith.constant 0 : index
    %c7 = arith.constant 7 : index
    %c0_48 = arith.constant 0 : index
    %59 = vector.load %arg1[%c0_47, %c7, %c0_48] : memref<8x8x128xf32, #tpu.memory_space<vmem>>, vector<8x1x128xf32>
    %60 = vector.shape_cast %59 : vector<8x1x128xf32> to vector<8x128xf32>
    %cst_49 = arith.constant dense<0.000000e+00> : vector<8x512xf32>
    %61 = tpu.matmul %60, %0, %cst_49 {dimension_numbers = #tpu.dot_dimension_numbers<[1], [0], [0], [1], [0, 0, 1, 1], [], []>} : vector<8x128xf32>, vector<128x512xf32>, vector<8x512xf32> -> vector<8x512xf32>
    %62 = vector.broadcast %2 : vector<1x512xf32> to vector<8x512xf32>
    %63 = arith.addf %61, %62 : vector<8x512xf32>
    %c7_50 = arith.constant 7 : index
    %c0_51 = arith.constant 0 : index
    %c0_52 = arith.constant 0 : index
    %64 = vector.load %arg8[%c7_50, %c0_51, %c0_52] : memref<8x8x512xf32, #tpu.memory_space<vmem>>, vector<1x8x512xf32>
    %65 = vector.shape_cast %64 : vector<1x8x512xf32> to vector<8x512xf32>
    %66 = vector.shape_cast %63 : vector<8x512xf32> to vector<1x8x512xf32>
    tpu.vector_store %arg8[%c7_50, %c0_51, %c0_52], %66 {strides = array<i32>} : memref<8x8x512xf32, #tpu.memory_space<vmem>>, vector<1x8x512xf32>,
    %cst_53 = arith.constant 0.000000e+00 : f32
    %67 = vector.broadcast %cst_53 : f32 to vector<8x128xf32>
    %cst_54 = arith.constant 0.000000e+00 : f32
    %68 = vector.broadcast %cst_54 : f32 to vector<8x128xf32>
    %c0_i32 = arith.constant 0 : i32
    %69 = arith.index_cast %c0_i32 : i32 to index
    %c0_55 = arith.constant 0 : index
    %c0_56 = arith.constant 0 : index
    %70 = vector.load %arg8[%69, %c0_55, %c0_56] : memref<8x8x512xf32, #tpu.memory_space<vmem>>, vector<1x8x512xf32>
    %71 = vector.shape_cast %70 : vector<1x8x512xf32> to vector<8x512xf32>
    %cst_57 = arith.constant dense<0.000000e+00> : vector<8x512xf32>
    %72 = tpu.matmul %67, %1, %cst_57 {dimension_numbers = #tpu.dot_dimension_numbers<[1], [0], [0], [1], [0, 0, 1, 1], [], []>} : vector<8x128xf32>, vector<128x512xf32>, vector<8x512xf32> -> vector<8x512xf32>
    %73 = arith.addf %71, %72 : vector<8x512xf32>
    %74 = vector.extract_strided_slice %73 {offsets = [0, 0], sizes = [8, 128], strides = [1, 1]} : vector<8x512xf32> to vector<8x128xf32>
    %cst_58 = arith.constant 5.000000e-01 : f32
    %75 = vector.broadcast %cst_58 : f32 to vector<8x128xf32>
    %76 = arith.mulf %75, %74 : vector<8x128xf32>
    %77 = math.tanh %76 : vector<8x128xf32>
    %cst_59 = arith.constant 5.000000e-01 : f32
    %78 = vector.broadcast %cst_59 : f32 to vector<8x128xf32>
    %79 = arith.mulf %78, %77 : vector<8x128xf32>
    %cst_60 = arith.constant 5.000000e-01 : f32
    %80 = vector.broadcast %cst_60 : f32 to vector<8x128xf32>
    %81 = arith.addf %79, %80 : vector<8x128xf32>
    %82 = vector.extract_strided_slice %73 {offsets = [0, 128], sizes = [8, 128], strides = [1, 1]} : vector<8x512xf32> to vector<8x128xf32>
    %cst_61 = arith.constant 5.000000e-01 : f32
    %83 = vector.broadcast %cst_61 : f32 to vector<8x128xf32>
    %84 = arith.mulf %83, %82 : vector<8x128xf32>
    %85 = math.tanh %84 : vector<8x128xf32>
    %cst_62 = arith.constant 5.000000e-01 : f32
    %86 = vector.broadcast %cst_62 : f32 to vector<8x128xf32>
    %87 = arith.mulf %86, %85 : vector<8x128xf32>
    %cst_63 = arith.constant 5.000000e-01 : f32
    %88 = vector.broadcast %cst_63 : f32 to vector<8x128xf32>
    %89 = arith.addf %87, %88 : vector<8x128xf32>
    %90 = vector.extract_strided_slice %73 {offsets = [0, 256], sizes = [8, 128], strides = [1, 1]} : vector<8x512xf32> to vector<8x128xf32>
    %91 = math.tanh %90 : vector<8x128xf32>
    %92 = vector.extract_strided_slice %73 {offsets = [0, 384], sizes = [8, 128], strides = [1, 1]} : vector<8x512xf32> to vector<8x128xf32>
    %cst_64 = arith.constant 5.000000e-01 : f32
    %93 = vector.broadcast %cst_64 : f32 to vector<8x128xf32>
    %94 = arith.mulf %93, %92 : vector<8x128xf32>
    %95 = math.tanh %94 : vector<8x128xf32>
    %cst_65 = arith.constant 5.000000e-01 : f32
    %96 = vector.broadcast %cst_65 : f32 to vector<8x128xf32>
    %97 = arith.mulf %96, %95 : vector<8x128xf32>
    %cst_66 = arith.constant 5.000000e-01 : f32
    %98 = vector.broadcast %cst_66 : f32 to vector<8x128xf32>
    %99 = arith.addf %97, %98 : vector<8x128xf32>
    %100 = arith.mulf %89, %68 : vector<8x128xf32>
    %101 = arith.mulf %81, %91 : vector<8x128xf32>
    %102 = arith.addf %100, %101 : vector<8x128xf32>
    %103 = math.tanh %102 : vector<8x128xf32>
    %104 = arith.mulf %99, %103 : vector<8x128xf32>
    %105 = arith.index_cast %c0_i32 : i32 to index
    %c0_67 = arith.constant 0 : index
    %c0_68 = arith.constant 0 : index
    %106 = vector.load %arg9[%105, %c0_67, %c0_68] : memref<8x8x128xf32, #tpu.memory_space<vmem>>, vector<1x8x128xf32>
    %107 = vector.shape_cast %106 : vector<1x8x128xf32> to vector<8x128xf32>
    %108 = vector.shape_cast %104 : vector<8x128xf32> to vector<1x8x128xf32>
    tpu.vector_store %arg9[%105, %c0_67, %c0_68], %108 {strides = array<i32>} : memref<8x8x128xf32, #tpu.memory_space<vmem>>, vector<1x8x128xf32>,
    %c1_i32 = arith.constant 1 : i32
    %109 = arith.index_cast %c1_i32 : i32 to index
    %c0_69 = arith.constant 0 : index
    %c0_70 = arith.constant 0 : index
    %110 = vector.load %arg8[%109, %c0_69, %c0_70] : memref<8x8x512xf32, #tpu.memory_space<vmem>>, vector<1x8x512xf32>
    %111 = vector.shape_cast %110 : vector<1x8x512xf32> to vector<8x512xf32>
    %cst_71 = arith.constant dense<0.000000e+00> : vector<8x512xf32>
    %112 = tpu.matmul %104, %1, %cst_71 {dimension_numbers = #tpu.dot_dimension_numbers<[1], [0], [0], [1], [0, 0, 1, 1], [], []>} : vector<8x128xf32>, vector<128x512xf32>, vector<8x512xf32> -> vector<8x512xf32>
    %113 = arith.addf %111, %112 : vector<8x512xf32>
    %114 = vector.extract_strided_slice %113 {offsets = [0, 0], sizes = [8, 128], strides = [1, 1]} : vector<8x512xf32> to vector<8x128xf32>
    %cst_72 = arith.constant 5.000000e-01 : f32
    %115 = vector.broadcast %cst_72 : f32 to vector<8x128xf32>
    %116 = arith.mulf %115, %114 : vector<8x128xf32>
    %117 = math.tanh %116 : vector<8x128xf32>
    %cst_73 = arith.constant 5.000000e-01 : f32
    %118 = vector.broadcast %cst_73 : f32 to vector<8x128xf32>
    %119 = arith.mulf %118, %117 : vector<8x128xf32>
    %cst_74 = arith.constant 5.000000e-01 : f32
    %120 = vector.broadcast %cst_74 : f32 to vector<8x128xf32>
    %121 = arith.addf %119, %120 : vector<8x128xf32>
    %122 = vector.extract_strided_slice %113 {offsets = [0, 128], sizes = [8, 128], strides = [1, 1]} : vector<8x512xf32> to vector<8x128xf32>
    %cst_75 = arith.constant 5.000000e-01 : f32
    %123 = vector.broadcast %cst_75 : f32 to vector<8x128xf32>
    %124 = arith.mulf %123, %122 : vector<8x128xf32>
    %125 = math.tanh %124 : vector<8x128xf32>
    %cst_76 = arith.constant 5.000000e-01 : f32
    %126 = vector.broadcast %cst_76 : f32 to vector<8x128xf32>
    %127 = arith.mulf %126, %125 : vector<8x128xf32>
    %cst_77 = arith.constant 5.000000e-01 : f32
    %128 = vector.broadcast %cst_77 : f32 to vector<8x128xf32>
    %129 = arith.addf %127, %128 : vector<8x128xf32>
    %130 = vector.extract_strided_slice %113 {offsets = [0, 256], sizes = [8, 128], strides = [1, 1]} : vector<8x512xf32> to vector<8x128xf32>
    %131 = math.tanh %130 : vector<8x128xf32>
    %132 = vector.extract_strided_slice %113 {offsets = [0, 384], sizes = [8, 128], strides = [1, 1]} : vector<8x512xf32> to vector<8x128xf32>
    %cst_78 = arith.constant 5.000000e-01 : f32
    %133 = vector.broadcast %cst_78 : f32 to vector<8x128xf32>
    %134 = arith.mulf %133, %132 : vector<8x128xf32>
    %135 = math.tanh %134 : vector<8x128xf32>
    %cst_79 = arith.constant 5.000000e-01 : f32
    %136 = vector.broadcast %cst_79 : f32 to vector<8x128xf32>
    %137 = arith.mulf %136, %135 : vector<8x128xf32>
    %cst_80 = arith.constant 5.000000e-01 : f32
    %138 = vector.broadcast %cst_80 : f32 to vector<8x128xf32>
    %139 = arith.addf %137, %138 : vector<8x128xf32>
    %140 = arith.mulf %129, %102 : vector<8x128xf32>
    %141 = arith.mulf %121, %131 : vector<8x128xf32>
    %142 = arith.addf %140, %141 : vector<8x128xf32>
    %143 = math.tanh %142 : vector<8x128xf32>
    %144 = arith.mulf %139, %143 : vector<8x128xf32>
    %145 = arith.index_cast %c1_i32 : i32 to index
    %c0_81 = arith.constant 0 : index
    %c0_82 = arith.constant 0 : index
    %146 = vector.load %arg9[%145, %c0_81, %c0_82] : memref<8x8x128xf32, #tpu.memory_space<vmem>>, vector<1x8x128xf32>
    %147 = vector.shape_cast %146 : vector<1x8x128xf32> to vector<8x128xf32>
    %148 = vector.shape_cast %144 : vector<8x128xf32> to vector<1x8x128xf32>
    tpu.vector_store %arg9[%145, %c0_81, %c0_82], %148 {strides = array<i32>} : memref<8x8x128xf32, #tpu.memory_space<vmem>>, vector<1x8x128xf32>,
    %c2_i32 = arith.constant 2 : i32
    %149 = arith.index_cast %c2_i32 : i32 to index
    %c0_83 = arith.constant 0 : index
    %c0_84 = arith.constant 0 : index
    %150 = vector.load %arg8[%149, %c0_83, %c0_84] : memref<8x8x512xf32, #tpu.memory_space<vmem>>, vector<1x8x512xf32>
    %151 = vector.shape_cast %150 : vector<1x8x512xf32> to vector<8x512xf32>
    %cst_85 = arith.constant dense<0.000000e+00> : vector<8x512xf32>
    %152 = tpu.matmul %144, %1, %cst_85 {dimension_numbers = #tpu.dot_dimension_numbers<[1], [0], [0], [1], [0, 0, 1, 1], [], []>} : vector<8x128xf32>, vector<128x512xf32>, vector<8x512xf32> -> vector<8x512xf32>
    %153 = arith.addf %151, %152 : vector<8x512xf32>
    %154 = vector.extract_strided_slice %153 {offsets = [0, 0], sizes = [8, 128], strides = [1, 1]} : vector<8x512xf32> to vector<8x128xf32>
    %cst_86 = arith.constant 5.000000e-01 : f32
    %155 = vector.broadcast %cst_86 : f32 to vector<8x128xf32>
    %156 = arith.mulf %155, %154 : vector<8x128xf32>
    %157 = math.tanh %156 : vector<8x128xf32>
    %cst_87 = arith.constant 5.000000e-01 : f32
    %158 = vector.broadcast %cst_87 : f32 to vector<8x128xf32>
    %159 = arith.mulf %158, %157 : vector<8x128xf32>
    %cst_88 = arith.constant 5.000000e-01 : f32
    %160 = vector.broadcast %cst_88 : f32 to vector<8x128xf32>
    %161 = arith.addf %159, %160 : vector<8x128xf32>
    %162 = vector.extract_strided_slice %153 {offsets = [0, 128], sizes = [8, 128], strides = [1, 1]} : vector<8x512xf32> to vector<8x128xf32>
    %cst_89 = arith.constant 5.000000e-01 : f32
    %163 = vector.broadcast %cst_89 : f32 to vector<8x128xf32>
    %164 = arith.mulf %163, %162 : vector<8x128xf32>
    %165 = math.tanh %164 : vector<8x128xf32>
    %cst_90 = arith.constant 5.000000e-01 : f32
    %166 = vector.broadcast %cst_90 : f32 to vector<8x128xf32>
    %167 = arith.mulf %166, %165 : vector<8x128xf32>
    %cst_91 = arith.constant 5.000000e-01 : f32
    %168 = vector.broadcast %cst_91 : f32 to vector<8x128xf32>
    %169 = arith.addf %167, %168 : vector<8x128xf32>
    %170 = vector.extract_strided_slice %153 {offsets = [0, 256], sizes = [8, 128], strides = [1, 1]} : vector<8x512xf32> to vector<8x128xf32>
    %171 = math.tanh %170 : vector<8x128xf32>
    %172 = vector.extract_strided_slice %153 {offsets = [0, 384], sizes = [8, 128], strides = [1, 1]} : vector<8x512xf32> to vector<8x128xf32>
    %cst_92 = arith.constant 5.000000e-01 : f32
    %173 = vector.broadcast %cst_92 : f32 to vector<8x128xf32>
    %174 = arith.mulf %173, %172 : vector<8x128xf32>
    %175 = math.tanh %174 : vector<8x128xf32>
    %cst_93 = arith.constant 5.000000e-01 : f32
    %176 = vector.broadcast %cst_93 : f32 to vector<8x128xf32>
    %177 = arith.mulf %176, %175 : vector<8x128xf32>
    %cst_94 = arith.constant 5.000000e-01 : f32
    %178 = vector.broadcast %cst_94 : f32 to vector<8x128xf32>
    %179 = arith.addf %177, %178 : vector<8x128xf32>
    %180 = arith.mulf %169, %142 : vector<8x128xf32>
    %181 = arith.mulf %161, %171 : vector<8x128xf32>
    %182 = arith.addf %180, %181 : vector<8x128xf32>
    %183 = math.tanh %182 : vector<8x128xf32>
    %184 = arith.mulf %179, %183 : vector<8x128xf32>
    %185 = arith.index_cast %c2_i32 : i32 to index
    %c0_95 = arith.constant 0 : index
    %c0_96 = arith.constant 0 : index
    %186 = vector.load %arg9[%185, %c0_95, %c0_96] : memref<8x8x128xf32, #tpu.memory_space<vmem>>, vector<1x8x128xf32>
    %187 = vector.shape_cast %186 : vector<1x8x128xf32> to vector<8x128xf32>
    %188 = vector.shape_cast %184 : vector<8x128xf32> to vector<1x8x128xf32>
    tpu.vector_store %arg9[%185, %c0_95, %c0_96], %188 {strides = array<i32>} : memref<8x8x128xf32, #tpu.memory_space<vmem>>, vector<1x8x128xf32>,
    %c3_i32 = arith.constant 3 : i32
    %189 = arith.index_cast %c3_i32 : i32 to index
    %c0_97 = arith.constant 0 : index
    %c0_98 = arith.constant 0 : index
    %190 = vector.load %arg8[%189, %c0_97, %c0_98] : memref<8x8x512xf32, #tpu.memory_space<vmem>>, vector<1x8x512xf32>
    %191 = vector.shape_cast %190 : vector<1x8x512xf32> to vector<8x512xf32>
    %cst_99 = arith.constant dense<0.000000e+00> : vector<8x512xf32>
    %192 = tpu.matmul %184, %1, %cst_99 {dimension_numbers = #tpu.dot_dimension_numbers<[1], [0], [0], [1], [0, 0, 1, 1], [], []>} : vector<8x128xf32>, vector<128x512xf32>, vector<8x512xf32> -> vector<8x512xf32>
    %193 = arith.addf %191, %192 : vector<8x512xf32>
    %194 = vector.extract_strided_slice %193 {offsets = [0, 0], sizes = [8, 128], strides = [1, 1]} : vector<8x512xf32> to vector<8x128xf32>
    %cst_100 = arith.constant 5.000000e-01 : f32
    %195 = vector.broadcast %cst_100 : f32 to vector<8x128xf32>
    %196 = arith.mulf %195, %194 : vector<8x128xf32>
    %197 = math.tanh %196 : vector<8x128xf32>
    %cst_101 = arith.constant 5.000000e-01 : f32
    %198 = vector.broadcast %cst_101 : f32 to vector<8x128xf32>
    %199 = arith.mulf %198, %197 : vector<8x128xf32>
    %cst_102 = arith.constant 5.000000e-01 : f32
    %200 = vector.broadcast %cst_102 : f32 to vector<8x128xf32>
    %201 = arith.addf %199, %200 : vector<8x128xf32>
    %202 = vector.extract_strided_slice %193 {offsets = [0, 128], sizes = [8, 128], strides = [1, 1]} : vector<8x512xf32> to vector<8x128xf32>
    %cst_103 = arith.constant 5.000000e-01 : f32
    %203 = vector.broadcast %cst_103 : f32 to vector<8x128xf32>
    %204 = arith.mulf %203, %202 : vector<8x128xf32>
    %205 = math.tanh %204 : vector<8x128xf32>
    %cst_104 = arith.constant 5.000000e-01 : f32
    %206 = vector.broadcast %cst_104 : f32 to vector<8x128xf32>
    %207 = arith.mulf %206, %205 : vector<8x128xf32>
    %cst_105 = arith.constant 5.000000e-01 : f32
    %208 = vector.broadcast %cst_105 : f32 to vector<8x128xf32>
    %209 = arith.addf %207, %208 : vector<8x128xf32>
    %210 = vector.extract_strided_slice %193 {offsets = [0, 256], sizes = [8, 128], strides = [1, 1]} : vector<8x512xf32> to vector<8x128xf32>
    %211 = math.tanh %210 : vector<8x128xf32>
    %212 = vector.extract_strided_slice %193 {offsets = [0, 384], sizes = [8, 128], strides = [1, 1]} : vector<8x512xf32> to vector<8x128xf32>
    %cst_106 = arith.constant 5.000000e-01 : f32
    %213 = vector.broadcast %cst_106 : f32 to vector<8x128xf32>
    %214 = arith.mulf %213, %212 : vector<8x128xf32>
    %215 = math.tanh %214 : vector<8x128xf32>
    %cst_107 = arith.constant 5.000000e-01 : f32
    %216 = vector.broadcast %cst_107 : f32 to vector<8x128xf32>
    %217 = arith.mulf %216, %215 : vector<8x128xf32>
    %cst_108 = arith.constant 5.000000e-01 : f32
    %218 = vector.broadcast %cst_108 : f32 to vector<8x128xf32>
    %219 = arith.addf %217, %218 : vector<8x128xf32>
    %220 = arith.mulf %209, %182 : vector<8x128xf32>
    %221 = arith.mulf %201, %211 : vector<8x128xf32>
    %222 = arith.addf %220, %221 : vector<8x128xf32>
    %223 = math.tanh %222 : vector<8x128xf32>
    %224 = arith.mulf %219, %223 : vector<8x128xf32>
    %225 = arith.index_cast %c3_i32 : i32 to index
    %c0_109 = arith.constant 0 : index
    %c0_110 = arith.constant 0 : index
    %226 = vector.load %arg9[%225, %c0_109, %c0_110] : memref<8x8x128xf32, #tpu.memory_space<vmem>>, vector<1x8x128xf32>
    %227 = vector.shape_cast %226 : vector<1x8x128xf32> to vector<8x128xf32>
    %228 = vector.shape_cast %224 : vector<8x128xf32> to vector<1x8x128xf32>
    tpu.vector_store %arg9[%225, %c0_109, %c0_110], %228 {strides = array<i32>} : memref<8x8x128xf32, #tpu.memory_space<vmem>>, vector<1x8x128xf32>,
    %c4_i32 = arith.constant 4 : i32
    %229 = arith.index_cast %c4_i32 : i32 to index
    %c0_111 = arith.constant 0 : index
    %c0_112 = arith.constant 0 : index
    %230 = vector.load %arg8[%229, %c0_111, %c0_112] : memref<8x8x512xf32, #tpu.memory_space<vmem>>, vector<1x8x512xf32>
    %231 = vector.shape_cast %230 : vector<1x8x512xf32> to vector<8x512xf32>
    %cst_113 = arith.constant dense<0.000000e+00> : vector<8x512xf32>
    %232 = tpu.matmul %224, %1, %cst_113 {dimension_numbers = #tpu.dot_dimension_numbers<[1], [0], [0], [1], [0, 0, 1, 1], [], []>} : vector<8x128xf32>, vector<128x512xf32>, vector<8x512xf32> -> vector<8x512xf32>
    %233 = arith.addf %231, %232 : vector<8x512xf32>
    %234 = vector.extract_strided_slice %233 {offsets = [0, 0], sizes = [8, 128], strides = [1, 1]} : vector<8x512xf32> to vector<8x128xf32>
    %cst_114 = arith.constant 5.000000e-01 : f32
    %235 = vector.broadcast %cst_114 : f32 to vector<8x128xf32>
    %236 = arith.mulf %235, %234 : vector<8x128xf32>
    %237 = math.tanh %236 : vector<8x128xf32>
    %cst_115 = arith.constant 5.000000e-01 : f32
    %238 = vector.broadcast %cst_115 : f32 to vector<8x128xf32>
    %239 = arith.mulf %238, %237 : vector<8x128xf32>
    %cst_116 = arith.constant 5.000000e-01 : f32
    %240 = vector.broadcast %cst_116 : f32 to vector<8x128xf32>
    %241 = arith.addf %239, %240 : vector<8x128xf32>
    %242 = vector.extract_strided_slice %233 {offsets = [0, 128], sizes = [8, 128], strides = [1, 1]} : vector<8x512xf32> to vector<8x128xf32>
    %cst_117 = arith.constant 5.000000e-01 : f32
    %243 = vector.broadcast %cst_117 : f32 to vector<8x128xf32>
    %244 = arith.mulf %243, %242 : vector<8x128xf32>
    %245 = math.tanh %244 : vector<8x128xf32>
    %cst_118 = arith.constant 5.000000e-01 : f32
    %246 = vector.broadcast %cst_118 : f32 to vector<8x128xf32>
    %247 = arith.mulf %246, %245 : vector<8x128xf32>
    %cst_119 = arith.constant 5.000000e-01 : f32
    %248 = vector.broadcast %cst_119 : f32 to vector<8x128xf32>
    %249 = arith.addf %247, %248 : vector<8x128xf32>
    %250 = vector.extract_strided_slice %233 {offsets = [0, 256], sizes = [8, 128], strides = [1, 1]} : vector<8x512xf32> to vector<8x128xf32>
    %251 = math.tanh %250 : vector<8x128xf32>
    %252 = vector.extract_strided_slice %233 {offsets = [0, 384], sizes = [8, 128], strides = [1, 1]} : vector<8x512xf32> to vector<8x128xf32>
    %cst_120 = arith.constant 5.000000e-01 : f32
    %253 = vector.broadcast %cst_120 : f32 to vector<8x128xf32>
    %254 = arith.mulf %253, %252 : vector<8x128xf32>
    %255 = math.tanh %254 : vector<8x128xf32>
    %cst_121 = arith.constant 5.000000e-01 : f32
    %256 = vector.broadcast %cst_121 : f32 to vector<8x128xf32>
    %257 = arith.mulf %256, %255 : vector<8x128xf32>
    %cst_122 = arith.constant 5.000000e-01 : f32
    %258 = vector.broadcast %cst_122 : f32 to vector<8x128xf32>
    %259 = arith.addf %257, %258 : vector<8x128xf32>
    %260 = arith.mulf %249, %222 : vector<8x128xf32>
    %261 = arith.mulf %241, %251 : vector<8x128xf32>
    %262 = arith.addf %260, %261 : vector<8x128xf32>
    %263 = math.tanh %262 : vector<8x128xf32>
    %264 = arith.mulf %259, %263 : vector<8x128xf32>
    %265 = arith.index_cast %c4_i32 : i32 to index
    %c0_123 = arith.constant 0 : index
    %c0_124 = arith.constant 0 : index
    %266 = vector.load %arg9[%265, %c0_123, %c0_124] : memref<8x8x128xf32, #tpu.memory_space<vmem>>, vector<1x8x128xf32>
    %267 = vector.shape_cast %266 : vector<1x8x128xf32> to vector<8x128xf32>
    %268 = vector.shape_cast %264 : vector<8x128xf32> to vector<1x8x128xf32>
    tpu.vector_store %arg9[%265, %c0_123, %c0_124], %268 {strides = array<i32>} : memref<8x8x128xf32, #tpu.memory_space<vmem>>, vector<1x8x128xf32>,
    %c5_i32 = arith.constant 5 : i32
    %269 = arith.index_cast %c5_i32 : i32 to index
    %c0_125 = arith.constant 0 : index
    %c0_126 = arith.constant 0 : index
    %270 = vector.load %arg8[%269, %c0_125, %c0_126] : memref<8x8x512xf32, #tpu.memory_space<vmem>>, vector<1x8x512xf32>
    %271 = vector.shape_cast %270 : vector<1x8x512xf32> to vector<8x512xf32>
    %cst_127 = arith.constant dense<0.000000e+00> : vector<8x512xf32>
    %272 = tpu.matmul %264, %1, %cst_127 {dimension_numbers = #tpu.dot_dimension_numbers<[1], [0], [0], [1], [0, 0, 1, 1], [], []>} : vector<8x128xf32>, vector<128x512xf32>, vector<8x512xf32> -> vector<8x512xf32>
    %273 = arith.addf %271, %272 : vector<8x512xf32>
    %274 = vector.extract_strided_slice %273 {offsets = [0, 0], sizes = [8, 128], strides = [1, 1]} : vector<8x512xf32> to vector<8x128xf32>
    %cst_128 = arith.constant 5.000000e-01 : f32
    %275 = vector.broadcast %cst_128 : f32 to vector<8x128xf32>
    %276 = arith.mulf %275, %274 : vector<8x128xf32>
    %277 = math.tanh %276 : vector<8x128xf32>
    %cst_129 = arith.constant 5.000000e-01 : f32
    %278 = vector.broadcast %cst_129 : f32 to vector<8x128xf32>
    %279 = arith.mulf %278, %277 : vector<8x128xf32>
    %cst_130 = arith.constant 5.000000e-01 : f32
    %280 = vector.broadcast %cst_130 : f32 to vector<8x128xf32>
    %281 = arith.addf %279, %280 : vector<8x128xf32>
    %282 = vector.extract_strided_slice %273 {offsets = [0, 128], sizes = [8, 128], strides = [1, 1]} : vector<8x512xf32> to vector<8x128xf32>
    %cst_131 = arith.constant 5.000000e-01 : f32
    %283 = vector.broadcast %cst_131 : f32 to vector<8x128xf32>
    %284 = arith.mulf %283, %282 : vector<8x128xf32>
    %285 = math.tanh %284 : vector<8x128xf32>
    %cst_132 = arith.constant 5.000000e-01 : f32
    %286 = vector.broadcast %cst_132 : f32 to vector<8x128xf32>
    %287 = arith.mulf %286, %285 : vector<8x128xf32>
    %cst_133 = arith.constant 5.000000e-01 : f32
    %288 = vector.broadcast %cst_133 : f32 to vector<8x128xf32>
    %289 = arith.addf %287, %288 : vector<8x128xf32>
    %290 = vector.extract_strided_slice %273 {offsets = [0, 256], sizes = [8, 128], strides = [1, 1]} : vector<8x512xf32> to vector<8x128xf32>
    %291 = math.tanh %290 : vector<8x128xf32>
    %292 = vector.extract_strided_slice %273 {offsets = [0, 384], sizes = [8, 128], strides = [1, 1]} : vector<8x512xf32> to vector<8x128xf32>
    %cst_134 = arith.constant 5.000000e-01 : f32
    %293 = vector.broadcast %cst_134 : f32 to vector<8x128xf32>
    %294 = arith.mulf %293, %292 : vector<8x128xf32>
    %295 = math.tanh %294 : vector<8x128xf32>
    %cst_135 = arith.constant 5.000000e-01 : f32
    %296 = vector.broadcast %cst_135 : f32 to vector<8x128xf32>
    %297 = arith.mulf %296, %295 : vector<8x128xf32>
    %cst_136 = arith.constant 5.000000e-01 : f32
    %298 = vector.broadcast %cst_136 : f32 to vector<8x128xf32>
    %299 = arith.addf %297, %298 : vector<8x128xf32>
    %300 = arith.mulf %289, %262 : vector<8x128xf32>
    %301 = arith.mulf %281, %291 : vector<8x128xf32>
    %302 = arith.addf %300, %301 : vector<8x128xf32>
    %303 = math.tanh %302 : vector<8x128xf32>
    %304 = arith.mulf %299, %303 : vector<8x128xf32>
    %305 = arith.index_cast %c5_i32 : i32 to index
    %c0_137 = arith.constant 0 : index
    %c0_138 = arith.constant 0 : index
    %306 = vector.load %arg9[%305, %c0_137, %c0_138] : memref<8x8x128xf32, #tpu.memory_space<vmem>>, vector<1x8x128xf32>
    %307 = vector.shape_cast %306 : vector<1x8x128xf32> to vector<8x128xf32>
    %308 = vector.shape_cast %304 : vector<8x128xf32> to vector<1x8x128xf32>
    tpu.vector_store %arg9[%305, %c0_137, %c0_138], %308 {strides = array<i32>} : memref<8x8x128xf32, #tpu.memory_space<vmem>>, vector<1x8x128xf32>,
    %c6_i32 = arith.constant 6 : i32
    %309 = arith.index_cast %c6_i32 : i32 to index
    %c0_139 = arith.constant 0 : index
    %c0_140 = arith.constant 0 : index
    %310 = vector.load %arg8[%309, %c0_139, %c0_140] : memref<8x8x512xf32, #tpu.memory_space<vmem>>, vector<1x8x512xf32>
    %311 = vector.shape_cast %310 : vector<1x8x512xf32> to vector<8x512xf32>
    %cst_141 = arith.constant dense<0.000000e+00> : vector<8x512xf32>
    %312 = tpu.matmul %304, %1, %cst_141 {dimension_numbers = #tpu.dot_dimension_numbers<[1], [0], [0], [1], [0, 0, 1, 1], [], []>} : vector<8x128xf32>, vector<128x512xf32>, vector<8x512xf32> -> vector<8x512xf32>
    %313 = arith.addf %311, %312 : vector<8x512xf32>
    %314 = vector.extract_strided_slice %313 {offsets = [0, 0], sizes = [8, 128], strides = [1, 1]} : vector<8x512xf32> to vector<8x128xf32>
    %cst_142 = arith.constant 5.000000e-01 : f32
    %315 = vector.broadcast %cst_142 : f32 to vector<8x128xf32>
    %316 = arith.mulf %315, %314 : vector<8x128xf32>
    %317 = math.tanh %316 : vector<8x128xf32>
    %cst_143 = arith.constant 5.000000e-01 : f32
    %318 = vector.broadcast %cst_143 : f32 to vector<8x128xf32>
    %319 = arith.mulf %318, %317 : vector<8x128xf32>
    %cst_144 = arith.constant 5.000000e-01 : f32
    %320 = vector.broadcast %cst_144 : f32 to vector<8x128xf32>
    %321 = arith.addf %319, %320 : vector<8x128xf32>
    %322 = vector.extract_strided_slice %313 {offsets = [0, 128], sizes = [8, 128], strides = [1, 1]} : vector<8x512xf32> to vector<8x128xf32>
    %cst_145 = arith.constant 5.000000e-01 : f32
    %323 = vector.broadcast %cst_145 : f32 to vector<8x128xf32>
    %324 = arith.mulf %323, %322 : vector<8x128xf32>
    %325 = math.tanh %324 : vector<8x128xf32>
    %cst_146 = arith.constant 5.000000e-01 : f32
    %326 = vector.broadcast %cst_146 : f32 to vector<8x128xf32>
    %327 = arith.mulf %326, %325 : vector<8x128xf32>
    %cst_147 = arith.constant 5.000000e-01 : f32
    %328 = vector.broadcast %cst_147 : f32 to vector<8x128xf32>
    %329 = arith.addf %327, %328 : vector<8x128xf32>
    %330 = vector.extract_strided_slice %313 {offsets = [0, 256], sizes = [8, 128], strides = [1, 1]} : vector<8x512xf32> to vector<8x128xf32>
    %331 = math.tanh %330 : vector<8x128xf32>
    %332 = vector.extract_strided_slice %313 {offsets = [0, 384], sizes = [8, 128], strides = [1, 1]} : vector<8x512xf32> to vector<8x128xf32>
    %cst_148 = arith.constant 5.000000e-01 : f32
    %333 = vector.broadcast %cst_148 : f32 to vector<8x128xf32>
    %334 = arith.mulf %333, %332 : vector<8x128xf32>
    %335 = math.tanh %334 : vector<8x128xf32>
    %cst_149 = arith.constant 5.000000e-01 : f32
    %336 = vector.broadcast %cst_149 : f32 to vector<8x128xf32>
    %337 = arith.mulf %336, %335 : vector<8x128xf32>
    %cst_150 = arith.constant 5.000000e-01 : f32
    %338 = vector.broadcast %cst_150 : f32 to vector<8x128xf32>
    %339 = arith.addf %337, %338 : vector<8x128xf32>
    %340 = arith.mulf %329, %302 : vector<8x128xf32>
    %341 = arith.mulf %321, %331 : vector<8x128xf32>
    %342 = arith.addf %340, %341 : vector<8x128xf32>
    %343 = math.tanh %342 : vector<8x128xf32>
    %344 = arith.mulf %339, %343 : vector<8x128xf32>
    %345 = arith.index_cast %c6_i32 : i32 to index
    %c0_151 = arith.constant 0 : index
    %c0_152 = arith.constant 0 : index
    %346 = vector.load %arg9[%345, %c0_151, %c0_152] : memref<8x8x128xf32, #tpu.memory_space<vmem>>, vector<1x8x128xf32>
    %347 = vector.shape_cast %346 : vector<1x8x128xf32> to vector<8x128xf32>
    %348 = vector.shape_cast %344 : vector<8x128xf32> to vector<1x8x128xf32>
    tpu.vector_store %arg9[%345, %c0_151, %c0_152], %348 {strides = array<i32>} : memref<8x8x128xf32, #tpu.memory_space<vmem>>, vector<1x8x128xf32>,
    %c7_i32 = arith.constant 7 : i32
    %349 = arith.index_cast %c7_i32 : i32 to index
    %c0_153 = arith.constant 0 : index
    %c0_154 = arith.constant 0 : index
    %350 = vector.load %arg8[%349, %c0_153, %c0_154] : memref<8x8x512xf32, #tpu.memory_space<vmem>>, vector<1x8x512xf32>
    %351 = vector.shape_cast %350 : vector<1x8x512xf32> to vector<8x512xf32>
    %cst_155 = arith.constant dense<0.000000e+00> : vector<8x512xf32>
    %352 = tpu.matmul %344, %1, %cst_155 {dimension_numbers = #tpu.dot_dimension_numbers<[1], [0], [0], [1], [0, 0, 1, 1], [], []>} : vector<8x128xf32>, vector<128x512xf32>, vector<8x512xf32> -> vector<8x512xf32>
    %353 = arith.addf %351, %352 : vector<8x512xf32>
    %354 = vector.extract_strided_slice %353 {offsets = [0, 0], sizes = [8, 128], strides = [1, 1]} : vector<8x512xf32> to vector<8x128xf32>
    %cst_156 = arith.constant 5.000000e-01 : f32
    %355 = vector.broadcast %cst_156 : f32 to vector<8x128xf32>
    %356 = arith.mulf %355, %354 : vector<8x128xf32>
    %357 = math.tanh %356 : vector<8x128xf32>
    %cst_157 = arith.constant 5.000000e-01 : f32
    %358 = vector.broadcast %cst_157 : f32 to vector<8x128xf32>
    %359 = arith.mulf %358, %357 : vector<8x128xf32>
    %cst_158 = arith.constant 5.000000e-01 : f32
    %360 = vector.broadcast %cst_158 : f32 to vector<8x128xf32>
    %361 = arith.addf %359, %360 : vector<8x128xf32>
    %362 = vector.extract_strided_slice %353 {offsets = [0, 128], sizes = [8, 128], strides = [1, 1]} : vector<8x512xf32> to vector<8x128xf32>
    %cst_159 = arith.constant 5.000000e-01 : f32
    %363 = vector.broadcast %cst_159 : f32 to vector<8x128xf32>
    %364 = arith.mulf %363, %362 : vector<8x128xf32>
    %365 = math.tanh %364 : vector<8x128xf32>
    %cst_160 = arith.constant 5.000000e-01 : f32
    %366 = vector.broadcast %cst_160 : f32 to vector<8x128xf32>
    %367 = arith.mulf %366, %365 : vector<8x128xf32>
    %cst_161 = arith.constant 5.000000e-01 : f32
    %368 = vector.broadcast %cst_161 : f32 to vector<8x128xf32>
    %369 = arith.addf %367, %368 : vector<8x128xf32>
    %370 = vector.extract_strided_slice %353 {offsets = [0, 256], sizes = [8, 128], strides = [1, 1]} : vector<8x512xf32> to vector<8x128xf32>
    %371 = math.tanh %370 : vector<8x128xf32>
    %372 = vector.extract_strided_slice %353 {offsets = [0, 384], sizes = [8, 128], strides = [1, 1]} : vector<8x512xf32> to vector<8x128xf32>
    %cst_162 = arith.constant 5.000000e-01 : f32
    %373 = vector.broadcast %cst_162 : f32 to vector<8x128xf32>
    %374 = arith.mulf %373, %372 : vector<8x128xf32>
    %375 = math.tanh %374 : vector<8x128xf32>
    %cst_163 = arith.constant 5.000000e-01 : f32
    %376 = vector.broadcast %cst_163 : f32 to vector<8x128xf32>
    %377 = arith.mulf %376, %375 : vector<8x128xf32>
    %cst_164 = arith.constant 5.000000e-01 : f32
    %378 = vector.broadcast %cst_164 : f32 to vector<8x128xf32>
    %379 = arith.addf %377, %378 : vector<8x128xf32>
    %380 = arith.mulf %369, %342 : vector<8x128xf32>
    %381 = arith.mulf %361, %371 : vector<8x128xf32>
    %382 = arith.addf %380, %381 : vector<8x128xf32>
    %383 = math.tanh %382 : vector<8x128xf32>
    %384 = arith.mulf %379, %383 : vector<8x128xf32>
    %385 = arith.index_cast %c7_i32 : i32 to index
    %c0_165 = arith.constant 0 : index
    %c0_166 = arith.constant 0 : index
    %386 = vector.load %arg9[%385, %c0_165, %c0_166] : memref<8x8x128xf32, #tpu.memory_space<vmem>>, vector<1x8x128xf32>
    %387 = vector.shape_cast %386 : vector<1x8x128xf32> to vector<8x128xf32>
    %388 = vector.shape_cast %384 : vector<8x128xf32> to vector<1x8x128xf32>
    tpu.vector_store %arg9[%385, %c0_165, %c0_166], %388 {strides = array<i32>} : memref<8x8x128xf32, #tpu.memory_space<vmem>>, vector<1x8x128xf32>,
    %c8_i32 = arith.constant 8 : i32
    %c0_167 = arith.constant 0 : index
    %c0_168 = arith.constant 0 : index
    %c0_169 = arith.constant 0 : index
    %389 = vector.load %arg9[%c0_167, %c0_168, %c0_169] : memref<8x8x128xf32, #tpu.memory_space<vmem>>, vector<1x8x128xf32>
    %390 = vector.shape_cast %389 : vector<1x8x128xf32> to vector<8x128xf32>
    %391 = arith.mulf %390, %384 : vector<8x128xf32>
    %cst_170 = arith.constant dense<0.000000e+00> : vector<8xf32>
    %392 = vector.multi_reduction <add>, %391, %cst_170 [1] : vector<8x128xf32> to vector<8xf32>
    %393 = vector.shape_cast %392 : vector<8xf32> to vector<8x1xf32>
    %c1_171 = arith.constant 1 : index
    %c0_172 = arith.constant 0 : index
    %c0_173 = arith.constant 0 : index
    %394 = vector.load %arg9[%c1_171, %c0_172, %c0_173] : memref<8x8x128xf32, #tpu.memory_space<vmem>>, vector<1x8x128xf32>
    %395 = vector.shape_cast %394 : vector<1x8x128xf32> to vector<8x128xf32>
    %396 = arith.mulf %395, %384 : vector<8x128xf32>
    %cst_174 = arith.constant dense<0.000000e+00> : vector<8xf32>
    %397 = vector.multi_reduction <add>, %396, %cst_174 [1] : vector<8x128xf32> to vector<8xf32>
    %398 = vector.shape_cast %397 : vector<8xf32> to vector<8x1xf32>
    %c2_175 = arith.constant 2 : index
    %c0_176 = arith.constant 0 : index
    %c0_177 = arith.constant 0 : index
    %399 = vector.load %arg9[%c2_175, %c0_176, %c0_177] : memref<8x8x128xf32, #tpu.memory_space<vmem>>, vector<1x8x128xf32>
    %400 = vector.shape_cast %399 : vector<1x8x128xf32> to vector<8x128xf32>
    %401 = arith.mulf %400, %384 : vector<8x128xf32>
    %cst_178 = arith.constant dense<0.000000e+00> : vector<8xf32>
    %402 = vector.multi_reduction <add>, %401, %cst_178 [1] : vector<8x128xf32> to vector<8xf32>
    %403 = vector.shape_cast %402 : vector<8xf32> to vector<8x1xf32>
    %c3_179 = arith.constant 3 : index
    %c0_180 = arith.constant 0 : index
    %c0_181 = arith.constant 0 : index
    %404 = vector.load %arg9[%c3_179, %c0_180, %c0_181] : memref<8x8x128xf32, #tpu.memory_space<vmem>>, vector<1x8x128xf32>
    %405 = vector.shape_cast %404 : vector<1x8x128xf32> to vector<8x128xf32>
    %406 = arith.mulf %405, %384 : vector<8x128xf32>
    %cst_182 = arith.constant dense<0.000000e+00> : vector<8xf32>
    %407 = vector.multi_reduction <add>, %406, %cst_182 [1] : vector<8x128xf32> to vector<8xf32>
    %408 = vector.shape_cast %407 : vector<8xf32> to vector<8x1xf32>
    %c4_183 = arith.constant 4 : index
    %c0_184 = arith.constant 0 : index
    %c0_185 = arith.constant 0 : index
    %409 = vector.load %arg9[%c4_183, %c0_184, %c0_185] : memref<8x8x128xf32, #tpu.memory_space<vmem>>, vector<1x8x128xf32>
    %410 = vector.shape_cast %409 : vector<1x8x128xf32> to vector<8x128xf32>
    %411 = arith.mulf %410, %384 : vector<8x128xf32>
    %cst_186 = arith.constant dense<0.000000e+00> : vector<8xf32>
    %412 = vector.multi_reduction <add>, %411, %cst_186 [1] : vector<8x128xf32> to vector<8xf32>
    %413 = vector.shape_cast %412 : vector<8xf32> to vector<8x1xf32>
    %c5_187 = arith.constant 5 : index
    %c0_188 = arith.constant 0 : index
    %c0_189 = arith.constant 0 : index
    %414 = vector.load %arg9[%c5_187, %c0_188, %c0_189] : memref<8x8x128xf32, #tpu.memory_space<vmem>>, vector<1x8x128xf32>
    %415 = vector.shape_cast %414 : vector<1x8x128xf32> to vector<8x128xf32>
    %416 = arith.mulf %415, %384 : vector<8x128xf32>
    %cst_190 = arith.constant dense<0.000000e+00> : vector<8xf32>
    %417 = vector.multi_reduction <add>, %416, %cst_190 [1] : vector<8x128xf32> to vector<8xf32>
    %418 = vector.shape_cast %417 : vector<8xf32> to vector<8x1xf32>
    %c6_191 = arith.constant 6 : index
    %c0_192 = arith.constant 0 : index
    %c0_193 = arith.constant 0 : index
    %419 = vector.load %arg9[%c6_191, %c0_192, %c0_193] : memref<8x8x128xf32, #tpu.memory_space<vmem>>, vector<1x8x128xf32>
    %420 = vector.shape_cast %419 : vector<1x8x128xf32> to vector<8x128xf32>
    %421 = arith.mulf %420, %384 : vector<8x128xf32>
    %cst_194 = arith.constant dense<0.000000e+00> : vector<8xf32>
    %422 = vector.multi_reduction <add>, %421, %cst_194 [1] : vector<8x128xf32> to vector<8xf32>
    %423 = vector.shape_cast %422 : vector<8xf32> to vector<8x1xf32>
    %c7_195 = arith.constant 7 : index
    %c0_196 = arith.constant 0 : index
    %c0_197 = arith.constant 0 : index
    %424 = vector.load %arg9[%c7_195, %c0_196, %c0_197] : memref<8x8x128xf32, #tpu.memory_space<vmem>>, vector<1x8x128xf32>
    %425 = vector.shape_cast %424 : vector<1x8x128xf32> to vector<8x128xf32>
    %426 = arith.mulf %425, %384 : vector<8x128xf32>
    %cst_198 = arith.constant dense<0.000000e+00> : vector<8xf32>
    %427 = vector.multi_reduction <add>, %426, %cst_198 [1] : vector<8x128xf32> to vector<8xf32>
    %428 = vector.shape_cast %427 : vector<8xf32> to vector<8x1xf32>
    %429 = arith.maximumf %393, %398 : vector<8x1xf32>
    %430 = arith.maximumf %429, %403 : vector<8x1xf32>
    %431 = arith.maximumf %430, %408 : vector<8x1xf32>
    %432 = arith.maximumf %431, %413 : vector<8x1xf32>
    %433 = arith.maximumf %432, %418 : vector<8x1xf32>
    %434 = arith.maximumf %433, %423 : vector<8x1xf32>
    %435 = arith.maximumf %434, %428 : vector<8x1xf32>
    %cst_199 = arith.constant 0.000000e+00 : f32
    %436 = vector.broadcast %cst_199 : f32 to vector<8x1xf32>
    %cst_200 = arith.constant 0.000000e+00 : f32
    %437 = vector.broadcast %cst_200 : f32 to vector<8x128xf32>
    %438 = arith.subf %393, %435 : vector<8x1xf32>
    %439 = math.exp %438 : vector<8x1xf32>
    %440 = arith.addf %436, %439 : vector<8x1xf32>
    %c0_201 = arith.constant 0 : index
    %c0_202 = arith.constant 0 : index
    %c0_203 = arith.constant 0 : index
    %441 = vector.load %arg9[%c0_201, %c0_202, %c0_203] : memref<8x8x128xf32, #tpu.memory_space<vmem>>, vector<1x8x128xf32>
    %442 = vector.shape_cast %441 : vector<1x8x128xf32> to vector<8x128xf32>
    %443 = vector.broadcast %439 : vector<8x1xf32> to vector<8x128xf32>
    %444 = arith.mulf %443, %442 : vector<8x128xf32>
    %445 = arith.addf %437, %444 : vector<8x128xf32>
    %446 = arith.subf %398, %435 : vector<8x1xf32>
    %447 = math.exp %446 : vector<8x1xf32>
    %448 = arith.addf %440, %447 : vector<8x1xf32>
    %c1_204 = arith.constant 1 : index
    %c0_205 = arith.constant 0 : index
    %c0_206 = arith.constant 0 : index
    %449 = vector.load %arg9[%c1_204, %c0_205, %c0_206] : memref<8x8x128xf32, #tpu.memory_space<vmem>>, vector<1x8x128xf32>
    %450 = vector.shape_cast %449 : vector<1x8x128xf32> to vector<8x128xf32>
    %451 = vector.broadcast %447 : vector<8x1xf32> to vector<8x128xf32>
    %452 = arith.mulf %451, %450 : vector<8x128xf32>
    %453 = arith.addf %445, %452 : vector<8x128xf32>
    %454 = arith.subf %403, %435 : vector<8x1xf32>
    %455 = math.exp %454 : vector<8x1xf32>
    %456 = arith.addf %448, %455 : vector<8x1xf32>
    %c2_207 = arith.constant 2 : index
    %c0_208 = arith.constant 0 : index
    %c0_209 = arith.constant 0 : index
    %457 = vector.load %arg9[%c2_207, %c0_208, %c0_209] : memref<8x8x128xf32, #tpu.memory_space<vmem>>, vector<1x8x128xf32>
    %458 = vector.shape_cast %457 : vector<1x8x128xf32> to vector<8x128xf32>
    %459 = vector.broadcast %455 : vector<8x1xf32> to vector<8x128xf32>
    %460 = arith.mulf %459, %458 : vector<8x128xf32>
    %461 = arith.addf %453, %460 : vector<8x128xf32>
    %462 = arith.subf %408, %435 : vector<8x1xf32>
    %463 = math.exp %462 : vector<8x1xf32>
    %464 = arith.addf %456, %463 : vector<8x1xf32>
    %c3_210 = arith.constant 3 : index
    %c0_211 = arith.constant 0 : index
    %c0_212 = arith.constant 0 : index
    %465 = vector.load %arg9[%c3_210, %c0_211, %c0_212] : memref<8x8x128xf32, #tpu.memory_space<vmem>>, vector<1x8x128xf32>
    %466 = vector.shape_cast %465 : vector<1x8x128xf32> to vector<8x128xf32>
    %467 = vector.broadcast %463 : vector<8x1xf32> to vector<8x128xf32>
    %468 = arith.mulf %467, %466 : vector<8x128xf32>
    %469 = arith.addf %461, %468 : vector<8x128xf32>
    %470 = arith.subf %413, %435 : vector<8x1xf32>
    %471 = math.exp %470 : vector<8x1xf32>
    %472 = arith.addf %464, %471 : vector<8x1xf32>
    %c4_213 = arith.constant 4 : index
    %c0_214 = arith.constant 0 : index
    %c0_215 = arith.constant 0 : index
    %473 = vector.load %arg9[%c4_213, %c0_214, %c0_215] : memref<8x8x128xf32, #tpu.memory_space<vmem>>, vector<1x8x128xf32>
    %474 = vector.shape_cast %473 : vector<1x8x128xf32> to vector<8x128xf32>
    %475 = vector.broadcast %471 : vector<8x1xf32> to vector<8x128xf32>
    %476 = arith.mulf %475, %474 : vector<8x128xf32>
    %477 = arith.addf %469, %476 : vector<8x128xf32>
    %478 = arith.subf %418, %435 : vector<8x1xf32>
    %479 = math.exp %478 : vector<8x1xf32>
    %480 = arith.addf %472, %479 : vector<8x1xf32>
    %c5_216 = arith.constant 5 : index
    %c0_217 = arith.constant 0 : index
    %c0_218 = arith.constant 0 : index
    %481 = vector.load %arg9[%c5_216, %c0_217, %c0_218] : memref<8x8x128xf32, #tpu.memory_space<vmem>>, vector<1x8x128xf32>
    %482 = vector.shape_cast %481 : vector<1x8x128xf32> to vector<8x128xf32>
    %483 = vector.broadcast %479 : vector<8x1xf32> to vector<8x128xf32>
    %484 = arith.mulf %483, %482 : vector<8x128xf32>
    %485 = arith.addf %477, %484 : vector<8x128xf32>
    %486 = arith.subf %423, %435 : vector<8x1xf32>
    %487 = math.exp %486 : vector<8x1xf32>
    %488 = arith.addf %480, %487 : vector<8x1xf32>
    %c6_219 = arith.constant 6 : index
    %c0_220 = arith.constant 0 : index
    %c0_221 = arith.constant 0 : index
    %489 = vector.load %arg9[%c6_219, %c0_220, %c0_221] : memref<8x8x128xf32, #tpu.memory_space<vmem>>, vector<1x8x128xf32>
    %490 = vector.shape_cast %489 : vector<1x8x128xf32> to vector<8x128xf32>
    %491 = vector.broadcast %487 : vector<8x1xf32> to vector<8x128xf32>
    %492 = arith.mulf %491, %490 : vector<8x128xf32>
    %493 = arith.addf %485, %492 : vector<8x128xf32>
    %494 = arith.subf %428, %435 : vector<8x1xf32>
    %495 = math.exp %494 : vector<8x1xf32>
    %496 = arith.addf %488, %495 : vector<8x1xf32>
    %c7_222 = arith.constant 7 : index
    %c0_223 = arith.constant 0 : index
    %c0_224 = arith.constant 0 : index
    %497 = vector.load %arg9[%c7_222, %c0_223, %c0_224] : memref<8x8x128xf32, #tpu.memory_space<vmem>>, vector<1x8x128xf32>
    %498 = vector.shape_cast %497 : vector<1x8x128xf32> to vector<8x128xf32>
    %499 = vector.broadcast %495 : vector<8x1xf32> to vector<8x128xf32>
    %500 = arith.mulf %499, %498 : vector<8x128xf32>
    %501 = arith.addf %493, %500 : vector<8x128xf32>
    %cst_225 = arith.constant 1.000000e+00 : f32
    %502 = vector.broadcast %cst_225 : f32 to vector<8x1xf32>
    %503 = arith.divf %502, %496 : vector<8x1xf32>
    %504 = vector.broadcast %503 : vector<8x1xf32> to vector<8x128xf32>
    %505 = arith.mulf %501, %504 : vector<8x128xf32>
    %c0_226 = arith.constant 0 : index
    %c0_227 = arith.constant 0 : index
    %506 = vector.load %arg5[%c0_226, %c0_227] : memref<128x128xf32, #tpu.memory_space<vmem>>, vector<128x128xf32>
    %cst_228 = arith.constant dense<0.000000e+00> : vector<8x128xf32>
    %507 = tpu.matmul %505, %506, %cst_228 {dimension_numbers = #tpu.dot_dimension_numbers<[1], [0], [0], [1], [0, 0, 1, 1], [], []>} : vector<8x128xf32>, vector<128x128xf32>, vector<8x128xf32> -> vector<8x128xf32>
    %c0_229 = arith.constant 0 : index
    %c0_230 = arith.constant 0 : index
    %508 = vector.load %arg6[%c0_229, %c0_230] : memref<1x128xf32, #tpu.memory_space<vmem>>, vector<1x128xf32>
    %509 = vector.broadcast %508 : vector<1x128xf32> to vector<8x128xf32>
    %510 = arith.addf %507, %509 : vector<8x128xf32>
    %c0_231 = arith.constant 0 : index
    %c0_232 = arith.constant 0 : index
    %511 = vector.load %arg7[%c0_231, %c0_232] : memref<8x128xf32, #tpu.memory_space<vmem>>, vector<8x128xf32>
    tpu.vector_store %arg7[%c0_231, %c0_232], %510 {strides = array<i32>} : memref<8x128xf32, #tpu.memory_space<vmem>>, vector<8x128xf32>,
    return
  }
  func.func @transform_0(%arg0: i32) -> (i32, i32, i32) {
    %c0_i32 = arith.constant 0 : i32
    %c0_i32_0 = arith.constant 0 : i32
    %c0_i32_1 = arith.constant 0 : i32
    return %arg0, %c0_i32, %c0_i32_0 : i32, i32, i32
  }
  func.func @transform_1(%arg0: i32) -> (i32, i32) {
    %c0_i32 = arith.constant 0 : i32
    %c0_i32_0 = arith.constant 0 : i32
    %c0_i32_1 = arith.constant 0 : i32
    return %c0_i32, %c0_i32_0 : i32, i32
  }
  func.func @transform_2(%arg0: i32) -> (i32, i32) {
    %c0_i32 = arith.constant 0 : i32
    %c0_i32_0 = arith.constant 0 : i32
    %c0_i32_1 = arith.constant 0 : i32
    return %c0_i32, %c0_i32_0 : i32, i32
  }
  func.func @transform_3(%arg0: i32) -> (i32, i32) {
    %c0_i32 = arith.constant 0 : i32
    %c0_i32_0 = arith.constant 0 : i32
    %c0_i32_1 = arith.constant 0 : i32
    return %c0_i32, %c0_i32_0 : i32, i32
  }
  func.func @transform_4(%arg0: i32) -> (i32, i32) {
    %c0_i32 = arith.constant 0 : i32
    %c0_i32_0 = arith.constant 0 : i32
    %c0_i32_1 = arith.constant 0 : i32
    return %c0_i32, %c0_i32_0 : i32, i32
  }
  func.func @transform_5(%arg0: i32) -> (i32, i32) {
    %c0_i32 = arith.constant 0 : i32
    %c0_i32_0 = arith.constant 0 : i32
    %c0_i32_1 = arith.constant 0 : i32
    return %c0_i32, %c0_i32_0 : i32, i32
  }
  func.func @transform_6(%arg0: i32) -> (i32, i32) {
    %c0_i32 = arith.constant 0 : i32
    %c0_i32_0 = arith.constant 0 : i32
    return %arg0, %c0_i32 : i32, i32
  }
}

</mosaic_0001>

<llo_original>
// kernel: tpu_custom_call.1
$region0: #{tpu_custom_call.1}
  #allocation0 [shape = 'u32[]', space=smem, size = 0x4, offset = 0x4, fixed_abs, tag = 'smem constant byte address 0x4 - core index']
  #allocation1 [shape = 'u32[144,128]{1,0:T(1,128)}', space=vmem, size = 0x12000, scoped, tag = 'internal scratch']
  #allocation2 [shape = 'f32[8,8,512]{2,1,0:T(8,128)}', space=vmem, size = 0x20000, scoped, tag = 'scratch operand']
  #allocation3 [shape = 'f32[8,8,128]{2,1,0:T(8,128)}', space=vmem, size = 0x8000, scoped, tag = 'scratch operand']
  %s0 = inlined_call_operand.hbm [shape: f32[8,8,128], index: 0, kind: input, shape index: {}]
  %s1 = inlined_call_operand.hbm [shape: f32[128,512], index: 1, kind: input, shape index: {}]
  %s2 = inlined_call_operand.hbm [shape: f32[128,512], index: 2, kind: input, shape index: {}]
  %s3 = inlined_call_operand.vmem [shape: f32[1,512], index: 3, kind: input, shape index: {}]
  %s4 = inlined_call_operand.hbm [shape: f32[128,128], index: 4, kind: input, shape index: {}]
  %s5 = inlined_call_operand.vmem [shape: f32[1,128], index: 5, kind: input, shape index: {}]
  %s6 = inlined_call_operand.hbm [shape: f32[8,128], index: 6, kind: output, shape index: {}]
  %s7 = sld [smem:[#allocation0]]
  $region50: #{tpu_custom_call.1} parent=0
    _
  %s9 = ssub.s32 1, %s7
  %s10 = scalar_select 0, %s9, %s7
  $region1: #{tpu_custom_call.1} parent=0
    #allocation4 [shape = 'u8[32768]{0}', space=vmem, size = 0x8000, scoped, tag = 'input window, operand 0, single buffered']
    #allocation5 [shape = 's32[1]{0}', space=sflag, size = 0x4, scoped, tag = 'scoped memory for tpu_custom_call.1']
    #allocation6 [shape = 's32[1]{0}', space=sflag, size = 0x4, scoped, tag = 'scoped memory for tpu_custom_call.1']
    #allocation7 [shape = 'u8[262144]{0}', space=vmem, size = 0x40000, scoped, tag = 'input window, operand 1, single buffered']
    #allocation8 [shape = 's32[1]{0}', space=sflag, size = 0x4, scoped, tag = 'scoped memory for tpu_custom_call.1']
    #allocation9 [shape = 'u8[262144]{0}', space=vmem, size = 0x40000, scoped, tag = 'input window, operand 2, single buffered']
    #allocation10 [shape = 'u8[65536]{0}', space=vmem, size = 0x10000, scoped, tag = 'input window, operand 4, single buffered']
    #allocation11 [shape = 's32[1]{0}', space=sflag, size = 0x4, scoped, tag = 'scoped memory for tpu_custom_call.1']
    #allocation12 [shape = 'u8[4096]{0}', space=vmem, size = 0x1000, scoped, tag = 'output window, operand 0, single buffered']
    %11 = vsyncpa [#allocation5], 0
    %12 = vsyncpa [#allocation8], 0
    %13 = vsyncpa [#allocation11], 0
    %14 = vsyncpa [#allocation6], 0
    // Predicated region
    $region2: #{tpu_custom_call.1} parent=1 // pred_check
      _
    $region3: #{tpu_custom_call.1} parent=1 // pred_check_branch
      %16 = sbr.rel (0) target = $region5
    $region4: #{tpu_custom_call.1} parent=1 // pred_region
      %s18 = ssub.s32 1024, 1024
      %19 = vsyncadd [#allocation5], %s18
      %s20 = sshll.u32 [#allocation4], 4
      %s21 = int_to_ptr.vmem [resolvable:$true] %s20
      %26 = dma.hbm_to_vmem [thread:$0]  %s0, 1024, %s21, [#allocation5], 128, 128, 8
    $region5: #{tpu_custom_call.1} parent=1 // pred_fallthru
      _
    // Predicated region
    $region6: #{tpu_custom_call.1} parent=1 // pred_check
      _
    $region7: #{tpu_custom_call.1} parent=1 // pred_check_branch
      %28 = sbr.rel (0) target = $region9
    $region8: #{tpu_custom_call.1} parent=1 // pred_region
      %s30 = ssub.s32 8192, 8192
      %31 = vsyncadd [#allocation8], %s30
      %s32 = sshll.u32 [#allocation7], 4
      %s33 = int_to_ptr.vmem [resolvable:$true] %s32
      %38 = dma.hbm_to_vmem [thread:$0]  %s1, 8192, %s33, [#allocation8], 512, 512, 32
    $region9: #{tpu_custom_call.1} parent=1 // pred_fallthru
      _
    // Predicated region
    $region10: #{tpu_custom_call.1} parent=1 // pred_check
      _
    $region11: #{tpu_custom_call.1} parent=1 // pred_check_branch
      %40 = sbr.rel (0) target = $region13
    $region12: #{tpu_custom_call.1} parent=1 // pred_region
      %s42 = ssub.s32 8192, 8192
      %43 = vsyncadd [#allocation8], %s42
      %s44 = sshll.u32 [#allocation9], 4
      %s45 = int_to_ptr.vmem [resolvable:$true] %s44
      %50 = dma.hbm_to_vmem [thread:$0]  %s2, 8192, %s45, [#allocation8], 512, 512, 32
    $region13: #{tpu_custom_call.1} parent=1 // pred_fallthru
      _
    // Predicated region
    $region14: #{tpu_custom_call.1} parent=1 // pred_check
      _
    $region15: #{tpu_custom_call.1} parent=1 // pred_check_branch
      %52 = sbr.rel (0) target = $region17
    $region16: #{tpu_custom_call.1} parent=1 // pred_region
      _
    $region17: #{tpu_custom_call.1} parent=1 // pred_fallthru
      _
    // Predicated region
    $region18: #{tpu_custom_call.1} parent=1 // pred_check
      _
    $region19: #{tpu_custom_call.1} parent=1 // pred_check_branch
      %54 = sbr.rel (0) target = $region21
    $region20: #{tpu_custom_call.1} parent=1 // pred_region
      %s56 = ssub.s32 2048, 2048
      %57 = vsyncadd [#allocation11], %s56
      %s58 = sshll.u32 [#allocation10], 4
      %s59 = int_to_ptr.vmem [resolvable:$true] %s58
      %64 = dma.hbm_to_vmem [thread:$0]  %s4, 2048, %s59, [#allocation11], 128, 128, 8
    $region21: #{tpu_custom_call.1} parent=1 // pred_fallthru
      _
    // Predicated region
    $region22: #{tpu_custom_call.1} parent=1 // pred_check
      _
    $region23: #{tpu_custom_call.1} parent=1 // pred_check_branch
      %66 = sbr.rel (0) target = $region25
    $region24: #{tpu_custom_call.1} parent=1 // pred_region
      _
    $region25: #{tpu_custom_call.1} parent=1 // pred_fallthru
      _
    // Predicated region
    $region26: #{tpu_custom_call.1} parent=1 // pred_check
      _
    $region27: #{tpu_custom_call.1} parent=1 // pred_check_branch
      %68 = sbr.rel (0) target = $region29
    $region28: #{tpu_custom_call.1} parent=1 // pred_region
      %69 = dma.done [#allocation5], 1024
    $region29: #{tpu_custom_call.1} parent=1 // pred_fallthru
      _
    // Predicated region
    $region30: #{tpu_custom_call.1} parent=1 // pred_check
      _
    $region31: #{tpu_custom_call.1} parent=1 // pred_check_branch
      %71 = sbr.rel (0) target = $region33
    $region32: #{tpu_custom_call.1} parent=1 // pred_region
      %72 = dma.done [#allocation8], 8192
    $region33: #{tpu_custom_call.1} parent=1 // pred_fallthru
      _
    // Predicated region
    $region34: #{tpu_custom_call.1} parent=1 // pred_check
      _
    $region35: #{tpu_custom_call.1} parent=1 // pred_check_branch
      %74 = sbr.rel (0) target = $region37
    $region36: #{tpu_custom_call.1} parent=1 // pred_region
      %75 = dma.done [#allocation8], 8192
    $region37: #{tpu_custom_call.1} parent=1 // pred_fallthru
      _
    // Predicated region
    $region38: #{tpu_custom_call.1} parent=1 // pred_check
      _
    $region39: #{tpu_custom_call.1} parent=1 // pred_check_branch
      %77 = sbr.rel (0) target = $region41
    $region40: #{tpu_custom_call.1} parent=1 // pred_region
      %78 = dma.done [#allocation11], 2048
    $region41: #{tpu_custom_call.1} parent=1 // pred_fallthru
      _
    %v79 = vld [vmem:[#allocation7] sm:$0xff]
    %v80 = vld [vmem:[#allocation7 + $0x8] sm:$0xff]
    %v81 = vld [vmem:[#allocation7 + $0x10] sm:$0xff]
    %v82 = vld [vmem:[#allocation7 + $0x18] sm:$0xff]
    %v83 = vld [vmem:[#allocation7 + $0x20] sm:$0xff]
    %v84 = vld [vmem:[#allocation7 + $0x28] sm:$0xff]
    %v85 = vld [vmem:[#allocation7 + $0x30] sm:$0xff]
    %v86 = vld [vmem:[#allocation7 + $0x38] sm:$0xff]
    %v87 = vld [vmem:[#allocation7 + $0x40] sm:$0xff]
    %v88 = vld [vmem:[#allocation7 + $0x48] sm:$0xff]
    %v89 = vld [vmem:[#allocation7 + $0x50] sm:$0xff]
    %v90 = vld [vmem:[#allocation7 + $0x58] sm:$0xff]
    %v91 = vld [vmem:[#allocation7 + $0x60] sm:$0xff]
    %v92 = vld [vmem:[#allocation7 + $0x68] sm:$0xff]
    %v93 = vld [vmem:[#allocation7 + $0x70] sm:$0xff]
    %v94 = vld [vmem:[#allocation7 + $0x78] sm:$0xff]
    %v95 = vld [vmem:[#allocation7 + $0x80] sm:$0xff]
    %v96 = vld [vmem:[#allocation7 + $0x88] sm:$0xff]
    %v97 = vld [vmem:[#allocation7 + $0x90] sm:$0xff]
    %v98 = vld [vmem:[#allocation7 + $0x98] sm:$0xff]
    %v99 = vld [vmem:[#allocation7 + $0xa0] sm:$0xff]
    %v100 = vld [vmem:[#allocation7 + $0xa8] sm:$0xff]
    %v101 = vld [vmem:[#allocation7 + $0xb0] sm:$0xff]
    %v102 = vld [vmem:[#allocation7 + $0xb8] sm:$0xff]
    %v103 = vld [vmem:[#allocation7 + $0xc0] sm:$0xff]
    %v104 = vld [vmem:[#allocation7 + $0xc8] sm:$0xff]
    %v105 = vld [vmem:[#allocation7 + $0xd0] sm:$0xff]
    %v106 = vld [vmem:[#allocation7 + $0xd8] sm:$0xff]
    %v107 = vld [vmem:[#allocation7 + $0xe0] sm:$0xff]
    %v108 = vld [vmem:[#allocation7 + $0xe8] sm:$0xff]
    %v109 = vld [vmem:[#allocation7 + $0xf0] sm:$0xff]
    %v110 = vld [vmem:[#allocation7 + $0xf8] sm:$0xff]
    %v111 = vld [vmem:[#allocation7 + $0x100] sm:$0xff]
    %v112 = vld [vmem:[#allocation7 + $0x108] sm:$0xff]
    %v113 = vld [vmem:[#allocation7 + $0x110] sm:$0xff]
    %v114 = vld [vmem:[#allocation7 + $0x118] sm:$0xff]
    %v115 = vld [vmem:[#allocation7 + $0x120] sm:$0xff]
    %v116 = vld [vmem:[#allocation7 + $0x128] sm:$0xff]
    %v117 = vld [vmem:[#allocation7 + $0x130] sm:$0xff]
    %v118 = vld [vmem:[#allocation7 + $0x138] sm:$0xff]
    %v119 = vld [vmem:[#allocation7 + $0x140] sm:$0xff]
    %v120 = vld [vmem:[#allocation7 + $0x148] sm:$0xff]
    %v121 = vld [vmem:[#allocation7 + $0x150] sm:$0xff]
    %v122 = vld [vmem:[#allocation7 + $0x158] sm:$0xff]
    %v123 = vld [vmem:[#allocation7 + $0x160] sm:$0xff]
    %v124 = vld [vmem:[#allocation7 + $0x168] sm:$0xff]
    %v125 = vld [vmem:[#allocation7 + $0x170] sm:$0xff]
    %v126 = vld [vmem:[#allocation7 + $0x178] sm:$0xff]
    %v127 = vld [vmem:[#allocation7 + $0x180] sm:$0xff]
    %v128 = vld [vmem:[#allocation7 + $0x188] sm:$0xff]
    %v129 = vld [vmem:[#allocation7 + $0x190] sm:$0xff]
    %v130 = vld [vmem:[#allocation7 + $0x198] sm:$0xff]
    %v131 = vld [vmem:[#allocation7 + $0x1a0] sm:$0xff]
    %v132 = vld [vmem:[#allocation7 + $0x1a8] sm:$0xff]
    %v133 = vld [vmem:[#allocation7 + $0x1b0] sm:$0xff]
    %v134 = vld [vmem:[#allocation7 + $0x1b8] sm:$0xff]
    %v135 = vld [vmem:[#allocation7 + $0x1c0] sm:$0xff]
    %v136 = vld [vmem:[#allocation7 + $0x1c8] sm:$0xff]
    %v137 = vld [vmem:[#allocation7 + $0x1d0] sm:$0xff]
    %v138 = vld [vmem:[#allocation7 + $0x1d8] sm:$0xff]
    %v139 = vld [vmem:[#allocation7 + $0x1e0] sm:$0xff]
    %v140 = vld [vmem:[#allocation7 + $0x1e8] sm:$0xff]
    %v141 = vld [vmem:[#allocation7 + $0x1f0] sm:$0xff]
    %v142 = vld [vmem:[#allocation7 + $0x1f8] sm:$0xff]
    %v143 = vld [vmem:[#allocation9] sm:$0xff]
    %v144 = vld [vmem:[#allocation9 + $0x8] sm:$0xff]
    %v145 = vld [vmem:[#allocation9 + $0x10] sm:$0xff]
    %v146 = vld [vmem:[#allocation9 + $0x18] sm:$0xff]
    %v147 = vld [vmem:[#allocation9 + $0x20] sm:$0xff]
    %v148 = vld [vmem:[#allocation9 + $0x28] sm:$0xff]
    %v149 = vld [vmem:[#allocation9 + $0x30] sm:$0xff]
    %v150 = vld [vmem:[#allocation9 + $0x38] sm:$0xff]
    %v151 = vld [vmem:[#allocation9 + $0x40] sm:$0xff]
    %v152 = vld [vmem:[#allocation9 + $0x48] sm:$0xff]
    %v153 = vld [vmem:[#allocation9 + $0x50] sm:$0xff]
    %v154 = vld [vmem:[#allocation9 + $0x58] sm:$0xff]
    %v155 = vld [vmem:[#allocation9 + $0x60] sm:$0xff]
    %v156 = vld [vmem:[#allocation9 + $0x68] sm:$0xff]
    %v157 = vld [vmem:[#allocation9 + $0x70] sm:$0xff]
    %v158 = vld [vmem:[#allocation9 + $0x78] sm:$0xff]
    %v159 = vld [vmem:[#allocation9 + $0x80] sm:$0xff]
    %v160 = vld [vmem:[#allocation9 + $0x88] sm:$0xff]
    %v161 = vld [vmem:[#allocation9 + $0x90] sm:$0xff]
    %v162 = vld [vmem:[#allocation9 + $0x98] sm:$0xff]
    %v163 = vld [vmem:[#allocation9 + $0xa0] sm:$0xff]
    %v164 = vld [vmem:[#allocation9 + $0xa8] sm:$0xff]
    %v165 = vld [vmem:[#allocation9 + $0xb0] sm:$0xff]
    %v166 = vld [vmem:[#allocation9 + $0xb8] sm:$0xff]
    %v167 = vld [vmem:[#allocation9 + $0xc0] sm:$0xff]
    %v168 = vld [vmem:[#allocation9 + $0xc8] sm:$0xff]
    %v169 = vld [vmem:[#allocation9 + $0xd0] sm:$0xff]
    %v170 = vld [vmem:[#allocation9 + $0xd8] sm:$0xff]
    %v171 = vld [vmem:[#allocation9 + $0xe0] sm:$0xff]
    %v172 = vld [vmem:[#allocation9 + $0xe8] sm:$0xff]
    %v173 = vld [vmem:[#allocation9 + $0xf0] sm:$0xff]
    %v174 = vld [vmem:[#allocation9 + $0xf8] sm:$0xff]
    %v175 = vld [vmem:[#allocation9 + $0x100] sm:$0xff]
    %v176 = vld [vmem:[#allocation9 + $0x108] sm:$0xff]
    %v177 = vld [vmem:[#allocation9 + $0x110] sm:$0xff]
    %v178 = vld [vmem:[#allocation9 + $0x118] sm:$0xff]
    %v179 = vld [vmem:[#allocation9 + $0x120] sm:$0xff]
    %v180 = vld [vmem:[#allocation9 + $0x128] sm:$0xff]
    %v181 = vld [vmem:[#allocation9 + $0x130] sm:$0xff]
    %v182 = vld [vmem:[#allocation9 + $0x138] sm:$0xff]
    %v183 = vld [vmem:[#allocation9 + $0x140] sm:$0xff]
    %v184 = vld [vmem:[#allocation9 + $0x148] sm:$0xff]
    %v185 = vld [vmem:[#allocation9 + $0x150] sm:$0xff]
    %v186 = vld [vmem:[#allocation9 + $0x158] sm:$0xff]
    %v187 = vld [vmem:[#allocation9 + $0x160] sm:$0xff]
    %v188 = vld [vmem:[#allocation9 + $0x168] sm:$0xff]
    %v189 = vld [vmem:[#allocation9 + $0x170] sm:$0xff]
    %v190 = vld [vmem:[#allocation9 + $0x178] sm:$0xff]
    %v191 = vld [vmem:[#allocation9 + $0x180] sm:$0xff]
    %v192 = vld [vmem:[#allocation9 + $0x188] sm:$0xff]
    %v193 = vld [vmem:[#allocation9 + $0x190] sm:$0xff]
    %v194 = vld [vmem:[#allocation9 + $0x198] sm:$0xff]
    %v195 = vld [vmem:[#allocation9 + $0x1a0] sm:$0xff]
    %v196 = vld [vmem:[#allocation9 + $0x1a8] sm:$0xff]
    %v197 = vld [vmem:[#allocation9 + $0x1b0] sm:$0xff]
    %v198 = vld [vmem:[#allocation9 + $0x1b8] sm:$0xff]
    %v199 = vld [vmem:[#allocation9 + $0x1c0] sm:$0xff]
    %v200 = vld [vmem:[#allocation9 + $0x1c8] sm:$0xff]
    %v201 = vld [vmem:[#allocation9 + $0x1d0] sm:$0xff]
    %v202 = vld [vmem:[#allocation9 + $0x1d8] sm:$0xff]
    %v203 = vld [vmem:[#allocation9 + $0x1e0] sm:$0xff]
    %v204 = vld [vmem:[#allocation9 + $0x1e8] sm:$0xff]
    %v205 = vld [vmem:[#allocation9 + $0x1f0] sm:$0xff]
    %v206 = vld [vmem:[#allocation9 + $0x1f8] sm:$0xff]
    %v207 = vld [vmem:[%s3] sm:$0xf]
    %v208 = vld [vmem:[#allocation4] sm:$0x1]
    %v209 = vld [vmem:[#allocation4 + $0x8] sm:$0x1]
    %v210 = vld [vmem:[#allocation4 + $0x10] sm:$0x1]
    %v211 = vld [vmem:[#allocation4 + $0x18] sm:$0x1]
    %v212 = vld [vmem:[#allocation4 + $0x20] sm:$0x1]
    %v213 = vld [vmem:[#allocation4 + $0x28] sm:$0x1]
    %v214 = vld [vmem:[#allocation4 + $0x30] sm:$0x1]
    %v215 = vld [vmem:[#allocation4 + $0x38] sm:$0x1]
    %v217 = vlaneseq
    %v218 = vshrl.u32 %v217, 7
    %v219 = vsub.s32 0, %v218
    %v220 = vrot.slane %v207, %v219
    %v221 = vlaneseq
    %v222 = vshrl.u32 %v221, 7
    %v223 = vsub.s32 1, %v222
    %v224 = vrot.slane %v207, %v223
    %v225 = vlaneseq
    %v226 = vshrl.u32 %v225, 7
    %v227 = vsub.s32 2, %v226
    %v228 = vrot.slane %v207, %v227
    %v229 = vlaneseq
    %v230 = vshrl.u32 %v229, 7
    %v231 = vsub.s32 3, %v230
    %v232 = vrot.slane %v207, %v231
    %v245 = vrot.slane %v209, 7
    %vm246 = vcmask 1041409
    %v247 = vsel %vm246, %v245, %v208
    %v248 = vrot.slane %v210, 6
    %vm249 = vcmask 1042434
    %v250 = vsel %vm249, %v248, %v247
    %v251 = vrot.slane %v211, 5
    %vm252 = vcmask 1043459
    %v253 = vsel %vm252, %v251, %v250
    %v254 = vrot.slane %v212, 4
    %vm255 = vcmask 1044484
    %v256 = vsel %vm255, %v254, %v253
    %v257 = vrot.slane %v213, 3
    %vm258 = vcmask 1045509
    %v259 = vsel %vm258, %v257, %v256
    %v260 = vrot.slane %v214, 2
    %vm261 = vcmask 1046534
    %v262 = vsel %vm261, %v260, %v259
    %v263 = vrot.slane %v215, 1
    %vm264 = vcmask 1047559
    %v265 = vsel %vm264, %v263, %v262
    %267 = vmatprep.subr.mxu0 %v140
    %268 = vmatpush1.msra.mxu0 %v139
    %269 = vmatprep.subr.mxu0 %v136
    %270 = vmatpush1.msra.mxu0 %v135
    %271 = vmatprep.subr.mxu0 %v132
    %272 = vmatpush1.msra.mxu0 %v131
    %273 = vmatprep.subr.mxu0 %v128
    %274 = vmatpush1.msra.mxu0 %v127
    %275 = vmatprep.subr.mxu0 %v124
    %276 = vmatpush1.msra.mxu0 %v123
    %277 = vmatprep.subr.mxu0 %v120
    %278 = vmatpush1.msra.mxu0 %v119
    %279 = vmatprep.subr.mxu0 %v116
    %280 = vmatpush1.msra.mxu0 %v115
    %281 = vmatprep.subr.mxu0 %v112
    %282 = vmatpush1.msra.mxu0 %v111
    %283 = vmatprep.subr.mxu0 %v108
    %284 = vmatpush1.msra.mxu0 %v107
    %285 = vmatprep.subr.mxu0 %v104
    %286 = vmatpush1.msra.mxu0 %v103
    %287 = vmatprep.subr.mxu0 %v100
    %288 = vmatpush1.msra.mxu0 %v99
    %289 = vmatprep.subr.mxu0 %v96
    %290 = vmatpush1.msra.mxu0 %v95
    %291 = vmatprep.subr.mxu0 %v92
    %292 = vmatpush1.msra.mxu0 %v91
    %293 = vmatprep.subr.mxu0 %v88
    %294 = vmatpush1.msra.mxu0 %v87
    %295 = vmatprep.subr.mxu0 %v84
    %296 = vmatpush1.msra.mxu0 %v83
    %297 = vmatprep.subr.mxu0 %v80
    %298 = vmatpush1.msra.mxu0 %v79
    %299 = vmatprep.subr.mxu0 0.0
    %300 = vmatpush2.msra.mxu0 0.0
    %301 = vmatprep.subr.mxu0 0.0
    %302 = vmatpush2.msra.mxu0 0.0
    %303 = vmatprep.subr.mxu0 0.0
    %304 = vmatpush2.msra.mxu0 0.0
    %305 = vmatprep.subr.mxu0 0.0
    %306 = vmatpush2.msra.mxu0 0.0
    %307 = vmatprep.subr.mxu0 0.0
    %308 = vmatpush2.msra.mxu0 0.0
    %309 = vmatprep.subr.mxu0 0.0
    %310 = vmatpush2.msra.mxu0 0.0
    %311 = vmatprep.subr.mxu0 0.0
    %312 = vmatpush2.msra.mxu0 0.0
    %313 = vmatprep.subr.mxu0 0.0
    %314 = vmatpush2.msra.mxu0 0.0
    %315 = vmatprep.subr.mxu0 0.0
    %316 = vmatpush2.msra.mxu0 0.0
    %317 = vmatprep.subr.mxu0 0.0
    %318 = vmatpush2.msra.mxu0 0.0
    %319 = vmatprep.subr.mxu0 0.0
    %320 = vmatpush2.msra.mxu0 0.0
    %321 = vmatprep.subr.mxu0 0.0
    %322 = vmatpush2.msra.mxu0 0.0
    %323 = vmatprep.subr.mxu0 0.0
    %324 = vmatpush2.msra.mxu0 0.0
    %325 = vmatprep.subr.mxu0 0.0
    %326 = vmatpush2.msra.mxu0 0.0
    %327 = vmatprep.subr.mxu0 0.0
    %328 = vmatpush2.msra.mxu0 0.0
    %329 = vmatprep.subr.mxu0 0.0
    %330 = vmatpush2.msra.mxu0 0.0
    %331 = vmatprep.mubr.f32.mxu0 0.0
    %332 = vmatmul.mubr.f32.gmra.mxu0 %v265
    %v333 = vpop.f32.mrf.mxu0
    %v334 = vadd.f32 %v220, %v333
    %v335 = vpop.f32.mrf.mxu0
    %v336 = vadd.f32 %v224, %v335
    %337 = vdwg.mxu0
    %338 = vmatprep.subr.mxu0 %v142
    %339 = vmatpush1.msra.mxu0 %v141
    %340 = vmatprep.subr.mxu0 %v138
    %341 = vmatpush1.msra.mxu0 %v137
    %342 = vmatprep.subr.mxu0 %v134
    %343 = vmatpush1.msra.mxu0 %v133
    %344 = vmatprep.subr.mxu0 %v130
    %345 = vmatpush1.msra.mxu0 %v129
    %346 = vmatprep.subr.mxu0 %v126
    %347 = vmatpush1.msra.mxu0 %v125
    %348 = vmatprep.subr.mxu0 %v122
    %349 = vmatpush1.msra.mxu0 %v121
    %350 = vmatprep.subr.mxu0 %v118
    %351 = vmatpush1.msra.mxu0 %v117
    %352 = vmatprep.subr.mxu0 %v114
    %353 = vmatpush1.msra.mxu0 %v113
    %354 = vmatprep.subr.mxu0 %v110
    %355 = vmatpush1.msra.mxu0 %v109
    %356 = vmatprep.subr.mxu0 %v106
    %357 = vmatpush1.msra.mxu0 %v105
    %358 = vmatprep.subr.mxu0 %v102
    %359 = vmatpush1.msra.mxu0 %v101
    %360 = vmatprep.subr.mxu0 %v98
    %361 = vmatpush1.msra.mxu0 %v97
    %362 = vmatprep.subr.mxu0 %v94
    %363 = vmatpush1.msra.mxu0 %v93
    %364 = vmatprep.subr.mxu0 %v90
    %365 = vmatpush1.msra.mxu0 %v89
    %366 = vmatprep.subr.mxu0 %v86
    %367 = vmatpush1.msra.mxu0 %v85
    %368 = vmatprep.subr.mxu0 %v82
    %369 = vmatpush1.msra.mxu0 %v81
    %370 = vmatprep.subr.mxu0 0.0
    %371 = vmatpush2.msra.mxu0 0.0
    %372 = vmatprep.subr.mxu0 0.0
    %373 = vmatpush2.msra.mxu0 0.0
    %374 = vmatprep.subr.mxu0 0.0
    %375 = vmatpush2.msra.mxu0 0.0
    %376 = vmatprep.subr.mxu0 0.0
    %377 = vmatpush2.msra.mxu0 0.0
    %378 = vmatprep.subr.mxu0 0.0
    %379 = vmatpush2.msra.mxu0 0.0
    %380 = vmatprep.subr.mxu0 0.0
    %381 = vmatpush2.msra.mxu0 0.0
    %382 = vmatprep.subr.mxu0 0.0
    %383 = vmatpush2.msra.mxu0 0.0
    %384 = vmatprep.subr.mxu0 0.0
    %385 = vmatpush2.msra.mxu0 0.0
    %386 = vmatprep.subr.mxu0 0.0
    %387 = vmatpush2.msra.mxu0 0.0
    %388 = vmatprep.subr.mxu0 0.0
    %389 = vmatpush2.msra.mxu0 0.0
    %390 = vmatprep.subr.mxu0 0.0
    %391 = vmatpush2.msra.mxu0 0.0
    %392 = vmatprep.subr.mxu0 0.0
    %393 = vmatpush2.msra.mxu0 0.0
    %394 = vmatprep.subr.mxu0 0.0
    %395 = vmatpush2.msra.mxu0 0.0
    %396 = vmatprep.subr.mxu0 0.0
    %397 = vmatpush2.msra.mxu0 0.0
    %398 = vmatprep.subr.mxu0 0.0
    %399 = vmatpush2.msra.mxu0 0.0
    %400 = vmatprep.subr.mxu0 0.0
    %401 = vmatpush2.msra.mxu0 0.0
    %402 = vmatprep.mubr.f32.mxu0 0.0
    %403 = vmatmul.mubr.f32.gmra.mxu0 %v265
    %v404 = vpop.f32.mrf.mxu0
    %v405 = vadd.f32 %v228, %v404
    %v406 = vpop.f32.mrf.mxu0
    %v407 = vadd.f32 %v232, %v406
    %408 = vdwg.mxu0
    %409 = vst [vmem:[#allocation2] sm:$0xff] %v334
    %410 = vst [vmem:[#allocation2 + $0x8] sm:$0xff] %v336
    %411 = vst [vmem:[#allocation2 + $0x10] sm:$0xff] %v405
    %412 = vst [vmem:[#allocation2 + $0x18] sm:$0xff] %v407
    %v413 = vld [vmem:[#allocation4 + $0x1] sm:$0x1]
    %v414 = vld [vmem:[#allocation4 + $0x9] sm:$0x1]
    %v415 = vld [vmem:[#allocation4 + $0x11] sm:$0x1]
    %v416 = vld [vmem:[#allocation4 + $0x19] sm:$0x1]
    %v417 = vld [vmem:[#allocation4 + $0x21] sm:$0x1]
    %v418 = vld [vmem:[#allocation4 + $0x29] sm:$0x1]
    %v419 = vld [vmem:[#allocation4 + $0x31] sm:$0x1]
    %v420 = vld [vmem:[#allocation4 + $0x39] sm:$0x1]
    %v429 = vrot.slane %v414, 7
    %v430 = vsel %vm246, %v429, %v413
    %v431 = vrot.slane %v415, 6
    %v432 = vsel %vm249, %v431, %v430
    %v433 = vrot.slane %v416, 5
    %v434 = vsel %vm252, %v433, %v432
    %v435 = vrot.slane %v417, 4
    %v436 = vsel %vm255, %v435, %v434
    %v437 = vrot.slane %v418, 3
    %v438 = vsel %vm258, %v437, %v436
    %v439 = vrot.slane %v419, 2
    %v440 = vsel %vm261, %v439, %v438
    %v441 = vrot.slane %v420, 1
    %v442 = vsel %vm264, %v441, %v440
    %444 = vmatprep.subr.mxu0 %v140
    %445 = vmatpush1.msra.mxu0 %v139
    %446 = vmatprep.subr.mxu0 %v136
    %447 = vmatpush1.msra.mxu0 %v135
    %448 = vmatprep.subr.mxu0 %v132
    %449 = vmatpush1.msra.mxu0 %v131
    %450 = vmatprep.subr.mxu0 %v128
    %451 = vmatpush1.msra.mxu0 %v127
    %452 = vmatprep.subr.mxu0 %v124
    %453 = vmatpush1.msra.mxu0 %v123
    %454 = vmatprep.subr.mxu0 %v120
    %455 = vmatpush1.msra.mxu0 %v119
    %456 = vmatprep.subr.mxu0 %v116
    %457 = vmatpush1.msra.mxu0 %v115
    %458 = vmatprep.subr.mxu0 %v112
    %459 = vmatpush1.msra.mxu0 %v111
    %460 = vmatprep.subr.mxu0 %v108
    %461 = vmatpush1.msra.mxu0 %v107
    %462 = vmatprep.subr.mxu0 %v104
    %463 = vmatpush1.msra.mxu0 %v103
    %464 = vmatprep.subr.mxu0 %v100
    %465 = vmatpush1.msra.mxu0 %v99
    %466 = vmatprep.subr.mxu0 %v96
    %467 = vmatpush1.msra.mxu0 %v95
    %468 = vmatprep.subr.mxu0 %v92
    %469 = vmatpush1.msra.mxu0 %v91
    %470 = vmatprep.subr.mxu0 %v88
    %471 = vmatpush1.msra.mxu0 %v87
    %472 = vmatprep.subr.mxu0 %v84
    %473 = vmatpush1.msra.mxu0 %v83
    %474 = vmatprep.subr.mxu0 %v80
    %475 = vmatpush1.msra.mxu0 %v79
    %476 = vmatprep.subr.mxu0 0.0
    %477 = vmatpush2.msra.mxu0 0.0
    %478 = vmatprep.subr.mxu0 0.0
    %479 = vmatpush2.msra.mxu0 0.0
    %480 = vmatprep.subr.mxu0 0.0
    %481 = vmatpush2.msra.mxu0 0.0
    %482 = vmatprep.subr.mxu0 0.0
    %483 = vmatpush2.msra.mxu0 0.0
    %484 = vmatprep.subr.mxu0 0.0
    %485 = vmatpush2.msra.mxu0 0.0
    %486 = vmatprep.subr.mxu0 0.0
    %487 = vmatpush2.msra.mxu0 0.0
    %488 = vmatprep.subr.mxu0 0.0
    %489 = vmatpush2.msra.mxu0 0.0
    %490 = vmatprep.subr.mxu0 0.0
    %491 = vmatpush2.msra.mxu0 0.0
    %492 = vmatprep.subr.mxu0 0.0
    %493 = vmatpush2.msra.mxu0 0.0
    %494 = vmatprep.subr.mxu0 0.0
    %495 = vmatpush2.msra.mxu0 0.0
    %496 = vmatprep.subr.mxu0 0.0
    %497 = vmatpush2.msra.mxu0 0.0
    %498 = vmatprep.subr.mxu0 0.0
    %499 = vmatpush2.msra.mxu0 0.0
    %500 = vmatprep.subr.mxu0 0.0
    %501 = vmatpush2.msra.mxu0 0.0
    %502 = vmatprep.subr.mxu0 0.0
    %503 = vmatpush2.msra.mxu0 0.0
    %504 = vmatprep.subr.mxu0 0.0
    %505 = vmatpush2.msra.mxu0 0.0
    %506 = vmatprep.subr.mxu0 0.0
    %507 = vmatpush2.msra.mxu0 0.0
    %508 = vmatprep.mubr.f32.mxu0 0.0
    %509 = vmatmul.mubr.f32.gmra.mxu0 %v442
    %v510 = vpop.f32.mrf.mxu0
    %v511 = vadd.f32 %v220, %v510
    %v512 = vpop.f32.mrf.mxu0
    %v513 = vadd.f32 %v224, %v512
    %514 = vdwg.mxu0
    %515 = vmatprep.subr.mxu0 %v142
    %516 = vmatpush1.msra.mxu0 %v141
    %517 = vmatprep.subr.mxu0 %v138
    %518 = vmatpush1.msra.mxu0 %v137
    %519 = vmatprep.subr.mxu0 %v134
    %520 = vmatpush1.msra.mxu0 %v133
    %521 = vmatprep.subr.mxu0 %v130
    %522 = vmatpush1.msra.mxu0 %v129
    %523 = vmatprep.subr.mxu0 %v126
    %524 = vmatpush1.msra.mxu0 %v125
    %525 = vmatprep.subr.mxu0 %v122
    %526 = vmatpush1.msra.mxu0 %v121
    %527 = vmatprep.subr.mxu0 %v118
    %528 = vmatpush1.msra.mxu0 %v117
    %529 = vmatprep.subr.mxu0 %v114
    %530 = vmatpush1.msra.mxu0 %v113
    %531 = vmatprep.subr.mxu0 %v110
    %532 = vmatpush1.msra.mxu0 %v109
    %533 = vmatprep.subr.mxu0 %v106
    %534 = vmatpush1.msra.mxu0 %v105
    %535 = vmatprep.subr.mxu0 %v102
    %536 = vmatpush1.msra.mxu0 %v101
    %537 = vmatprep.subr.mxu0 %v98
    %538 = vmatpush1.msra.mxu0 %v97
    %539 = vmatprep.subr.mxu0 %v94
    %540 = vmatpush1.msra.mxu0 %v93
    %541 = vmatprep.subr.mxu0 %v90
    %542 = vmatpush1.msra.mxu0 %v89
    %543 = vmatprep.subr.mxu0 %v86
    %544 = vmatpush1.msra.mxu0 %v85
    %545 = vmatprep.subr.mxu0 %v82
    %546 = vmatpush1.msra.mxu0 %v81
    %547 = vmatprep.subr.mxu0 0.0
    %548 = vmatpush2.msra.mxu0 0.0
    %549 = vmatprep.subr.mxu0 0.0
    %550 = vmatpush2.msra.mxu0 0.0
    %551 = vmatprep.subr.mxu0 0.0
    %552 = vmatpush2.msra.mxu0 0.0
    %553 = vmatprep.subr.mxu0 0.0
    %554 = vmatpush2.msra.mxu0 0.0
    %555 = vmatprep.subr.mxu0 0.0
    %556 = vmatpush2.msra.mxu0 0.0
    %557 = vmatprep.subr.mxu0 0.0
    %558 = vmatpush2.msra.mxu0 0.0
    %559 = vmatprep.subr.mxu0 0.0
    %560 = vmatpush2.msra.mxu0 0.0
    %561 = vmatprep.subr.mxu0 0.0
    %562 = vmatpush2.msra.mxu0 0.0
    %563 = vmatprep.subr.mxu0 0.0
    %564 = vmatpush2.msra.mxu0 0.0
    %565 = vmatprep.subr.mxu0 0.0
    %566 = vmatpush2.msra.mxu0 0.0
    %567 = vmatprep.subr.mxu0 0.0
    %568 = vmatpush2.msra.mxu0 0.0
    %569 = vmatprep.subr.mxu0 0.0
    %570 = vmatpush2.msra.mxu0 0.0
    %571 = vmatprep.subr.mxu0 0.0
    %572 = vmatpush2.msra.mxu0 0.0
    %573 = vmatprep.subr.mxu0 0.0
    %574 = vmatpush2.msra.mxu0 0.0
    %575 = vmatprep.subr.mxu0 0.0
    %576 = vmatpush2.msra.mxu0 0.0
    %577 = vmatprep.subr.mxu0 0.0
    %578 = vmatpush2.msra.mxu0 0.0
    %579 = vmatprep.mubr.f32.mxu0 0.0
    %580 = vmatmul.mubr.f32.gmra.mxu0 %v442
    %v581 = vpop.f32.mrf.mxu0
    %v582 = vadd.f32 %v228, %v581
    %v583 = vpop.f32.mrf.mxu0
    %v584 = vadd.f32 %v232, %v583
    %585 = vdwg.mxu0
    %s586 = scalar_lea.vmem [#allocation2], 32
    %587 = vst [vmem:[%s586] sm:$0xff] %v511
    %588 = vst [vmem:[%s586 + $0x8] sm:$0xff] %v513
    %589 = vst [vmem:[%s586 + $0x10] sm:$0xff] %v582
    %590 = vst [vmem:[%s586 + $0x18] sm:$0xff] %v584
    %v591 = vld [vmem:[#allocation4 + $0x2] sm:$0x1]
    %v592 = vld [vmem:[#allocation4 + $0xa] sm:$0x1]
    %v593 = vld [vmem:[#allocation4 + $0x12] sm:$0x1]
    %v594 = vld [vmem:[#allocation4 + $0x1a] sm:$0x1]
    %v595 = vld [vmem:[#allocation4 + $0x22] sm:$0x1]
    %v596 = vld [vmem:[#allocation4 + $0x2a] sm:$0x1]
    %v597 = vld [vmem:[#allocation4 + $0x32] sm:$0x1]
    %v598 = vld [vmem:[#allocation4 + $0x3a] sm:$0x1]
    %v607 = vrot.slane %v592, 7
    %v608 = vsel %vm246, %v607, %v591
    %v609 = vrot.slane %v593, 6
    %v610 = vsel %vm249, %v609, %v608
    %v611 = vrot.slane %v594, 5
    %v612 = vsel %vm252, %v611, %v610
    %v613 = vrot.slane %v595, 4
    %v614 = vsel %vm255, %v613, %v612
    %v615 = vrot.slane %v596, 3
    %v616 = vsel %vm258, %v615, %v614
    %v617 = vrot.slane %v597, 2
    %v618 = vsel %vm261, %v617, %v616
    %v619 = vrot.slane %v598, 1
    %v620 = vsel %vm264, %v619, %v618
    %622 = vmatprep.subr.mxu0 %v140
    %623 = vmatpush1.msra.mxu0 %v139
    %624 = vmatprep.subr.mxu0 %v136
    %625 = vmatpush1.msra.mxu0 %v135
    %626 = vmatprep.subr.mxu0 %v132
    %627 = vmatpush1.msra.mxu0 %v131
    %628 = vmatprep.subr.mxu0 %v128
    %629 = vmatpush1.msra.mxu0 %v127
    %630 = vmatprep.subr.mxu0 %v124
    %631 = vmatpush1.msra.mxu0 %v123
    %632 = vmatprep.subr.mxu0 %v120
    %633 = vmatpush1.msra.mxu0 %v119
    %634 = vmatprep.subr.mxu0 %v116
    %635 = vmatpush1.msra.mxu0 %v115
    %636 = vmatprep.subr.mxu0 %v112
    %637 = vmatpush1.msra.mxu0 %v111
    %638 = vmatprep.subr.mxu0 %v108
    %639 = vmatpush1.msra.mxu0 %v107
    %640 = vmatprep.subr.mxu0 %v104
    %641 = vmatpush1.msra.mxu0 %v103
    %642 = vmatprep.subr.mxu0 %v100
    %643 = vmatpush1.msra.mxu0 %v99
    %644 = vmatprep.subr.mxu0 %v96
    %645 = vmatpush1.msra.mxu0 %v95
    %646 = vmatprep.subr.mxu0 %v92
    %647 = vmatpush1.msra.mxu0 %v91
    %648 = vmatprep.subr.mxu0 %v88
    %649 = vmatpush1.msra.mxu0 %v87
    %650 = vmatprep.subr.mxu0 %v84
    %651 = vmatpush1.msra.mxu0 %v83
    %652 = vmatprep.subr.mxu0 %v80
    %653 = vmatpush1.msra.mxu0 %v79
    %654 = vmatprep.subr.mxu0 0.0
    %655 = vmatpush2.msra.mxu0 0.0
    %656 = vmatprep.subr.mxu0 0.0
    %657 = vmatpush2.msra.mxu0 0.0
    %658 = vmatprep.subr.mxu0 0.0
    %659 = vmatpush2.msra.mxu0 0.0
    %660 = vmatprep.subr.mxu0 0.0
    %661 = vmatpush2.msra.mxu0 0.0
    %662 = vmatprep.subr.mxu0 0.0
    %663 = vmatpush2.msra.mxu0 0.0
    %664 = vmatprep.subr.mxu0 0.0
    %665 = vmatpush2.msra.mxu0 0.0
    %666 = vmatprep.subr.mxu0 0.0
    %667 = vmatpush2.msra.mxu0 0.0
    %668 = vmatprep.subr.mxu0 0.0
    %669 = vmatpush2.msra.mxu0 0.0
    %670 = vmatprep.subr.mxu0 0.0
    %671 = vmatpush2.msra.mxu0 0.0
    %672 = vmatprep.subr.mxu0 0.0
    %673 = vmatpush2.msra.mxu0 0.0
    %674 = vmatprep.subr.mxu0 0.0
    %675 = vmatpush2.msra.mxu0 0.0
    %676 = vmatprep.subr.mxu0 0.0
    %677 = vmatpush2.msra.mxu0 0.0
    %678 = vmatprep.subr.mxu0 0.0
    %679 = vmatpush2.msra.mxu0 0.0
    %680 = vmatprep.subr.mxu0 0.0
    %681 = vmatpush2.msra.mxu0 0.0
    %682 = vmatprep.subr.mxu0 0.0
    %683 = vmatpush2.msra.mxu0 0.0
    %684 = vmatprep.subr.mxu0 0.0
    %685 = vmatpush2.msra.mxu0 0.0
    %686 = vmatprep.mubr.f32.mxu0 0.0
    %687 = vmatmul.mubr.f32.gmra.mxu0 %v620
    %v688 = vpop.f32.mrf.mxu0
    %v689 = vadd.f32 %v220, %v688
    %v690 = vpop.f32.mrf.mxu0
    %v691 = vadd.f32 %v224, %v690
    %692 = vdwg.mxu0
    %693 = vmatprep.subr.mxu0 %v142
    %694 = vmatpush1.msra.mxu0 %v141
    %695 = vmatprep.subr.mxu0 %v138
    %696 = vmatpush1.msra.mxu0 %v137
    %697 = vmatprep.subr.mxu0 %v134
    %698 = vmatpush1.msra.mxu0 %v133
    %699 = vmatprep.subr.mxu0 %v130
    %700 = vmatpush1.msra.mxu0 %v129
    %701 = vmatprep.subr.mxu0 %v126
    %702 = vmatpush1.msra.mxu0 %v125
    %703 = vmatprep.subr.mxu0 %v122
    %704 = vmatpush1.msra.mxu0 %v121
    %705 = vmatprep.subr.mxu0 %v118
    %706 = vmatpush1.msra.mxu0 %v117
    %707 = vmatprep.subr.mxu0 %v114
    %708 = vmatpush1.msra.mxu0 %v113
    %709 = vmatprep.subr.mxu0 %v110
    %710 = vmatpush1.msra.mxu0 %v109
    %711 = vmatprep.subr.mxu0 %v106
    %712 = vmatpush1.msra.mxu0 %v105
    %713 = vmatprep.subr.mxu0 %v102
    %714 = vmatpush1.msra.mxu0 %v101
    %715 = vmatprep.subr.mxu0 %v98
    %716 = vmatpush1.msra.mxu0 %v97
    %717 = vmatprep.subr.mxu0 %v94
    %718 = vmatpush1.msra.mxu0 %v93
    %719 = vmatprep.subr.mxu0 %v90
    %720 = vmatpush1.msra.mxu0 %v89
    %721 = vmatprep.subr.mxu0 %v86
    %722 = vmatpush1.msra.mxu0 %v85
    %723 = vmatprep.subr.mxu0 %v82
    %724 = vmatpush1.msra.mxu0 %v81
    %725 = vmatprep.subr.mxu0 0.0
    %726 = vmatpush2.msra.mxu0 0.0
    %727 = vmatprep.subr.mxu0 0.0
    %728 = vmatpush2.msra.mxu0 0.0
    %729 = vmatprep.subr.mxu0 0.0
    %730 = vmatpush2.msra.mxu0 0.0
    %731 = vmatprep.subr.mxu0 0.0
    %732 = vmatpush2.msra.mxu0 0.0
    %733 = vmatprep.subr.mxu0 0.0
    %734 = vmatpush2.msra.mxu0 0.0
    %735 = vmatprep.subr.mxu0 0.0
    %736 = vmatpush2.msra.mxu0 0.0
    %737 = vmatprep.subr.mxu0 0.0
    %738 = vmatpush2.msra.mxu0 0.0
    %739 = vmatprep.subr.mxu0 0.0
    %740 = vmatpush2.msra.mxu0 0.0
    %741 = vmatprep.subr.mxu0 0.0
    %742 = vmatpush2.msra.mxu0 0.0
    %743 = vmatprep.subr.mxu0 0.0
    %744 = vmatpush2.msra.mxu0 0.0
    %745 = vmatprep.subr.mxu0 0.0
    %746 = vmatpush2.msra.mxu0 0.0
    %747 = vmatprep.subr.mxu0 0.0
    %748 = vmatpush2.msra.mxu0 0.0
    %749 = vmatprep.subr.mxu0 0.0
    %750 = vmatpush2.msra.mxu0 0.0
    %751 = vmatprep.subr.mxu0 0.0
    %752 = vmatpush2.msra.mxu0 0.0
    %753 = vmatprep.subr.mxu0 0.0
    %754 = vmatpush2.msra.mxu0 0.0
    %755 = vmatprep.subr.mxu0 0.0
    %756 = vmatpush2.msra.mxu0 0.0
    %757 = vmatprep.mubr.f32.mxu0 0.0
    %758 = vmatmul.mubr.f32.gmra.mxu0 %v620
    %v759 = vpop.f32.mrf.mxu0
    %v760 = vadd.f32 %v228, %v759
    %v761 = vpop.f32.mrf.mxu0
    %v762 = vadd.f32 %v232, %v761
    %763 = vdwg.mxu0
    %s764 = scalar_lea.vmem [#allocation2], 64
    %765 = vst [vmem:[%s764] sm:$0xff] %v689
    %766 = vst [vmem:[%s764 + $0x8] sm:$0xff] %v691
    %767 = vst [vmem:[%s764 + $0x10] sm:$0xff] %v760
    %768 = vst [vmem:[%s764 + $0x18] sm:$0xff] %v762
    %v769 = vld [vmem:[#allocation4 + $0x3] sm:$0x1]
    %v770 = vld [vmem:[#allocation4 + $0xb] sm:$0x1]
    %v771 = vld [vmem:[#allocation4 + $0x13] sm:$0x1]
    %v772 = vld [vmem:[#allocation4 + $0x1b] sm:$0x1]
    %v773 = vld [vmem:[#allocation4 + $0x23] sm:$0x1]
    %v774 = vld [vmem:[#allocation4 + $0x2b] sm:$0x1]
    %v775 = vld [vmem:[#allocation4 + $0x33] sm:$0x1]
    %v776 = vld [vmem:[#allocation4 + $0x3b] sm:$0x1]
    %v785 = vrot.slane %v770, 7
    %v786 = vsel %vm246, %v785, %v769
    %v787 = vrot.slane %v771, 6
    %v788 = vsel %vm249, %v787, %v786
    %v789 = vrot.slane %v772, 5
    %v790 = vsel %vm252, %v789, %v788
    %v791 = vrot.slane %v773, 4
    %v792 = vsel %vm255, %v791, %v790
    %v793 = vrot.slane %v774, 3
    %v794 = vsel %vm258, %v793, %v792
    %v795 = vrot.slane %v775, 2
    %v796 = vsel %vm261, %v795, %v794
    %v797 = vrot.slane %v776, 1
    %v798 = vsel %vm264, %v797, %v796
    %800 = vmatprep.subr.mxu0 %v140
    %801 = vmatpush1.msra.mxu0 %v139
    %802 = vmatprep.subr.mxu0 %v136
    %803 = vmatpush1.msra.mxu0 %v135
    %804 = vmatprep.subr.mxu0 %v132
    %805 = vmatpush1.msra.mxu0 %v131
    %806 = vmatprep.subr.mxu0 %v128
    %807 = vmatpush1.msra.mxu0 %v127
    %808 = vmatprep.subr.mxu0 %v124
    %809 = vmatpush1.msra.mxu0 %v123
    %810 = vmatprep.subr.mxu0 %v120
    %811 = vmatpush1.msra.mxu0 %v119
    %812 = vmatprep.subr.mxu0 %v116
    %813 = vmatpush1.msra.mxu0 %v115
    %814 = vmatprep.subr.mxu0 %v112
    %815 = vmatpush1.msra.mxu0 %v111
    %816 = vmatprep.subr.mxu0 %v108
    %817 = vmatpush1.msra.mxu0 %v107
    %818 = vmatprep.subr.mxu0 %v104
    %819 = vmatpush1.msra.mxu0 %v103
    %820 = vmatprep.subr.mxu0 %v100
    %821 = vmatpush1.msra.mxu0 %v99
    %822 = vmatprep.subr.mxu0 %v96
    %823 = vmatpush1.msra.mxu0 %v95
    %824 = vmatprep.subr.mxu0 %v92
    %825 = vmatpush1.msra.mxu0 %v91
    %826 = vmatprep.subr.mxu0 %v88
    %827 = vmatpush1.msra.mxu0 %v87
    %828 = vmatprep.subr.mxu0 %v84
    %829 = vmatpush1.msra.mxu0 %v83
    %830 = vmatprep.subr.mxu0 %v80
    %831 = vmatpush1.msra.mxu0 %v79
    %832 = vmatprep.subr.mxu0 0.0
    %833 = vmatpush2.msra.mxu0 0.0
    %834 = vmatprep.subr.mxu0 0.0
    %835 = vmatpush2.msra.mxu0 0.0
    %836 = vmatprep.subr.mxu0 0.0
    %837 = vmatpush2.msra.mxu0 0.0
    %838 = vmatprep.subr.mxu0 0.0
    %839 = vmatpush2.msra.mxu0 0.0
    %840 = vmatprep.subr.mxu0 0.0
    %841 = vmatpush2.msra.mxu0 0.0
    %842 = vmatprep.subr.mxu0 0.0
    %843 = vmatpush2.msra.mxu0 0.0
    %844 = vmatprep.subr.mxu0 0.0
    %845 = vmatpush2.msra.mxu0 0.0
    %846 = vmatprep.subr.mxu0 0.0
    %847 = vmatpush2.msra.mxu0 0.0
    %848 = vmatprep.subr.mxu0 0.0
    %849 = vmatpush2.msra.mxu0 0.0
    %850 = vmatprep.subr.mxu0 0.0
    %851 = vmatpush2.msra.mxu0 0.0
    %852 = vmatprep.subr.mxu0 0.0
    %853 = vmatpush2.msra.mxu0 0.0
    %854 = vmatprep.subr.mxu0 0.0
    %855 = vmatpush2.msra.mxu0 0.0
    %856 = vmatprep.subr.mxu0 0.0
    %857 = vmatpush2.msra.mxu0 0.0
    %858 = vmatprep.subr.mxu0 0.0
    %859 = vmatpush2.msra.mxu0 0.0
    %860 = vmatprep.subr.mxu0 0.0
    %861 = vmatpush2.msra.mxu0 0.0
    %862 = vmatprep.subr.mxu0 0.0
    %863 = vmatpush2.msra.mxu0 0.0
    %864 = vmatprep.mubr.f32.mxu0 0.0
    %865 = vmatmul.mubr.f32.gmra.mxu0 %v798
    %v866 = vpop.f32.mrf.mxu0
    %v867 = vadd.f32 %v220, %v866
    %v868 = vpop.f32.mrf.mxu0
    %v869 = vadd.f32 %v224, %v868
    %870 = vdwg.mxu0
    %871 = vmatprep.subr.mxu0 %v142
    %872 = vmatpush1.msra.mxu0 %v141
    %873 = vmatprep.subr.mxu0 %v138
    %874 = vmatpush1.msra.mxu0 %v137
    %875 = vmatprep.subr.mxu0 %v134
    %876 = vmatpush1.msra.mxu0 %v133
    %877 = vmatprep.subr.mxu0 %v130
    %878 = vmatpush1.msra.mxu0 %v129
    %879 = vmatprep.subr.mxu0 %v126
    %880 = vmatpush1.msra.mxu0 %v125
    %881 = vmatprep.subr.mxu0 %v122
    %882 = vmatpush1.msra.mxu0 %v121
    %883 = vmatprep.subr.mxu0 %v118
    %884 = vmatpush1.msra.mxu0 %v117
    %885 = vmatprep.subr.mxu0 %v114
    %886 = vmatpush1.msra.mxu0 %v113
    %887 = vmatprep.subr.mxu0 %v110
    %888 = vmatpush1.msra.mxu0 %v109
    %889 = vmatprep.subr.mxu0 %v106
    %890 = vmatpush1.msra.mxu0 %v105
    %891 = vmatprep.subr.mxu0 %v102
    %892 = vmatpush1.msra.mxu0 %v101
    %893 = vmatprep.subr.mxu0 %v98
    %894 = vmatpush1.msra.mxu0 %v97
    %895 = vmatprep.subr.mxu0 %v94
    %896 = vmatpush1.msra.mxu0 %v93
    %897 = vmatprep.subr.mxu0 %v90
    %898 = vmatpush1.msra.mxu0 %v89
    %899 = vmatprep.subr.mxu0 %v86
    %900 = vmatpush1.msra.mxu0 %v85
    %901 = vmatprep.subr.mxu0 %v82
    %902 = vmatpush1.msra.mxu0 %v81
    %903 = vmatprep.subr.mxu0 0.0
    %904 = vmatpush2.msra.mxu0 0.0
    %905 = vmatprep.subr.mxu0 0.0
    %906 = vmatpush2.msra.mxu0 0.0
    %907 = vmatprep.subr.mxu0 0.0
    %908 = vmatpush2.msra.mxu0 0.0
    %909 = vmatprep.subr.mxu0 0.0
    %910 = vmatpush2.msra.mxu0 0.0
    %911 = vmatprep.subr.mxu0 0.0
    %912 = vmatpush2.msra.mxu0 0.0
    %913 = vmatprep.subr.mxu0 0.0
    %914 = vmatpush2.msra.mxu0 0.0
    %915 = vmatprep.subr.mxu0 0.0
    %916 = vmatpush2.msra.mxu0 0.0
    %917 = vmatprep.subr.mxu0 0.0
    %918 = vmatpush2.msra.mxu0 0.0
    %919 = vmatprep.subr.mxu0 0.0
    %920 = vmatpush2.msra.mxu0 0.0
    %921 = vmatprep.subr.mxu0 0.0
    %922 = vmatpush2.msra.mxu0 0.0
    %923 = vmatprep.subr.mxu0 0.0
    %924 = vmatpush2.msra.mxu0 0.0
    %925 = vmatprep.subr.mxu0 0.0
    %926 = vmatpush2.msra.mxu0 0.0
    %927 = vmatprep.subr.mxu0 0.0
    %928 = vmatpush2.msra.mxu0 0.0
    %929 = vmatprep.subr.mxu0 0.0
    %930 = vmatpush2.msra.mxu0 0.0
    %931 = vmatprep.subr.mxu0 0.0
    %932 = vmatpush2.msra.mxu0 0.0
    %933 = vmatprep.subr.mxu0 0.0
    %934 = vmatpush2.msra.mxu0 0.0
    %935 = vmatprep.mubr.f32.mxu0 0.0
    %936 = vmatmul.mubr.f32.gmra.mxu0 %v798
    %v937 = vpop.f32.mrf.mxu0
    %v938 = vadd.f32 %v228, %v937
    %v939 = vpop.f32.mrf.mxu0
    %v940 = vadd.f32 %v232, %v939
    %941 = vdwg.mxu0
    %s942 = scalar_lea.vmem [#allocation2], 96
    %943 = vst [vmem:[%s942] sm:$0xff] %v867
    %944 = vst [vmem:[%s942 + $0x8] sm:$0xff] %v869
    %945 = vst [vmem:[%s942 + $0x10] sm:$0xff] %v938
    %946 = vst [vmem:[%s942 + $0x18] sm:$0xff] %v940
    %v947 = vld [vmem:[#allocation4 + $0x4] sm:$0x1]
    %v948 = vld [vmem:[#allocation4 + $0xc] sm:$0x1]
    %v949 = vld [vmem:[#allocation4 + $0x14] sm:$0x1]
    %v950 = vld [vmem:[#allocation4 + $0x1c] sm:$0x1]
    %v951 = vld [vmem:[#allocation4 + $0x24] sm:$0x1]
    %v952 = vld [vmem:[#allocation4 + $0x2c] sm:$0x1]
    %v953 = vld [vmem:[#allocation4 + $0x34] sm:$0x1]
    %v954 = vld [vmem:[#allocation4 + $0x3c] sm:$0x1]
    %v963 = vrot.slane %v948, 7
    %v964 = vsel %vm246, %v963, %v947
    %v965 = vrot.slane %v949, 6
    %v966 = vsel %vm249, %v965, %v964
    %v967 = vrot.slane %v950, 5
    %v968 = vsel %vm252, %v967, %v966
    %v969 = vrot.slane %v951, 4
    %v970 = vsel %vm255, %v969, %v968
    %v971 = vrot.slane %v952, 3
    %v972 = vsel %vm258, %v971, %v970
    %v973 = vrot.slane %v953, 2
    %v974 = vsel %vm261, %v973, %v972
    %v975 = vrot.slane %v954, 1
    %v976 = vsel %vm264, %v975, %v974
    %978 = vmatprep.subr.mxu0 %v140
    %979 = vmatpush1.msra.mxu0 %v139
    %980 = vmatprep.subr.mxu0 %v136
    %981 = vmatpush1.msra.mxu0 %v135
    %982 = vmatprep.subr.mxu0 %v132
    %983 = vmatpush1.msra.mxu0 %v131
    %984 = vmatprep.subr.mxu0 %v128
    %985 = vmatpush1.msra.mxu0 %v127
    %986 = vmatprep.subr.mxu0 %v124
    %987 = vmatpush1.msra.mxu0 %v123
    %988 = vmatprep.subr.mxu0 %v120
    %989 = vmatpush1.msra.mxu0 %v119
    %990 = vmatprep.subr.mxu0 %v116
    %991 = vmatpush1.msra.mxu0 %v115
    %992 = vmatprep.subr.mxu0 %v112
    %993 = vmatpush1.msra.mxu0 %v111
    %994 = vmatprep.subr.mxu0 %v108
    %995 = vmatpush1.msra.mxu0 %v107
    %996 = vmatprep.subr.mxu0 %v104
    %997 = vmatpush1.msra.mxu0 %v103
    %998 = vmatprep.subr.mxu0 %v100
    %999 = vmatpush1.msra.mxu0 %v99
    %1000 = vmatprep.subr.mxu0 %v96
    %1001 = vmatpush1.msra.mxu0 %v95
    %1002 = vmatprep.subr.mxu0 %v92
    %1003 = vmatpush1.msra.mxu0 %v91
    %1004 = vmatprep.subr.mxu0 %v88
    %1005 = vmatpush1.msra.mxu0 %v87
    %1006 = vmatprep.subr.mxu0 %v84
    %1007 = vmatpush1.msra.mxu0 %v83
    %1008 = vmatprep.subr.mxu0 %v80
    %1009 = vmatpush1.msra.mxu0 %v79
    %1010 = vmatprep.subr.mxu0 0.0
    %1011 = vmatpush2.msra.mxu0 0.0
    %1012 = vmatprep.subr.mxu0 0.0
    %1013 = vmatpush2.msra.mxu0 0.0
    %1014 = vmatprep.subr.mxu0 0.0
    %1015 = vmatpush2.msra.mxu0 0.0
    %1016 = vmatprep.subr.mxu0 0.0
    %1017 = vmatpush2.msra.mxu0 0.0
    %1018 = vmatprep.subr.mxu0 0.0
    %1019 = vmatpush2.msra.mxu0 0.0
    %1020 = vmatprep.subr.mxu0 0.0
    %1021 = vmatpush2.msra.mxu0 0.0
    %1022 = vmatprep.subr.mxu0 0.0
    %1023 = vmatpush2.msra.mxu0 0.0
    %1024 = vmatprep.subr.mxu0 0.0
    %1025 = vmatpush2.msra.mxu0 0.0
    %1026 = vmatprep.subr.mxu0 0.0
    %1027 = vmatpush2.msra.mxu0 0.0
    %1028 = vmatprep.subr.mxu0 0.0
    %1029 = vmatpush2.msra.mxu0 0.0
    %1030 = vmatprep.subr.mxu0 0.0
    %1031 = vmatpush2.msra.mxu0 0.0
    %1032 = vmatprep.subr.mxu0 0.0
    %1033 = vmatpush2.msra.mxu0 0.0
    %1034 = vmatprep.subr.mxu0 0.0
    %1035 = vmatpush2.msra.mxu0 0.0
    %1036 = vmatprep.subr.mxu0 0.0
    %1037 = vmatpush2.msra.mxu0 0.0
    %1038 = vmatprep.subr.mxu0 0.0
    %1039 = vmatpush2.msra.mxu0 0.0
    %1040 = vmatprep.subr.mxu0 0.0
    %1041 = vmatpush2.msra.mxu0 0.0
    %1042 = vmatprep.mubr.f32.mxu0 0.0
    %1043 = vmatmul.mubr.f32.gmra.mxu0 %v976
    %v1044 = vpop.f32.mrf.mxu0
    %v1045 = vadd.f32 %v220, %v1044
    %v1046 = vpop.f32.mrf.mxu0
    %v1047 = vadd.f32 %v224, %v1046
    %1048 = vdwg.mxu0
    %1049 = vmatprep.subr.mxu0 %v142
    %1050 = vmatpush1.msra.mxu0 %v141
    %1051 = vmatprep.subr.mxu0 %v138
    %1052 = vmatpush1.msra.mxu0 %v137
    %1053 = vmatprep.subr.mxu0 %v134
    %1054 = vmatpush1.msra.mxu0 %v133
    %1055 = vmatprep.subr.mxu0 %v130
    %1056 = vmatpush1.msra.mxu0 %v129
    %1057 = vmatprep.subr.mxu0 %v126
    %1058 = vmatpush1.msra.mxu0 %v125
    %1059 = vmatprep.subr.mxu0 %v122
    %1060 = vmatpush1.msra.mxu0 %v121
    %1061 = vmatprep.subr.mxu0 %v118
    %1062 = vmatpush1.msra.mxu0 %v117
    %1063 = vmatprep.subr.mxu0 %v114
    %1064 = vmatpush1.msra.mxu0 %v113
    %1065 = vmatprep.subr.mxu0 %v110
    %1066 = vmatpush1.msra.mxu0 %v109
    %1067 = vmatprep.subr.mxu0 %v106
    %1068 = vmatpush1.msra.mxu0 %v105
    %1069 = vmatprep.subr.mxu0 %v102
    %1070 = vmatpush1.msra.mxu0 %v101
    %1071 = vmatprep.subr.mxu0 %v98
    %1072 = vmatpush1.msra.mxu0 %v97
    %1073 = vmatprep.subr.mxu0 %v94
    %1074 = vmatpush1.msra.mxu0 %v93
    %1075 = vmatprep.subr.mxu0 %v90
    %1076 = vmatpush1.msra.mxu0 %v89
    %1077 = vmatprep.subr.mxu0 %v86
    %1078 = vmatpush1.msra.mxu0 %v85
    %1079 = vmatprep.subr.mxu0 %v82
    %1080 = vmatpush1.msra.mxu0 %v81
    %1081 = vmatprep.subr.mxu0 0.0
    %1082 = vmatpush2.msra.mxu0 0.0
    %1083 = vmatprep.subr.mxu0 0.0
    %1084 = vmatpush2.msra.mxu0 0.0
    %1085 = vmatprep.subr.mxu0 0.0
    %1086 = vmatpush2.msra.mxu0 0.0
    %1087 = vmatprep.subr.mxu0 0.0
    %1088 = vmatpush2.msra.mxu0 0.0
    %1089 = vmatprep.subr.mxu0 0.0
    %1090 = vmatpush2.msra.mxu0 0.0
    %1091 = vmatprep.subr.mxu0 0.0
    %1092 = vmatpush2.msra.mxu0 0.0
    %1093 = vmatprep.subr.mxu0 0.0
    %1094 = vmatpush2.msra.mxu0 0.0
    %1095 = vmatprep.subr.mxu0 0.0
    %1096 = vmatpush2.msra.mxu0 0.0
    %1097 = vmatprep.subr.mxu0 0.0
    %1098 = vmatpush2.msra.mxu0 0.0
    %1099 = vmatprep.subr.mxu0 0.0
    %1100 = vmatpush2.msra.mxu0 0.0
    %1101 = vmatprep.subr.mxu0 0.0
    %1102 = vmatpush2.msra.mxu0 0.0
    %1103 = vmatprep.subr.mxu0 0.0
    %1104 = vmatpush2.msra.mxu0 0.0
    %1105 = vmatprep.subr.mxu0 0.0
    %1106 = vmatpush2.msra.mxu0 0.0
    %1107 = vmatprep.subr.mxu0 0.0
    %1108 = vmatpush2.msra.mxu0 0.0
    %1109 = vmatprep.subr.mxu0 0.0
    %1110 = vmatpush2.msra.mxu0 0.0
    %1111 = vmatprep.subr.mxu0 0.0
    %1112 = vmatpush2.msra.mxu0 0.0
    %1113 = vmatprep.mubr.f32.mxu0 0.0
    %1114 = vmatmul.mubr.f32.gmra.mxu0 %v976
    %v1115 = vpop.f32.mrf.mxu0
    %v1116 = vadd.f32 %v228, %v1115
    %v1117 = vpop.f32.mrf.mxu0
    %v1118 = vadd.f32 %v232, %v1117
    %1119 = vdwg.mxu0
    %s1120 = scalar_lea.vmem [#allocation2], 128
    %1121 = vst [vmem:[%s1120] sm:$0xff] %v1045
    %1122 = vst [vmem:[%s1120 + $0x8] sm:$0xff] %v1047
    %1123 = vst [vmem:[%s1120 + $0x10] sm:$0xff] %v1116
    %1124 = vst [vmem:[%s1120 + $0x18] sm:$0xff] %v1118
    %v1125 = vld [vmem:[#allocation4 + $0x5] sm:$0x1]
    %v1126 = vld [vmem:[#allocation4 + $0xd] sm:$0x1]
    %v1127 = vld [vmem:[#allocation4 + $0x15] sm:$0x1]
    %v1128 = vld [vmem:[#allocation4 + $0x1d] sm:$0x1]
    %v1129 = vld [vmem:[#allocation4 + $0x25] sm:$0x1]
    %v1130 = vld [vmem:[#allocation4 + $0x2d] sm:$0x1]
    %v1131 = vld [vmem:[#allocation4 + $0x35] sm:$0x1]
    %v1132 = vld [vmem:[#allocation4 + $0x3d] sm:$0x1]
    %v1141 = vrot.slane %v1126, 7
    %v1142 = vsel %vm246, %v1141, %v1125
    %v1143 = vrot.slane %v1127, 6
    %v1144 = vsel %vm249, %v1143, %v1142
    %v1145 = vrot.slane %v1128, 5
    %v1146 = vsel %vm252, %v1145, %v1144
    %v1147 = vrot.slane %v1129, 4
    %v1148 = vsel %vm255, %v1147, %v1146
    %v1149 = vrot.slane %v1130, 3
    %v1150 = vsel %vm258, %v1149, %v1148
    %v1151 = vrot.slane %v1131, 2
    %v1152 = vsel %vm261, %v1151, %v1150
    %v1153 = vrot.slane %v1132, 1
    %v1154 = vsel %vm264, %v1153, %v1152
    %1156 = vmatprep.subr.mxu0 %v140
    %1157 = vmatpush1.msra.mxu0 %v139
    %1158 = vmatprep.subr.mxu0 %v136
    %1159 = vmatpush1.msra.mxu0 %v135
    %1160 = vmatprep.subr.mxu0 %v132
    %1161 = vmatpush1.msra.mxu0 %v131
    %1162 = vmatprep.subr.mxu0 %v128
    %1163 = vmatpush1.msra.mxu0 %v127
    %1164 = vmatprep.subr.mxu0 %v124
    %1165 = vmatpush1.msra.mxu0 %v123
    %1166 = vmatprep.subr.mxu0 %v120
    %1167 = vmatpush1.msra.mxu0 %v119
    %1168 = vmatprep.subr.mxu0 %v116
    %1169 = vmatpush1.msra.mxu0 %v115
    %1170 = vmatprep.subr.mxu0 %v112
    %1171 = vmatpush1.msra.mxu0 %v111
    %1172 = vmatprep.subr.mxu0 %v108
    %1173 = vmatpush1.msra.mxu0 %v107
    %1174 = vmatprep.subr.mxu0 %v104
    %1175 = vmatpush1.msra.mxu0 %v103
    %1176 = vmatprep.subr.mxu0 %v100
    %1177 = vmatpush1.msra.mxu0 %v99
    %1178 = vmatprep.subr.mxu0 %v96
    %1179 = vmatpush1.msra.mxu0 %v95
    %1180 = vmatprep.subr.mxu0 %v92
    %1181 = vmatpush1.msra.mxu0 %v91
    %1182 = vmatprep.subr.mxu0 %v88
    %1183 = vmatpush1.msra.mxu0 %v87
    %1184 = vmatprep.subr.mxu0 %v84
    %1185 = vmatpush1.msra.mxu0 %v83
    %1186 = vmatprep.subr.mxu0 %v80
    %1187 = vmatpush1.msra.mxu0 %v79
    %1188 = vmatprep.subr.mxu0 0.0
    %1189 = vmatpush2.msra.mxu0 0.0
    %1190 = vmatprep.subr.mxu0 0.0
    %1191 = vmatpush2.msra.mxu0 0.0
    %1192 = vmatprep.subr.mxu0 0.0
    %1193 = vmatpush2.msra.mxu0 0.0
    %1194 = vmatprep.subr.mxu0 0.0
    %1195 = vmatpush2.msra.mxu0 0.0
    %1196 = vmatprep.subr.mxu0 0.0
    %1197 = vmatpush2.msra.mxu0 0.0
    %1198 = vmatprep.subr.mxu0 0.0
    %1199 = vmatpush2.msra.mxu0 0.0
    %1200 = vmatprep.subr.mxu0 0.0
    %1201 = vmatpush2.msra.mxu0 0.0
    %1202 = vmatprep.subr.mxu0 0.0
    %1203 = vmatpush2.msra.mxu0 0.0
    %1204 = vmatprep.subr.mxu0 0.0
    %1205 = vmatpush2.msra.mxu0 0.0
    %1206 = vmatprep.subr.mxu0 0.0
    %1207 = vmatpush2.msra.mxu0 0.0
    %1208 = vmatprep.subr.mxu0 0.0
    %1209 = vmatpush2.msra.mxu0 0.0
    %1210 = vmatprep.subr.mxu0 0.0
    %1211 = vmatpush2.msra.mxu0 0.0
    %1212 = vmatprep.subr.mxu0 0.0
    %1213 = vmatpush2.msra.mxu0 0.0
    %1214 = vmatprep.subr.mxu0 0.0
    %1215 = vmatpush2.msra.mxu0 0.0
    %1216 = vmatprep.subr.mxu0 0.0
    %1217 = vmatpush2.msra.mxu0 0.0
    %1218 = vmatprep.subr.mxu0 0.0
    %1219 = vmatpush2.msra.mxu0 0.0
    %1220 = vmatprep.mubr.f32.mxu0 0.0
    %1221 = vmatmul.mubr.f32.gmra.mxu0 %v1154
    %v1222 = vpop.f32.mrf.mxu0
    %v1223 = vadd.f32 %v220, %v1222
    %v1224 = vpop.f32.mrf.mxu0
    %v1225 = vadd.f32 %v224, %v1224
    %1226 = vdwg.mxu0
    %1227 = vmatprep.subr.mxu0 %v142
    %1228 = vmatpush1.msra.mxu0 %v141
    %1229 = vmatprep.subr.mxu0 %v138
    %1230 = vmatpush1.msra.mxu0 %v137
    %1231 = vmatprep.subr.mxu0 %v134
    %1232 = vmatpush1.msra.mxu0 %v133
    %1233 = vmatprep.subr.mxu0 %v130
    %1234 = vmatpush1.msra.mxu0 %v129
    %1235 = vmatprep.subr.mxu0 %v126
    %1236 = vmatpush1.msra.mxu0 %v125
    %1237 = vmatprep.subr.mxu0 %v122
    %1238 = vmatpush1.msra.mxu0 %v121
    %1239 = vmatprep.subr.mxu0 %v118
    %1240 = vmatpush1.msra.mxu0 %v117
    %1241 = vmatprep.subr.mxu0 %v114
    %1242 = vmatpush1.msra.mxu0 %v113
    %1243 = vmatprep.subr.mxu0 %v110
    %1244 = vmatpush1.msra.mxu0 %v109
    %1245 = vmatprep.subr.mxu0 %v106
    %1246 = vmatpush1.msra.mxu0 %v105
    %1247 = vmatprep.subr.mxu0 %v102
    %1248 = vmatpush1.msra.mxu0 %v101
    %1249 = vmatprep.subr.mxu0 %v98
    %1250 = vmatpush1.msra.mxu0 %v97
    %1251 = vmatprep.subr.mxu0 %v94
    %1252 = vmatpush1.msra.mxu0 %v93
    %1253 = vmatprep.subr.mxu0 %v90
    %1254 = vmatpush1.msra.mxu0 %v89
    %1255 = vmatprep.subr.mxu0 %v86
    %1256 = vmatpush1.msra.mxu0 %v85
    %1257 = vmatprep.subr.mxu0 %v82
    %1258 = vmatpush1.msra.mxu0 %v81
    %1259 = vmatprep.subr.mxu0 0.0
    %1260 = vmatpush2.msra.mxu0 0.0
    %1261 = vmatprep.subr.mxu0 0.0
    %1262 = vmatpush2.msra.mxu0 0.0
    %1263 = vmatprep.subr.mxu0 0.0
    %1264 = vmatpush2.msra.mxu0 0.0
    %1265 = vmatprep.subr.mxu0 0.0
    %1266 = vmatpush2.msra.mxu0 0.0
    %1267 = vmatprep.subr.mxu0 0.0
    %1268 = vmatpush2.msra.mxu0 0.0
    %1269 = vmatprep.subr.mxu0 0.0
    %1270 = vmatpush2.msra.mxu0 0.0
    %1271 = vmatprep.subr.mxu0 0.0
    %1272 = vmatpush2.msra.mxu0 0.0
    %1273 = vmatprep.subr.mxu0 0.0
    %1274 = vmatpush2.msra.mxu0 0.0
    %1275 = vmatprep.subr.mxu0 0.0
    %1276 = vmatpush2.msra.mxu0 0.0
    %1277 = vmatprep.subr.mxu0 0.0
    %1278 = vmatpush2.msra.mxu0 0.0
    %1279 = vmatprep.subr.mxu0 0.0
    %1280 = vmatpush2.msra.mxu0 0.0
    %1281 = vmatprep.subr.mxu0 0.0
    %1282 = vmatpush2.msra.mxu0 0.0
    %1283 = vmatprep.subr.mxu0 0.0
    %1284 = vmatpush2.msra.mxu0 0.0
    %1285 = vmatprep.subr.mxu0 0.0
    %1286 = vmatpush2.msra.mxu0 0.0
    %1287 = vmatprep.subr.mxu0 0.0
    %1288 = vmatpush2.msra.mxu0 0.0
    %1289 = vmatprep.subr.mxu0 0.0
    %1290 = vmatpush2.msra.mxu0 0.0
    %1291 = vmatprep.mubr.f32.mxu0 0.0
    %1292 = vmatmul.mubr.f32.gmra.mxu0 %v1154
    %v1293 = vpop.f32.mrf.mxu0
    %v1294 = vadd.f32 %v228, %v1293
    %v1295 = vpop.f32.mrf.mxu0
    %v1296 = vadd.f32 %v232, %v1295
    %1297 = vdwg.mxu0
    %s1298 = scalar_lea.vmem [#allocation2], 160
    %1299 = vst [vmem:[%s1298] sm:$0xff] %v1223
    %1300 = vst [vmem:[%s1298 + $0x8] sm:$0xff] %v1225
    %1301 = vst [vmem:[%s1298 + $0x10] sm:$0xff] %v1294
    %1302 = vst [vmem:[%s1298 + $0x18] sm:$0xff] %v1296
    %v1303 = vld [vmem:[#allocation4 + $0x6] sm:$0x1]
    %v1304 = vld [vmem:[#allocation4 + $0xe] sm:$0x1]
    %v1305 = vld [vmem:[#allocation4 + $0x16] sm:$0x1]
    %v1306 = vld [vmem:[#allocation4 + $0x1e] sm:$0x1]
    %v1307 = vld [vmem:[#allocation4 + $0x26] sm:$0x1]
    %v1308 = vld [vmem:[#allocation4 + $0x2e] sm:$0x1]
    %v1309 = vld [vmem:[#allocation4 + $0x36] sm:$0x1]
    %v1310 = vld [vmem:[#allocation4 + $0x3e] sm:$0x1]
    %v1319 = vrot.slane %v1304, 7
    %v1320 = vsel %vm246, %v1319, %v1303
    %v1321 = vrot.slane %v1305, 6
    %v1322 = vsel %vm249, %v1321, %v1320
    %v1323 = vrot.slane %v1306, 5
    %v1324 = vsel %vm252, %v1323, %v1322
    %v1325 = vrot.slane %v1307, 4
    %v1326 = vsel %vm255, %v1325, %v1324
    %v1327 = vrot.slane %v1308, 3
    %v1328 = vsel %vm258, %v1327, %v1326
    %v1329 = vrot.slane %v1309, 2
    %v1330 = vsel %vm261, %v1329, %v1328
    %v1331 = vrot.slane %v1310, 1
    %v1332 = vsel %vm264, %v1331, %v1330
    %1334 = vmatprep.subr.mxu0 %v140
    %1335 = vmatpush1.msra.mxu0 %v139
    %1336 = vmatprep.subr.mxu0 %v136
    %1337 = vmatpush1.msra.mxu0 %v135
    %1338 = vmatprep.subr.mxu0 %v132
    %1339 = vmatpush1.msra.mxu0 %v131
    %1340 = vmatprep.subr.mxu0 %v128
    %1341 = vmatpush1.msra.mxu0 %v127
    %1342 = vmatprep.subr.mxu0 %v124
    %1343 = vmatpush1.msra.mxu0 %v123
    %1344 = vmatprep.subr.mxu0 %v120
    %1345 = vmatpush1.msra.mxu0 %v119
    %1346 = vmatprep.subr.mxu0 %v116
    %1347 = vmatpush1.msra.mxu0 %v115
    %1348 = vmatprep.subr.mxu0 %v112
    %1349 = vmatpush1.msra.mxu0 %v111
    %1350 = vmatprep.subr.mxu0 %v108
    %1351 = vmatpush1.msra.mxu0 %v107
    %1352 = vmatprep.subr.mxu0 %v104
    %1353 = vmatpush1.msra.mxu0 %v103
    %1354 = vmatprep.subr.mxu0 %v100
    %1355 = vmatpush1.msra.mxu0 %v99
    %1356 = vmatprep.subr.mxu0 %v96
    %1357 = vmatpush1.msra.mxu0 %v95
    %1358 = vmatprep.subr.mxu0 %v92
    %1359 = vmatpush1.msra.mxu0 %v91
    %1360 = vmatprep.subr.mxu0 %v88
    %1361 = vmatpush1.msra.mxu0 %v87
    %1362 = vmatprep.subr.mxu0 %v84
    %1363 = vmatpush1.msra.mxu0 %v83
    %1364 = vmatprep.subr.mxu0 %v80
    %1365 = vmatpush1.msra.mxu0 %v79
    %1366 = vmatprep.subr.mxu0 0.0
    %1367 = vmatpush2.msra.mxu0 0.0
    %1368 = vmatprep.subr.mxu0 0.0
    %1369 = vmatpush2.msra.mxu0 0.0
    %1370 = vmatprep.subr.mxu0 0.0
    %1371 = vmatpush2.msra.mxu0 0.0
    %1372 = vmatprep.subr.mxu0 0.0
    %1373 = vmatpush2.msra.mxu0 0.0
    %1374 = vmatprep.subr.mxu0 0.0
    %1375 = vmatpush2.msra.mxu0 0.0
    %1376 = vmatprep.subr.mxu0 0.0
    %1377 = vmatpush2.msra.mxu0 0.0
    %1378 = vmatprep.subr.mxu0 0.0
    %1379 = vmatpush2.msra.mxu0 0.0
    %1380 = vmatprep.subr.mxu0 0.0
    %1381 = vmatpush2.msra.mxu0 0.0
    %1382 = vmatprep.subr.mxu0 0.0
    %1383 = vmatpush2.msra.mxu0 0.0
    %1384 = vmatprep.subr.mxu0 0.0
    %1385 = vmatpush2.msra.mxu0 0.0
    %1386 = vmatprep.subr.mxu0 0.0
    %1387 = vmatpush2.msra.mxu0 0.0
    %1388 = vmatprep.subr.mxu0 0.0
    %1389 = vmatpush2.msra.mxu0 0.0
    %1390 = vmatprep.subr.mxu0 0.0
    %1391 = vmatpush2.msra.mxu0 0.0
    %1392 = vmatprep.subr.mxu0 0.0
    %1393 = vmatpush2.msra.mxu0 0.0
    %1394 = vmatprep.subr.mxu0 0.0
    %1395 = vmatpush2.msra.mxu0 0.0
    %1396 = vmatprep.subr.mxu0 0.0
    %1397 = vmatpush2.msra.mxu0 0.0
    %1398 = vmatprep.mubr.f32.mxu0 0.0
    %1399 = vmatmul.mubr.f32.gmra.mxu0 %v1332
    %v1400 = vpop.f32.mrf.mxu0
    %v1401 = vadd.f32 %v220, %v1400
    %v1402 = vpop.f32.mrf.mxu0
    %v1403 = vadd.f32 %v224, %v1402
    %1404 = vdwg.mxu0
    %1405 = vmatprep.subr.mxu0 %v142
    %1406 = vmatpush1.msra.mxu0 %v141
    %1407 = vmatprep.subr.mxu0 %v138
    %1408 = vmatpush1.msra.mxu0 %v137
    %1409 = vmatprep.subr.mxu0 %v134
    %1410 = vmatpush1.msra.mxu0 %v133
    %1411 = vmatprep.subr.mxu0 %v130
    %1412 = vmatpush1.msra.mxu0 %v129
    %1413 = vmatprep.subr.mxu0 %v126
    %1414 = vmatpush1.msra.mxu0 %v125
    %1415 = vmatprep.subr.mxu0 %v122
    %1416 = vmatpush1.msra.mxu0 %v121
    %1417 = vmatprep.subr.mxu0 %v118
    %1418 = vmatpush1.msra.mxu0 %v117
    %1419 = vmatprep.subr.mxu0 %v114
    %1420 = vmatpush1.msra.mxu0 %v113
    %1421 = vmatprep.subr.mxu0 %v110
    %1422 = vmatpush1.msra.mxu0 %v109
    %1423 = vmatprep.subr.mxu0 %v106
    %1424 = vmatpush1.msra.mxu0 %v105
    %1425 = vmatprep.subr.mxu0 %v102
    %1426 = vmatpush1.msra.mxu0 %v101
    %1427 = vmatprep.subr.mxu0 %v98
    %1428 = vmatpush1.msra.mxu0 %v97
    %1429 = vmatprep.subr.mxu0 %v94
    %1430 = vmatpush1.msra.mxu0 %v93
    %1431 = vmatprep.subr.mxu0 %v90
    %1432 = vmatpush1.msra.mxu0 %v89
    %1433 = vmatprep.subr.mxu0 %v86
    %1434 = vmatpush1.msra.mxu0 %v85
    %1435 = vmatprep.subr.mxu0 %v82
    %1436 = vmatpush1.msra.mxu0 %v81
    %1437 = vmatprep.subr.mxu0 0.0
    %1438 = vmatpush2.msra.mxu0 0.0
    %1439 = vmatprep.subr.mxu0 0.0
    %1440 = vmatpush2.msra.mxu0 0.0
    %1441 = vmatprep.subr.mxu0 0.0
    %1442 = vmatpush2.msra.mxu0 0.0
    %1443 = vmatprep.subr.mxu0 0.0
    %1444 = vmatpush2.msra.mxu0 0.0
    %1445 = vmatprep.subr.mxu0 0.0
    %1446 = vmatpush2.msra.mxu0 0.0
    %1447 = vmatprep.subr.mxu0 0.0
    %1448 = vmatpush2.msra.mxu0 0.0
    %1449 = vmatprep.subr.mxu0 0.0
    %1450 = vmatpush2.msra.mxu0 0.0
    %1451 = vmatprep.subr.mxu0 0.0
    %1452 = vmatpush2.msra.mxu0 0.0
    %1453 = vmatprep.subr.mxu0 0.0
    %1454 = vmatpush2.msra.mxu0 0.0
    %1455 = vmatprep.subr.mxu0 0.0
    %1456 = vmatpush2.msra.mxu0 0.0
    %1457 = vmatprep.subr.mxu0 0.0
    %1458 = vmatpush2.msra.mxu0 0.0
    %1459 = vmatprep.subr.mxu0 0.0
    %1460 = vmatpush2.msra.mxu0 0.0
    %1461 = vmatprep.subr.mxu0 0.0
    %1462 = vmatpush2.msra.mxu0 0.0
    %1463 = vmatprep.subr.mxu0 0.0
    %1464 = vmatpush2.msra.mxu0 0.0
    %1465 = vmatprep.subr.mxu0 0.0
    %1466 = vmatpush2.msra.mxu0 0.0
    %1467 = vmatprep.subr.mxu0 0.0
    %1468 = vmatpush2.msra.mxu0 0.0
    %1469 = vmatprep.mubr.f32.mxu0 0.0
    %1470 = vmatmul.mubr.f32.gmra.mxu0 %v1332
    %v1471 = vpop.f32.mrf.mxu0
    %v1472 = vadd.f32 %v228, %v1471
    %v1473 = vpop.f32.mrf.mxu0
    %v1474 = vadd.f32 %v232, %v1473
    %1475 = vdwg.mxu0
    %s1476 = scalar_lea.vmem [#allocation2], 192
    %1477 = vst [vmem:[%s1476] sm:$0xff] %v1401
    %1478 = vst [vmem:[%s1476 + $0x8] sm:$0xff] %v1403
    %1479 = vst [vmem:[%s1476 + $0x10] sm:$0xff] %v1472
    %1480 = vst [vmem:[%s1476 + $0x18] sm:$0xff] %v1474
    %v1481 = vld [vmem:[#allocation4 + $0x7] sm:$0x1]
    %v1482 = vld [vmem:[#allocation4 + $0xf] sm:$0x1]
    %v1483 = vld [vmem:[#allocation4 + $0x17] sm:$0x1]
    %v1484 = vld [vmem:[#allocation4 + $0x1f] sm:$0x1]
    %v1485 = vld [vmem:[#allocation4 + $0x27] sm:$0x1]
    %v1486 = vld [vmem:[#allocation4 + $0x2f] sm:$0x1]
    %v1487 = vld [vmem:[#allocation4 + $0x37] sm:$0x1]
    %v1488 = vld [vmem:[#allocation4 + $0x3f] sm:$0x1]
    %v1497 = vrot.slane %v1482, 7
    %v1498 = vsel %vm246, %v1497, %v1481
    %v1499 = vrot.slane %v1483, 6
    %v1500 = vsel %vm249, %v1499, %v1498
    %v1501 = vrot.slane %v1484, 5
    %v1502 = vsel %vm252, %v1501, %v1500
    %v1503 = vrot.slane %v1485, 4
    %v1504 = vsel %vm255, %v1503, %v1502
    %v1505 = vrot.slane %v1486, 3
    %v1506 = vsel %vm258, %v1505, %v1504
    %v1507 = vrot.slane %v1487, 2
    %v1508 = vsel %vm261, %v1507, %v1506
    %v1509 = vrot.slane %v1488, 1
    %v1510 = vsel %vm264, %v1509, %v1508
    %1512 = vmatprep.subr.mxu0 %v140
    %1513 = vmatpush1.msra.mxu0 %v139
    %1514 = vmatprep.subr.mxu0 %v136
    %1515 = vmatpush1.msra.mxu0 %v135
    %1516 = vmatprep.subr.mxu0 %v132
    %1517 = vmatpush1.msra.mxu0 %v131
    %1518 = vmatprep.subr.mxu0 %v128
    %1519 = vmatpush1.msra.mxu0 %v127
    %1520 = vmatprep.subr.mxu0 %v124
    %1521 = vmatpush1.msra.mxu0 %v123
    %1522 = vmatprep.subr.mxu0 %v120
    %1523 = vmatpush1.msra.mxu0 %v119
    %1524 = vmatprep.subr.mxu0 %v116
    %1525 = vmatpush1.msra.mxu0 %v115
    %1526 = vmatprep.subr.mxu0 %v112
    %1527 = vmatpush1.msra.mxu0 %v111
    %1528 = vmatprep.subr.mxu0 %v108
    %1529 = vmatpush1.msra.mxu0 %v107
    %1530 = vmatprep.subr.mxu0 %v104
    %1531 = vmatpush1.msra.mxu0 %v103
    %1532 = vmatprep.subr.mxu0 %v100
    %1533 = vmatpush1.msra.mxu0 %v99
    %1534 = vmatprep.subr.mxu0 %v96
    %1535 = vmatpush1.msra.mxu0 %v95
    %1536 = vmatprep.subr.mxu0 %v92
    %1537 = vmatpush1.msra.mxu0 %v91
    %1538 = vmatprep.subr.mxu0 %v88
    %1539 = vmatpush1.msra.mxu0 %v87
    %1540 = vmatprep.subr.mxu0 %v84
    %1541 = vmatpush1.msra.mxu0 %v83
    %1542 = vmatprep.subr.mxu0 %v80
    %1543 = vmatpush1.msra.mxu0 %v79
    %1544 = vmatprep.subr.mxu0 0.0
    %1545 = vmatpush2.msra.mxu0 0.0
    %1546 = vmatprep.subr.mxu0 0.0
    %1547 = vmatpush2.msra.mxu0 0.0
    %1548 = vmatprep.subr.mxu0 0.0
    %1549 = vmatpush2.msra.mxu0 0.0
    %1550 = vmatprep.subr.mxu0 0.0
    %1551 = vmatpush2.msra.mxu0 0.0
    %1552 = vmatprep.subr.mxu0 0.0
    %1553 = vmatpush2.msra.mxu0 0.0
    %1554 = vmatprep.subr.mxu0 0.0
    %1555 = vmatpush2.msra.mxu0 0.0
    %1556 = vmatprep.subr.mxu0 0.0
    %1557 = vmatpush2.msra.mxu0 0.0
    %1558 = vmatprep.subr.mxu0 0.0
    %1559 = vmatpush2.msra.mxu0 0.0
    %1560 = vmatprep.subr.mxu0 0.0
    %1561 = vmatpush2.msra.mxu0 0.0
    %1562 = vmatprep.subr.mxu0 0.0
    %1563 = vmatpush2.msra.mxu0 0.0
    %1564 = vmatprep.subr.mxu0 0.0
    %1565 = vmatpush2.msra.mxu0 0.0
    %1566 = vmatprep.subr.mxu0 0.0
    %1567 = vmatpush2.msra.mxu0 0.0
    %1568 = vmatprep.subr.mxu0 0.0
    %1569 = vmatpush2.msra.mxu0 0.0
    %1570 = vmatprep.subr.mxu0 0.0
    %1571 = vmatpush2.msra.mxu0 0.0
    %1572 = vmatprep.subr.mxu0 0.0
    %1573 = vmatpush2.msra.mxu0 0.0
    %1574 = vmatprep.subr.mxu0 0.0
    %1575 = vmatpush2.msra.mxu0 0.0
    %1576 = vmatprep.mubr.f32.mxu0 0.0
    %1577 = vmatmul.mubr.f32.gmra.mxu0 %v1510
    %v1578 = vpop.f32.mrf.mxu0
    %v1579 = vadd.f32 %v220, %v1578
    %v1580 = vpop.f32.mrf.mxu0
    %v1581 = vadd.f32 %v224, %v1580
    %1582 = vdwg.mxu0
    %1583 = vmatprep.subr.mxu0 %v142
    %1584 = vmatpush1.msra.mxu0 %v141
    %1585 = vmatprep.subr.mxu0 %v138
    %1586 = vmatpush1.msra.mxu0 %v137
    %1587 = vmatprep.subr.mxu0 %v134
    %1588 = vmatpush1.msra.mxu0 %v133
    %1589 = vmatprep.subr.mxu0 %v130
    %1590 = vmatpush1.msra.mxu0 %v129
    %1591 = vmatprep.subr.mxu0 %v126
    %1592 = vmatpush1.msra.mxu0 %v125
    %1593 = vmatprep.subr.mxu0 %v122
    %1594 = vmatpush1.msra.mxu0 %v121
    %1595 = vmatprep.subr.mxu0 %v118
    %1596 = vmatpush1.msra.mxu0 %v117
    %1597 = vmatprep.subr.mxu0 %v114
    %1598 = vmatpush1.msra.mxu0 %v113
    %1599 = vmatprep.subr.mxu0 %v110
    %1600 = vmatpush1.msra.mxu0 %v109
    %1601 = vmatprep.subr.mxu0 %v106
    %1602 = vmatpush1.msra.mxu0 %v105
    %1603 = vmatprep.subr.mxu0 %v102
    %1604 = vmatpush1.msra.mxu0 %v101
    %1605 = vmatprep.subr.mxu0 %v98
    %1606 = vmatpush1.msra.mxu0 %v97
    %1607 = vmatprep.subr.mxu0 %v94
    %1608 = vmatpush1.msra.mxu0 %v93
    %1609 = vmatprep.subr.mxu0 %v90
    %1610 = vmatpush1.msra.mxu0 %v89
    %1611 = vmatprep.subr.mxu0 %v86
    %1612 = vmatpush1.msra.mxu0 %v85
    %1613 = vmatprep.subr.mxu0 %v82
    %1614 = vmatpush1.msra.mxu0 %v81
    %1615 = vmatprep.subr.mxu0 0.0
    %1616 = vmatpush2.msra.mxu0 0.0
    %1617 = vmatprep.subr.mxu0 0.0
    %1618 = vmatpush2.msra.mxu0 0.0
    %1619 = vmatprep.subr.mxu0 0.0
    %1620 = vmatpush2.msra.mxu0 0.0
    %1621 = vmatprep.subr.mxu0 0.0
    %1622 = vmatpush2.msra.mxu0 0.0
    %1623 = vmatprep.subr.mxu0 0.0
    %1624 = vmatpush2.msra.mxu0 0.0
    %1625 = vmatprep.subr.mxu0 0.0
    %1626 = vmatpush2.msra.mxu0 0.0
    %1627 = vmatprep.subr.mxu0 0.0
    %1628 = vmatpush2.msra.mxu0 0.0
    %1629 = vmatprep.subr.mxu0 0.0
    %1630 = vmatpush2.msra.mxu0 0.0
    %1631 = vmatprep.subr.mxu0 0.0
    %1632 = vmatpush2.msra.mxu0 0.0
    %1633 = vmatprep.subr.mxu0 0.0
    %1634 = vmatpush2.msra.mxu0 0.0
    %1635 = vmatprep.subr.mxu0 0.0
    %1636 = vmatpush2.msra.mxu0 0.0
    %1637 = vmatprep.subr.mxu0 0.0
    %1638 = vmatpush2.msra.mxu0 0.0
    %1639 = vmatprep.subr.mxu0 0.0
    %1640 = vmatpush2.msra.mxu0 0.0
    %1641 = vmatprep.subr.mxu0 0.0
    %1642 = vmatpush2.msra.mxu0 0.0
    %1643 = vmatprep.subr.mxu0 0.0
    %1644 = vmatpush2.msra.mxu0 0.0
    %1645 = vmatprep.subr.mxu0 0.0
    %1646 = vmatpush2.msra.mxu0 0.0
    %1647 = vmatprep.mubr.f32.mxu0 0.0
    %1648 = vmatmul.mubr.f32.gmra.mxu0 %v1510
    %v1649 = vpop.f32.mrf.mxu0
    %v1650 = vadd.f32 %v228, %v1649
    %v1651 = vpop.f32.mrf.mxu0
    %v1652 = vadd.f32 %v232, %v1651
    %1653 = vdwg.mxu0
    %s1654 = scalar_lea.vmem [#allocation2], 224
    %1655 = vst [vmem:[%s1654] sm:$0xff] %v1579
    %1656 = vst [vmem:[%s1654 + $0x8] sm:$0xff] %v1581
    %1657 = vst [vmem:[%s1654 + $0x10] sm:$0xff] %v1650
    %1658 = vst [vmem:[%s1654 + $0x18] sm:$0xff] %v1652
    %v1659 = vld [vmem:[#allocation2] sm:$0xff]
    %v1660 = vld [vmem:[#allocation2 + $0x8] sm:$0xff]
    %v1661 = vld [vmem:[#allocation2 + $0x10] sm:$0xff]
    %v1662 = vld [vmem:[#allocation2 + $0x18] sm:$0xff]
    %1663 = vmatprep.subr.mxu0 %v204
    %1664 = vmatpush1.msra.mxu0 %v203
    %1665 = vmatprep.subr.mxu0 %v200
    %1666 = vmatpush1.msra.mxu0 %v199
    %1667 = vmatprep.subr.mxu0 %v196
    %1668 = vmatpush1.msra.mxu0 %v195
    %1669 = vmatprep.subr.mxu0 %v192
    %1670 = vmatpush1.msra.mxu0 %v191
    %1671 = vmatprep.subr.mxu0 %v188
    %1672 = vmatpush1.msra.mxu0 %v187
    %1673 = vmatprep.subr.mxu0 %v184
    %1674 = vmatpush1.msra.mxu0 %v183
    %1675 = vmatprep.subr.mxu0 %v180
    %1676 = vmatpush1.msra.mxu0 %v179
    %1677 = vmatprep.subr.mxu0 %v176
    %1678 = vmatpush1.msra.mxu0 %v175
    %1679 = vmatprep.subr.mxu0 %v172
    %1680 = vmatpush1.msra.mxu0 %v171
    %1681 = vmatprep.subr.mxu0 %v168
    %1682 = vmatpush1.msra.mxu0 %v167
    %1683 = vmatprep.subr.mxu0 %v164
    %1684 = vmatpush1.msra.mxu0 %v163
    %1685 = vmatprep.subr.mxu0 %v160
    %1686 = vmatpush1.msra.mxu0 %v159
    %1687 = vmatprep.subr.mxu0 %v156
    %1688 = vmatpush1.msra.mxu0 %v155
    %1689 = vmatprep.subr.mxu0 %v152
    %1690 = vmatpush1.msra.mxu0 %v151
    %1691 = vmatprep.subr.mxu0 %v148
    %1692 = vmatpush1.msra.mxu0 %v147
    %1693 = vmatprep.subr.mxu0 %v144
    %1694 = vmatpush1.msra.mxu0 %v143
    %1695 = vmatprep.subr.mxu0 0.0
    %1696 = vmatpush2.msra.mxu0 0.0
    %1697 = vmatprep.subr.mxu0 0.0
    %1698 = vmatpush2.msra.mxu0 0.0
    %1699 = vmatprep.subr.mxu0 0.0
    %1700 = vmatpush2.msra.mxu0 0.0
    %1701 = vmatprep.subr.mxu0 0.0
    %1702 = vmatpush2.msra.mxu0 0.0
    %1703 = vmatprep.subr.mxu0 0.0
    %1704 = vmatpush2.msra.mxu0 0.0
    %1705 = vmatprep.subr.mxu0 0.0
    %1706 = vmatpush2.msra.mxu0 0.0
    %1707 = vmatprep.subr.mxu0 0.0
    %1708 = vmatpush2.msra.mxu0 0.0
    %1709 = vmatprep.subr.mxu0 0.0
    %1710 = vmatpush2.msra.mxu0 0.0
    %1711 = vmatprep.subr.mxu0 0.0
    %1712 = vmatpush2.msra.mxu0 0.0
    %1713 = vmatprep.subr.mxu0 0.0
    %1714 = vmatpush2.msra.mxu0 0.0
    %1715 = vmatprep.subr.mxu0 0.0
    %1716 = vmatpush2.msra.mxu0 0.0
    %1717 = vmatprep.subr.mxu0 0.0
    %1718 = vmatpush2.msra.mxu0 0.0
    %1719 = vmatprep.subr.mxu0 0.0
    %1720 = vmatpush2.msra.mxu0 0.0
    %1721 = vmatprep.subr.mxu0 0.0
    %1722 = vmatpush2.msra.mxu0 0.0
    %1723 = vmatprep.subr.mxu0 0.0
    %1724 = vmatpush2.msra.mxu0 0.0
    %1725 = vmatprep.subr.mxu0 0.0
    %1726 = vmatpush2.msra.mxu0 0.0
    %1727 = vmatprep.mubr.f32.mxu0 0.0
    %1728 = vmatmul.mubr.f32.gmra.mxu0 0.0
    %v1729 = vpop.f32.mrf.mxu0
    %v1730 = vadd.f32 0.0, %v1729
    %v1731 = vpop.f32.mrf.mxu0
    %v1732 = vadd.f32 0.0, %v1731
    %1733 = vdwg.mxu0
    %1734 = vmatprep.subr.mxu0 %v206
    %1735 = vmatpush1.msra.mxu0 %v205
    %1736 = vmatprep.subr.mxu0 %v202
    %1737 = vmatpush1.msra.mxu0 %v201
    %1738 = vmatprep.subr.mxu0 %v198
    %1739 = vmatpush1.msra.mxu0 %v197
    %1740 = vmatprep.subr.mxu0 %v194
    %1741 = vmatpush1.msra.mxu0 %v193
    %1742 = vmatprep.subr.mxu0 %v190
    %1743 = vmatpush1.msra.mxu0 %v189
    %1744 = vmatprep.subr.mxu0 %v186
    %1745 = vmatpush1.msra.mxu0 %v185
    %1746 = vmatprep.subr.mxu0 %v182
    %1747 = vmatpush1.msra.mxu0 %v181
    %1748 = vmatprep.subr.mxu0 %v178
    %1749 = vmatpush1.msra.mxu0 %v177
    %1750 = vmatprep.subr.mxu0 %v174
    %1751 = vmatpush1.msra.mxu0 %v173
    %1752 = vmatprep.subr.mxu0 %v170
    %1753 = vmatpush1.msra.mxu0 %v169
    %1754 = vmatprep.subr.mxu0 %v166
    %1755 = vmatpush1.msra.mxu0 %v165
    %1756 = vmatprep.subr.mxu0 %v162
    %1757 = vmatpush1.msra.mxu0 %v161
    %1758 = vmatprep.subr.mxu0 %v158
    %1759 = vmatpush1.msra.mxu0 %v157
    %1760 = vmatprep.subr.mxu0 %v154
    %1761 = vmatpush1.msra.mxu0 %v153
    %1762 = vmatprep.subr.mxu0 %v150
    %1763 = vmatpush1.msra.mxu0 %v149
    %1764 = vmatprep.subr.mxu0 %v146
    %1765 = vmatpush1.msra.mxu0 %v145
    %1766 = vmatprep.subr.mxu0 0.0
    %1767 = vmatpush2.msra.mxu0 0.0
    %1768 = vmatprep.subr.mxu0 0.0
    %1769 = vmatpush2.msra.mxu0 0.0
    %1770 = vmatprep.subr.mxu0 0.0
    %1771 = vmatpush2.msra.mxu0 0.0
    %1772 = vmatprep.subr.mxu0 0.0
    %1773 = vmatpush2.msra.mxu0 0.0
    %1774 = vmatprep.subr.mxu0 0.0
    %1775 = vmatpush2.msra.mxu0 0.0
    %1776 = vmatprep.subr.mxu0 0.0
    %1777 = vmatpush2.msra.mxu0 0.0
    %1778 = vmatprep.subr.mxu0 0.0
    %1779 = vmatpush2.msra.mxu0 0.0
    %1780 = vmatprep.subr.mxu0 0.0
    %1781 = vmatpush2.msra.mxu0 0.0
    %1782 = vmatprep.subr.mxu0 0.0
    %1783 = vmatpush2.msra.mxu0 0.0
    %1784 = vmatprep.subr.mxu0 0.0
    %1785 = vmatpush2.msra.mxu0 0.0
    %1786 = vmatprep.subr.mxu0 0.0
    %1787 = vmatpush2.msra.mxu0 0.0
    %1788 = vmatprep.subr.mxu0 0.0
    %1789 = vmatpush2.msra.mxu0 0.0
    %1790 = vmatprep.subr.mxu0 0.0
    %1791 = vmatpush2.msra.mxu0 0.0
    %1792 = vmatprep.subr.mxu0 0.0
    %1793 = vmatpush2.msra.mxu0 0.0
    %1794 = vmatprep.subr.mxu0 0.0
    %1795 = vmatpush2.msra.mxu0 0.0
    %1796 = vmatprep.subr.mxu0 0.0
    %1797 = vmatpush2.msra.mxu0 0.0
    %1798 = vmatprep.mubr.f32.mxu0 0.0
    %1799 = vmatmul.mubr.f32.gmra.mxu0 0.0
    %v1800 = vpop.f32.mrf.mxu0
    %v1801 = vadd.f32 0.0, %v1800
    %v1802 = vpop.f32.mrf.mxu0
    %v1803 = vadd.f32 0.0, %v1802
    %1804 = vdwg.mxu0
    %v1805 = vadd.f32 %v1659, %v1730
    %v1806 = vadd.f32 %v1660, %v1732
    %v1807 = vadd.f32 %v1661, %v1801
    %v1808 = vadd.f32 %v1662, %v1803
    %v1809 = vmul.f32 %v1805, 0.5
    %v1810 = vtanh.pop %v1809
    %v1811 = vmul.f32 %v1810, 0.5
    %v1812 = vadd.f32 %v1811, 0.5
    %v1813 = vmul.f32 %v1806, 0.5
    %v1814 = vtanh.pop %v1813
    %v1815 = vmul.f32 %v1814, 0.5
    %v1816 = vadd.f32 %v1815, 0.5
    %v1817 = vtanh.pop %v1807
    %v1818 = vmul.f32 %v1808, 0.5
    %v1819 = vtanh.pop %v1818
    %v1820 = vmul.f32 %v1819, 0.5
    %v1821 = vadd.f32 %v1820, 0.5
    %v1822 = vmul.f32 %v1816, 0.0
    %v1823 = vmul.f32 %v1812, %v1817
    %v1824 = vadd.f32 %v1822, %v1823
    %v1825 = vtanh.pop %v1824
    %v1826 = vmul.f32 %v1821, %v1825
    %1827 = vst [vmem:[#allocation3] sm:$0xff] %v1826
    %v1828 = vld [vmem:[%s586] sm:$0xff]
    %v1829 = vld [vmem:[%s586 + $0x8] sm:$0xff]
    %v1830 = vld [vmem:[%s586 + $0x10] sm:$0xff]
    %v1831 = vld [vmem:[%s586 + $0x18] sm:$0xff]
    %1832 = vmatprep.subr.mxu0 %v204
    %1833 = vmatpush1.msra.mxu0 %v203
    %1834 = vmatprep.subr.mxu0 %v200
    %1835 = vmatpush1.msra.mxu0 %v199
    %1836 = vmatprep.subr.mxu0 %v196
    %1837 = vmatpush1.msra.mxu0 %v195
    %1838 = vmatprep.subr.mxu0 %v192
    %1839 = vmatpush1.msra.mxu0 %v191
    %1840 = vmatprep.subr.mxu0 %v188
    %1841 = vmatpush1.msra.mxu0 %v187
    %1842 = vmatprep.subr.mxu0 %v184
    %1843 = vmatpush1.msra.mxu0 %v183
    %1844 = vmatprep.subr.mxu0 %v180
    %1845 = vmatpush1.msra.mxu0 %v179
    %1846 = vmatprep.subr.mxu0 %v176
    %1847 = vmatpush1.msra.mxu0 %v175
    %1848 = vmatprep.subr.mxu0 %v172
    %1849 = vmatpush1.msra.mxu0 %v171
    %1850 = vmatprep.subr.mxu0 %v168
    %1851 = vmatpush1.msra.mxu0 %v167
    %1852 = vmatprep.subr.mxu0 %v164
    %1853 = vmatpush1.msra.mxu0 %v163
    %1854 = vmatprep.subr.mxu0 %v160
    %1855 = vmatpush1.msra.mxu0 %v159
    %1856 = vmatprep.subr.mxu0 %v156
    %1857 = vmatpush1.msra.mxu0 %v155
    %1858 = vmatprep.subr.mxu0 %v152
    %1859 = vmatpush1.msra.mxu0 %v151
    %1860 = vmatprep.subr.mxu0 %v148
    %1861 = vmatpush1.msra.mxu0 %v147
    %1862 = vmatprep.subr.mxu0 %v144
    %1863 = vmatpush1.msra.mxu0 %v143
    %1864 = vmatprep.subr.mxu0 0.0
    %1865 = vmatpush2.msra.mxu0 0.0
    %1866 = vmatprep.subr.mxu0 0.0
    %1867 = vmatpush2.msra.mxu0 0.0
    %1868 = vmatprep.subr.mxu0 0.0
    %1869 = vmatpush2.msra.mxu0 0.0
    %1870 = vmatprep.subr.mxu0 0.0
    %1871 = vmatpush2.msra.mxu0 0.0
    %1872 = vmatprep.subr.mxu0 0.0
    %1873 = vmatpush2.msra.mxu0 0.0
    %1874 = vmatprep.subr.mxu0 0.0
    %1875 = vmatpush2.msra.mxu0 0.0
    %1876 = vmatprep.subr.mxu0 0.0
    %1877 = vmatpush2.msra.mxu0 0.0
    %1878 = vmatprep.subr.mxu0 0.0
    %1879 = vmatpush2.msra.mxu0 0.0
    %1880 = vmatprep.subr.mxu0 0.0
    %1881 = vmatpush2.msra.mxu0 0.0
    %1882 = vmatprep.subr.mxu0 0.0
    %1883 = vmatpush2.msra.mxu0 0.0
    %1884 = vmatprep.subr.mxu0 0.0
    %1885 = vmatpush2.msra.mxu0 0.0
    %1886 = vmatprep.subr.mxu0 0.0
    %1887 = vmatpush2.msra.mxu0 0.0
    %1888 = vmatprep.subr.mxu0 0.0
    %1889 = vmatpush2.msra.mxu0 0.0
    %1890 = vmatprep.subr.mxu0 0.0
    %1891 = vmatpush2.msra.mxu0 0.0
    %1892 = vmatprep.subr.mxu0 0.0
    %1893 = vmatpush2.msra.mxu0 0.0
    %1894 = vmatprep.subr.mxu0 0.0
    %1895 = vmatpush2.msra.mxu0 0.0
    %1896 = vmatprep.mubr.f32.mxu0 0.0
    %1897 = vmatmul.mubr.f32.gmra.mxu0 %v1826
    %v1898 = vpop.f32.mrf.mxu0
    %v1899 = vadd.f32 0.0, %v1898
    %v1900 = vpop.f32.mrf.mxu0
    %v1901 = vadd.f32 0.0, %v1900
    %1902 = vdwg.mxu0
    %1903 = vmatprep.subr.mxu0 %v206
    %1904 = vmatpush1.msra.mxu0 %v205
    %1905 = vmatprep.subr.mxu0 %v202
    %1906 = vmatpush1.msra.mxu0 %v201
    %1907 = vmatprep.subr.mxu0 %v198
    %1908 = vmatpush1.msra.mxu0 %v197
    %1909 = vmatprep.subr.mxu0 %v194
    %1910 = vmatpush1.msra.mxu0 %v193
    %1911 = vmatprep.subr.mxu0 %v190
    %1912 = vmatpush1.msra.mxu0 %v189
    %1913 = vmatprep.subr.mxu0 %v186
    %1914 = vmatpush1.msra.mxu0 %v185
    %1915 = vmatprep.subr.mxu0 %v182
    %1916 = vmatpush1.msra.mxu0 %v181
    %1917 = vmatprep.subr.mxu0 %v178
    %1918 = vmatpush1.msra.mxu0 %v177
    %1919 = vmatprep.subr.mxu0 %v174
    %1920 = vmatpush1.msra.mxu0 %v173
    %1921 = vmatprep.subr.mxu0 %v170
    %1922 = vmatpush1.msra.mxu0 %v169
    %1923 = vmatprep.subr.mxu0 %v166
    %1924 = vmatpush1.msra.mxu0 %v165
    %1925 = vmatprep.subr.mxu0 %v162
    %1926 = vmatpush1.msra.mxu0 %v161
    %1927 = vmatprep.subr.mxu0 %v158
    %1928 = vmatpush1.msra.mxu0 %v157
    %1929 = vmatprep.subr.mxu0 %v154
    %1930 = vmatpush1.msra.mxu0 %v153
    %1931 = vmatprep.subr.mxu0 %v150
    %1932 = vmatpush1.msra.mxu0 %v149
    %1933 = vmatprep.subr.mxu0 %v146
    %1934 = vmatpush1.msra.mxu0 %v145
    %1935 = vmatprep.subr.mxu0 0.0
    %1936 = vmatpush2.msra.mxu0 0.0
    %1937 = vmatprep.subr.mxu0 0.0
    %1938 = vmatpush2.msra.mxu0 0.0
    %1939 = vmatprep.subr.mxu0 0.0
    %1940 = vmatpush2.msra.mxu0 0.0
    %1941 = vmatprep.subr.mxu0 0.0
    %1942 = vmatpush2.msra.mxu0 0.0
    %1943 = vmatprep.subr.mxu0 0.0
    %1944 = vmatpush2.msra.mxu0 0.0
    %1945 = vmatprep.subr.mxu0 0.0
    %1946 = vmatpush2.msra.mxu0 0.0
    %1947 = vmatprep.subr.mxu0 0.0
    %1948 = vmatpush2.msra.mxu0 0.0
    %1949 = vmatprep.subr.mxu0 0.0
    %1950 = vmatpush2.msra.mxu0 0.0
    %1951 = vmatprep.subr.mxu0 0.0
    %1952 = vmatpush2.msra.mxu0 0.0
    %1953 = vmatprep.subr.mxu0 0.0
    %1954 = vmatpush2.msra.mxu0 0.0
    %1955 = vmatprep.subr.mxu0 0.0
    %1956 = vmatpush2.msra.mxu0 0.0
    %1957 = vmatprep.subr.mxu0 0.0
    %1958 = vmatpush2.msra.mxu0 0.0
    %1959 = vmatprep.subr.mxu0 0.0
    %1960 = vmatpush2.msra.mxu0 0.0
    %1961 = vmatprep.subr.mxu0 0.0
    %1962 = vmatpush2.msra.mxu0 0.0
    %1963 = vmatprep.subr.mxu0 0.0
    %1964 = vmatpush2.msra.mxu0 0.0
    %1965 = vmatprep.subr.mxu0 0.0
    %1966 = vmatpush2.msra.mxu0 0.0
    %1967 = vmatprep.mubr.f32.mxu0 0.0
    %1968 = vmatmul.mubr.f32.gmra.mxu0 %v1826
    %v1969 = vpop.f32.mrf.mxu0
    %v1970 = vadd.f32 0.0, %v1969
    %v1971 = vpop.f32.mrf.mxu0
    %v1972 = vadd.f32 0.0, %v1971
    %1973 = vdwg.mxu0
    %v1974 = vadd.f32 %v1828, %v1899
    %v1975 = vadd.f32 %v1829, %v1901
    %v1976 = vadd.f32 %v1830, %v1970
    %v1977 = vadd.f32 %v1831, %v1972
    %v1978 = vmul.f32 %v1974, 0.5
    %v1979 = vtanh.pop %v1978
    %v1980 = vmul.f32 %v1979, 0.5
    %v1981 = vadd.f32 %v1980, 0.5
    %v1982 = vmul.f32 %v1975, 0.5
    %v1983 = vtanh.pop %v1982
    %v1984 = vmul.f32 %v1983, 0.5
    %v1985 = vadd.f32 %v1984, 0.5
    %v1986 = vtanh.pop %v1976
    %v1987 = vmul.f32 %v1977, 0.5
    %v1988 = vtanh.pop %v1987
    %v1989 = vmul.f32 %v1988, 0.5
    %v1990 = vadd.f32 %v1989, 0.5
    %v1991 = vmul.f32 %v1985, %v1824
    %v1992 = vmul.f32 %v1981, %v1986
    %v1993 = vadd.f32 %v1991, %v1992
    %v1994 = vtanh.pop %v1993
    %v1995 = vmul.f32 %v1990, %v1994
    %s1996 = scalar_lea.vmem [#allocation3], 8
    %1997 = vst [vmem:[%s1996] sm:$0xff] %v1995
    %v1998 = vld [vmem:[%s764] sm:$0xff]
    %v1999 = vld [vmem:[%s764 + $0x8] sm:$0xff]
    %v2000 = vld [vmem:[%s764 + $0x10] sm:$0xff]
    %v2001 = vld [vmem:[%s764 + $0x18] sm:$0xff]
    %2002 = vmatprep.subr.mxu0 %v204
    %2003 = vmatpush1.msra.mxu0 %v203
    %2004 = vmatprep.subr.mxu0 %v200
    %2005 = vmatpush1.msra.mxu0 %v199
    %2006 = vmatprep.subr.mxu0 %v196
    %2007 = vmatpush1.msra.mxu0 %v195
    %2008 = vmatprep.subr.mxu0 %v192
    %2009 = vmatpush1.msra.mxu0 %v191
    %2010 = vmatprep.subr.mxu0 %v188
    %2011 = vmatpush1.msra.mxu0 %v187
    %2012 = vmatprep.subr.mxu0 %v184
    %2013 = vmatpush1.msra.mxu0 %v183
    %2014 = vmatprep.subr.mxu0 %v180
    %2015 = vmatpush1.msra.mxu0 %v179
    %2016 = vmatprep.subr.mxu0 %v176
    %2017 = vmatpush1.msra.mxu0 %v175
    %2018 = vmatprep.subr.mxu0 %v172
    %2019 = vmatpush1.msra.mxu0 %v171
    %2020 = vmatprep.subr.mxu0 %v168
    %2021 = vmatpush1.msra.mxu0 %v167
    %2022 = vmatprep.subr.mxu0 %v164
    %2023 = vmatpush1.msra.mxu0 %v163
    %2024 = vmatprep.subr.mxu0 %v160
    %2025 = vmatpush1.msra.mxu0 %v159
    %2026 = vmatprep.subr.mxu0 %v156
    %2027 = vmatpush1.msra.mxu0 %v155
    %2028 = vmatprep.subr.mxu0 %v152
    %2029 = vmatpush1.msra.mxu0 %v151
    %2030 = vmatprep.subr.mxu0 %v148
    %2031 = vmatpush1.msra.mxu0 %v147
    %2032 = vmatprep.subr.mxu0 %v144
    %2033 = vmatpush1.msra.mxu0 %v143
    %2034 = vmatprep.subr.mxu0 0.0
    %2035 = vmatpush2.msra.mxu0 0.0
    %2036 = vmatprep.subr.mxu0 0.0
    %2037 = vmatpush2.msra.mxu0 0.0
    %2038 = vmatprep.subr.mxu0 0.0
    %2039 = vmatpush2.msra.mxu0 0.0
    %2040 = vmatprep.subr.mxu0 0.0
    %2041 = vmatpush2.msra.mxu0 0.0
    %2042 = vmatprep.subr.mxu0 0.0
    %2043 = vmatpush2.msra.mxu0 0.0
    %2044 = vmatprep.subr.mxu0 0.0
    %2045 = vmatpush2.msra.mxu0 0.0
    %2046 = vmatprep.subr.mxu0 0.0
    %2047 = vmatpush2.msra.mxu0 0.0
    %2048 = vmatprep.subr.mxu0 0.0
    %2049 = vmatpush2.msra.mxu0 0.0
    %2050 = vmatprep.subr.mxu0 0.0
    %2051 = vmatpush2.msra.mxu0 0.0
    %2052 = vmatprep.subr.mxu0 0.0
    %2053 = vmatpush2.msra.mxu0 0.0
    %2054 = vmatprep.subr.mxu0 0.0
    %2055 = vmatpush2.msra.mxu0 0.0
    %2056 = vmatprep.subr.mxu0 0.0
    %2057 = vmatpush2.msra.mxu0 0.0
    %2058 = vmatprep.subr.mxu0 0.0
    %2059 = vmatpush2.msra.mxu0 0.0
    %2060 = vmatprep.subr.mxu0 0.0
    %2061 = vmatpush2.msra.mxu0 0.0
    %2062 = vmatprep.subr.mxu0 0.0
    %2063 = vmatpush2.msra.mxu0 0.0
    %2064 = vmatprep.subr.mxu0 0.0
    %2065 = vmatpush2.msra.mxu0 0.0
    %2066 = vmatprep.mubr.f32.mxu0 0.0
    %2067 = vmatmul.mubr.f32.gmra.mxu0 %v1995
    %v2068 = vpop.f32.mrf.mxu0
    %v2069 = vadd.f32 0.0, %v2068
    %v2070 = vpop.f32.mrf.mxu0
    %v2071 = vadd.f32 0.0, %v2070
    %2072 = vdwg.mxu0
    %2073 = vmatprep.subr.mxu0 %v206
    %2074 = vmatpush1.msra.mxu0 %v205
    %2075 = vmatprep.subr.mxu0 %v202
    %2076 = vmatpush1.msra.mxu0 %v201
    %2077 = vmatprep.subr.mxu0 %v198
    %2078 = vmatpush1.msra.mxu0 %v197
    %2079 = vmatprep.subr.mxu0 %v194
    %2080 = vmatpush1.msra.mxu0 %v193
    %2081 = vmatprep.subr.mxu0 %v190
    %2082 = vmatpush1.msra.mxu0 %v189
    %2083 = vmatprep.subr.mxu0 %v186
    %2084 = vmatpush1.msra.mxu0 %v185
    %2085 = vmatprep.subr.mxu0 %v182
    %2086 = vmatpush1.msra.mxu0 %v181
    %2087 = vmatprep.subr.mxu0 %v178
    %2088 = vmatpush1.msra.mxu0 %v177
    %2089 = vmatprep.subr.mxu0 %v174
    %2090 = vmatpush1.msra.mxu0 %v173
    %2091 = vmatprep.subr.mxu0 %v170
    %2092 = vmatpush1.msra.mxu0 %v169
    %2093 = vmatprep.subr.mxu0 %v166
    %2094 = vmatpush1.msra.mxu0 %v165
    %2095 = vmatprep.subr.mxu0 %v162
    %2096 = vmatpush1.msra.mxu0 %v161
    %2097 = vmatprep.subr.mxu0 %v158
    %2098 = vmatpush1.msra.mxu0 %v157
    %2099 = vmatprep.subr.mxu0 %v154
    %2100 = vmatpush1.msra.mxu0 %v153
    %2101 = vmatprep.subr.mxu0 %v150
    %2102 = vmatpush1.msra.mxu0 %v149
    %2103 = vmatprep.subr.mxu0 %v146
    %2104 = vmatpush1.msra.mxu0 %v145
    %2105 = vmatprep.subr.mxu0 0.0
    %2106 = vmatpush2.msra.mxu0 0.0
    %2107 = vmatprep.subr.mxu0 0.0
    %2108 = vmatpush2.msra.mxu0 0.0
    %2109 = vmatprep.subr.mxu0 0.0
    %2110 = vmatpush2.msra.mxu0 0.0
    %2111 = vmatprep.subr.mxu0 0.0
    %2112 = vmatpush2.msra.mxu0 0.0
    %2113 = vmatprep.subr.mxu0 0.0
    %2114 = vmatpush2.msra.mxu0 0.0
    %2115 = vmatprep.subr.mxu0 0.0
    %2116 = vmatpush2.msra.mxu0 0.0
    %2117 = vmatprep.subr.mxu0 0.0
    %2118 = vmatpush2.msra.mxu0 0.0
    %2119 = vmatprep.subr.mxu0 0.0
    %2120 = vmatpush2.msra.mxu0 0.0
    %2121 = vmatprep.subr.mxu0 0.0
    %2122 = vmatpush2.msra.mxu0 0.0
    %2123 = vmatprep.subr.mxu0 0.0
    %2124 = vmatpush2.msra.mxu0 0.0
    %2125 = vmatprep.subr.mxu0 0.0
    %2126 = vmatpush2.msra.mxu0 0.0
    %2127 = vmatprep.subr.mxu0 0.0
    %2128 = vmatpush2.msra.mxu0 0.0
    %2129 = vmatprep.subr.mxu0 0.0
    %2130 = vmatpush2.msra.mxu0 0.0
    %2131 = vmatprep.subr.mxu0 0.0
    %2132 = vmatpush2.msra.mxu0 0.0
    %2133 = vmatprep.subr.mxu0 0.0
    %2134 = vmatpush2.msra.mxu0 0.0
    %2135 = vmatprep.subr.mxu0 0.0
    %2136 = vmatpush2.msra.mxu0 0.0
    %2137 = vmatprep.mubr.f32.mxu0 0.0
    %2138 = vmatmul.mubr.f32.gmra.mxu0 %v1995
    %v2139 = vpop.f32.mrf.mxu0
    %v2140 = vadd.f32 0.0, %v2139
    %v2141 = vpop.f32.mrf.mxu0
    %v2142 = vadd.f32 0.0, %v2141
    %2143 = vdwg.mxu0
    %v2144 = vadd.f32 %v1998, %v2069
    %v2145 = vadd.f32 %v1999, %v2071
    %v2146 = vadd.f32 %v2000, %v2140
    %v2147 = vadd.f32 %v2001, %v2142
    %v2148 = vmul.f32 %v2144, 0.5
    %v2149 = vtanh.pop %v2148
    %v2150 = vmul.f32 %v2149, 0.5
    %v2151 = vadd.f32 %v2150, 0.5
    %v2152 = vmul.f32 %v2145, 0.5
    %v2153 = vtanh.pop %v2152
    %v2154 = vmul.f32 %v2153, 0.5
    %v2155 = vadd.f32 %v2154, 0.5
    %v2156 = vtanh.pop %v2146
    %v2157 = vmul.f32 %v2147, 0.5
    %v2158 = vtanh.pop %v2157
    %v2159 = vmul.f32 %v2158, 0.5
    %v2160 = vadd.f32 %v2159, 0.5
    %v2161 = vmul.f32 %v2155, %v1993
    %v2162 = vmul.f32 %v2151, %v2156
    %v2163 = vadd.f32 %v2161, %v2162
    %v2164 = vtanh.pop %v2163
    %v2165 = vmul.f32 %v2160, %v2164
    %s2166 = scalar_lea.vmem [#allocation3], 16
    %2167 = vst [vmem:[%s2166] sm:$0xff] %v2165
    %v2168 = vld [vmem:[%s942] sm:$0xff]
    %v2169 = vld [vmem:[%s942 + $0x8] sm:$0xff]
    %v2170 = vld [vmem:[%s942 + $0x10] sm:$0xff]
    %v2171 = vld [vmem:[%s942 + $0x18] sm:$0xff]
    %2172 = vmatprep.subr.mxu0 %v204
    %2173 = vmatpush1.msra.mxu0 %v203
    %2174 = vmatprep.subr.mxu0 %v200
    %2175 = vmatpush1.msra.mxu0 %v199
    %2176 = vmatprep.subr.mxu0 %v196
    %2177 = vmatpush1.msra.mxu0 %v195
    %2178 = vmatprep.subr.mxu0 %v192
    %2179 = vmatpush1.msra.mxu0 %v191
    %2180 = vmatprep.subr.mxu0 %v188
    %2181 = vmatpush1.msra.mxu0 %v187
    %2182 = vmatprep.subr.mxu0 %v184
    %2183 = vmatpush1.msra.mxu0 %v183
    %2184 = vmatprep.subr.mxu0 %v180
    %2185 = vmatpush1.msra.mxu0 %v179
    %2186 = vmatprep.subr.mxu0 %v176
    %2187 = vmatpush1.msra.mxu0 %v175
    %2188 = vmatprep.subr.mxu0 %v172
    %2189 = vmatpush1.msra.mxu0 %v171
    %2190 = vmatprep.subr.mxu0 %v168
    %2191 = vmatpush1.msra.mxu0 %v167
    %2192 = vmatprep.subr.mxu0 %v164
    %2193 = vmatpush1.msra.mxu0 %v163
    %2194 = vmatprep.subr.mxu0 %v160
    %2195 = vmatpush1.msra.mxu0 %v159
    %2196 = vmatprep.subr.mxu0 %v156
    %2197 = vmatpush1.msra.mxu0 %v155
    %2198 = vmatprep.subr.mxu0 %v152
    %2199 = vmatpush1.msra.mxu0 %v151
    %2200 = vmatprep.subr.mxu0 %v148
    %2201 = vmatpush1.msra.mxu0 %v147
    %2202 = vmatprep.subr.mxu0 %v144
    %2203 = vmatpush1.msra.mxu0 %v143
    %2204 = vmatprep.subr.mxu0 0.0
    %2205 = vmatpush2.msra.mxu0 0.0
    %2206 = vmatprep.subr.mxu0 0.0
    %2207 = vmatpush2.msra.mxu0 0.0
    %2208 = vmatprep.subr.mxu0 0.0
    %2209 = vmatpush2.msra.mxu0 0.0
    %2210 = vmatprep.subr.mxu0 0.0
    %2211 = vmatpush2.msra.mxu0 0.0
    %2212 = vmatprep.subr.mxu0 0.0
    %2213 = vmatpush2.msra.mxu0 0.0
    %2214 = vmatprep.subr.mxu0 0.0
    %2215 = vmatpush2.msra.mxu0 0.0
    %2216 = vmatprep.subr.mxu0 0.0
    %2217 = vmatpush2.msra.mxu0 0.0
    %2218 = vmatprep.subr.mxu0 0.0
    %2219 = vmatpush2.msra.mxu0 0.0
    %2220 = vmatprep.subr.mxu0 0.0
    %2221 = vmatpush2.msra.mxu0 0.0
    %2222 = vmatprep.subr.mxu0 0.0
    %2223 = vmatpush2.msra.mxu0 0.0
    %2224 = vmatprep.subr.mxu0 0.0
    %2225 = vmatpush2.msra.mxu0 0.0
    %2226 = vmatprep.subr.mxu0 0.0
    %2227 = vmatpush2.msra.mxu0 0.0
    %2228 = vmatprep.subr.mxu0 0.0
    %2229 = vmatpush2.msra.mxu0 0.0
    %2230 = vmatprep.subr.mxu0 0.0
    %2231 = vmatpush2.msra.mxu0 0.0
    %2232 = vmatprep.subr.mxu0 0.0
    %2233 = vmatpush2.msra.mxu0 0.0
    %2234 = vmatprep.subr.mxu0 0.0
    %2235 = vmatpush2.msra.mxu0 0.0
    %2236 = vmatprep.mubr.f32.mxu0 0.0
    %2237 = vmatmul.mubr.f32.gmra.mxu0 %v2165
    %v2238 = vpop.f32.mrf.mxu0
    %v2239 = vadd.f32 0.0, %v2238
    %v2240 = vpop.f32.mrf.mxu0
    %v2241 = vadd.f32 0.0, %v2240
    %2242 = vdwg.mxu0
    %2243 = vmatprep.subr.mxu0 %v206
    %2244 = vmatpush1.msra.mxu0 %v205
    %2245 = vmatprep.subr.mxu0 %v202
    %2246 = vmatpush1.msra.mxu0 %v201
    %2247 = vmatprep.subr.mxu0 %v198
    %2248 = vmatpush1.msra.mxu0 %v197
    %2249 = vmatprep.subr.mxu0 %v194
    %2250 = vmatpush1.msra.mxu0 %v193
    %2251 = vmatprep.subr.mxu0 %v190
    %2252 = vmatpush1.msra.mxu0 %v189
    %2253 = vmatprep.subr.mxu0 %v186
    %2254 = vmatpush1.msra.mxu0 %v185
    %2255 = vmatprep.subr.mxu0 %v182
    %2256 = vmatpush1.msra.mxu0 %v181
    %2257 = vmatprep.subr.mxu0 %v178
    %2258 = vmatpush1.msra.mxu0 %v177
    %2259 = vmatprep.subr.mxu0 %v174
    %2260 = vmatpush1.msra.mxu0 %v173
    %2261 = vmatprep.subr.mxu0 %v170
    %2262 = vmatpush1.msra.mxu0 %v169
    %2263 = vmatprep.subr.mxu0 %v166
    %2264 = vmatpush1.msra.mxu0 %v165
    %2265 = vmatprep.subr.mxu0 %v162
    %2266 = vmatpush1.msra.mxu0 %v161
    %2267 = vmatprep.subr.mxu0 %v158
    %2268 = vmatpush1.msra.mxu0 %v157
    %2269 = vmatprep.subr.mxu0 %v154
    %2270 = vmatpush1.msra.mxu0 %v153
    %2271 = vmatprep.subr.mxu0 %v150
    %2272 = vmatpush1.msra.mxu0 %v149
    %2273 = vmatprep.subr.mxu0 %v146
    %2274 = vmatpush1.msra.mxu0 %v145
    %2275 = vmatprep.subr.mxu0 0.0
    %2276 = vmatpush2.msra.mxu0 0.0
    %2277 = vmatprep.subr.mxu0 0.0
    %2278 = vmatpush2.msra.mxu0 0.0
    %2279 = vmatprep.subr.mxu0 0.0
    %2280 = vmatpush2.msra.mxu0 0.0
    %2281 = vmatprep.subr.mxu0 0.0
    %2282 = vmatpush2.msra.mxu0 0.0
    %2283 = vmatprep.subr.mxu0 0.0
    %2284 = vmatpush2.msra.mxu0 0.0
    %2285 = vmatprep.subr.mxu0 0.0
    %2286 = vmatpush2.msra.mxu0 0.0
    %2287 = vmatprep.subr.mxu0 0.0
    %2288 = vmatpush2.msra.mxu0 0.0
    %2289 = vmatprep.subr.mxu0 0.0
    %2290 = vmatpush2.msra.mxu0 0.0
    %2291 = vmatprep.subr.mxu0 0.0
    %2292 = vmatpush2.msra.mxu0 0.0
    %2293 = vmatprep.subr.mxu0 0.0
    %2294 = vmatpush2.msra.mxu0 0.0
    %2295 = vmatprep.subr.mxu0 0.0
    %2296 = vmatpush2.msra.mxu0 0.0
    %2297 = vmatprep.subr.mxu0 0.0
    %2298 = vmatpush2.msra.mxu0 0.0
    %2299 = vmatprep.subr.mxu0 0.0
    %2300 = vmatpush2.msra.mxu0 0.0
    %2301 = vmatprep.subr.mxu0 0.0
    %2302 = vmatpush2.msra.mxu0 0.0
    %2303 = vmatprep.subr.mxu0 0.0
    %2304 = vmatpush2.msra.mxu0 0.0
    %2305 = vmatprep.subr.mxu0 0.0
    %2306 = vmatpush2.msra.mxu0 0.0
    %2307 = vmatprep.mubr.f32.mxu0 0.0
    %2308 = vmatmul.mubr.f32.gmra.mxu0 %v2165
    %v2309 = vpop.f32.mrf.mxu0
    %v2310 = vadd.f32 0.0, %v2309
    %v2311 = vpop.f32.mrf.mxu0
    %v2312 = vadd.f32 0.0, %v2311
    %2313 = vdwg.mxu0
    %v2314 = vadd.f32 %v2168, %v2239
    %v2315 = vadd.f32 %v2169, %v2241
    %v2316 = vadd.f32 %v2170, %v2310
    %v2317 = vadd.f32 %v2171, %v2312
    %v2318 = vmul.f32 %v2314, 0.5
    %v2319 = vtanh.pop %v2318
    %v2320 = vmul.f32 %v2319, 0.5
    %v2321 = vadd.f32 %v2320, 0.5
    %v2322 = vmul.f32 %v2315, 0.5
    %v2323 = vtanh.pop %v2322
    %v2324 = vmul.f32 %v2323, 0.5
    %v2325 = vadd.f32 %v2324, 0.5
    %v2326 = vtanh.pop %v2316
    %v2327 = vmul.f32 %v2317, 0.5
    %v2328 = vtanh.pop %v2327
    %v2329 = vmul.f32 %v2328, 0.5
    %v2330 = vadd.f32 %v2329, 0.5
    %v2331 = vmul.f32 %v2325, %v2163
    %v2332 = vmul.f32 %v2321, %v2326
    %v2333 = vadd.f32 %v2331, %v2332
    %v2334 = vtanh.pop %v2333
    %v2335 = vmul.f32 %v2330, %v2334
    %s2336 = scalar_lea.vmem [#allocation3], 24
    %2337 = vst [vmem:[%s2336] sm:$0xff] %v2335
    %v2338 = vld [vmem:[%s1120] sm:$0xff]
    %v2339 = vld [vmem:[%s1120 + $0x8] sm:$0xff]
    %v2340 = vld [vmem:[%s1120 + $0x10] sm:$0xff]
    %v2341 = vld [vmem:[%s1120 + $0x18] sm:$0xff]
    %2342 = vmatprep.subr.mxu0 %v204
    %2343 = vmatpush1.msra.mxu0 %v203
    %2344 = vmatprep.subr.mxu0 %v200
    %2345 = vmatpush1.msra.mxu0 %v199
    %2346 = vmatprep.subr.mxu0 %v196
    %2347 = vmatpush1.msra.mxu0 %v195
    %2348 = vmatprep.subr.mxu0 %v192
    %2349 = vmatpush1.msra.mxu0 %v191
    %2350 = vmatprep.subr.mxu0 %v188
    %2351 = vmatpush1.msra.mxu0 %v187
    %2352 = vmatprep.subr.mxu0 %v184
    %2353 = vmatpush1.msra.mxu0 %v183
    %2354 = vmatprep.subr.mxu0 %v180
    %2355 = vmatpush1.msra.mxu0 %v179
    %2356 = vmatprep.subr.mxu0 %v176
    %2357 = vmatpush1.msra.mxu0 %v175
    %2358 = vmatprep.subr.mxu0 %v172
    %2359 = vmatpush1.msra.mxu0 %v171
    %2360 = vmatprep.subr.mxu0 %v168
    %2361 = vmatpush1.msra.mxu0 %v167
    %2362 = vmatprep.subr.mxu0 %v164
    %2363 = vmatpush1.msra.mxu0 %v163
    %2364 = vmatprep.subr.mxu0 %v160
    %2365 = vmatpush1.msra.mxu0 %v159
    %2366 = vmatprep.subr.mxu0 %v156
    %2367 = vmatpush1.msra.mxu0 %v155
    %2368 = vmatprep.subr.mxu0 %v152
    %2369 = vmatpush1.msra.mxu0 %v151
    %2370 = vmatprep.subr.mxu0 %v148
    %2371 = vmatpush1.msra.mxu0 %v147
    %2372 = vmatprep.subr.mxu0 %v144
    %2373 = vmatpush1.msra.mxu0 %v143
    %2374 = vmatprep.subr.mxu0 0.0
    %2375 = vmatpush2.msra.mxu0 0.0
    %2376 = vmatprep.subr.mxu0 0.0
    %2377 = vmatpush2.msra.mxu0 0.0
    %2378 = vmatprep.subr.mxu0 0.0
    %2379 = vmatpush2.msra.mxu0 0.0
    %2380 = vmatprep.subr.mxu0 0.0
    %2381 = vmatpush2.msra.mxu0 0.0
    %2382 = vmatprep.subr.mxu0 0.0
    %2383 = vmatpush2.msra.mxu0 0.0
    %2384 = vmatprep.subr.mxu0 0.0
    %2385 = vmatpush2.msra.mxu0 0.0
    %2386 = vmatprep.subr.mxu0 0.0
    %2387 = vmatpush2.msra.mxu0 0.0
    %2388 = vmatprep.subr.mxu0 0.0
    %2389 = vmatpush2.msra.mxu0 0.0
    %2390 = vmatprep.subr.mxu0 0.0
    %2391 = vmatpush2.msra.mxu0 0.0
    %2392 = vmatprep.subr.mxu0 0.0
    %2393 = vmatpush2.msra.mxu0 0.0
    %2394 = vmatprep.subr.mxu0 0.0
    %2395 = vmatpush2.msra.mxu0 0.0
    %2396 = vmatprep.subr.mxu0 0.0
    %2397 = vmatpush2.msra.mxu0 0.0
    %2398 = vmatprep.subr.mxu0 0.0
    %2399 = vmatpush2.msra.mxu0 0.0
    %2400 = vmatprep.subr.mxu0 0.0
    %2401 = vmatpush2.msra.mxu0 0.0
    %2402 = vmatprep.subr.mxu0 0.0
    %2403 = vmatpush2.msra.mxu0 0.0
    %2404 = vmatprep.subr.mxu0 0.0
    %2405 = vmatpush2.msra.mxu0 0.0
    %2406 = vmatprep.mubr.f32.mxu0 0.0
    %2407 = vmatmul.mubr.f32.gmra.mxu0 %v2335
    %v2408 = vpop.f32.mrf.mxu0
    %v2409 = vadd.f32 0.0, %v2408
    %v2410 = vpop.f32.mrf.mxu0
    %v2411 = vadd.f32 0.0, %v2410
    %2412 = vdwg.mxu0
    %2413 = vmatprep.subr.mxu0 %v206
    %2414 = vmatpush1.msra.mxu0 %v205
    %2415 = vmatprep.subr.mxu0 %v202
    %2416 = vmatpush1.msra.mxu0 %v201
    %2417 = vmatprep.subr.mxu0 %v198
    %2418 = vmatpush1.msra.mxu0 %v197
    %2419 = vmatprep.subr.mxu0 %v194
    %2420 = vmatpush1.msra.mxu0 %v193
    %2421 = vmatprep.subr.mxu0 %v190
    %2422 = vmatpush1.msra.mxu0 %v189
    %2423 = vmatprep.subr.mxu0 %v186
    %2424 = vmatpush1.msra.mxu0 %v185
    %2425 = vmatprep.subr.mxu0 %v182
    %2426 = vmatpush1.msra.mxu0 %v181
    %2427 = vmatprep.subr.mxu0 %v178
    %2428 = vmatpush1.msra.mxu0 %v177
    %2429 = vmatprep.subr.mxu0 %v174
    %2430 = vmatpush1.msra.mxu0 %v173
    %2431 = vmatprep.subr.mxu0 %v170
    %2432 = vmatpush1.msra.mxu0 %v169
    %2433 = vmatprep.subr.mxu0 %v166
    %2434 = vmatpush1.msra.mxu0 %v165
    %2435 = vmatprep.subr.mxu0 %v162
    %2436 = vmatpush1.msra.mxu0 %v161
    %2437 = vmatprep.subr.mxu0 %v158
    %2438 = vmatpush1.msra.mxu0 %v157
    %2439 = vmatprep.subr.mxu0 %v154
    %2440 = vmatpush1.msra.mxu0 %v153
    %2441 = vmatprep.subr.mxu0 %v150
    %2442 = vmatpush1.msra.mxu0 %v149
    %2443 = vmatprep.subr.mxu0 %v146
    %2444 = vmatpush1.msra.mxu0 %v145
    %2445 = vmatprep.subr.mxu0 0.0
    %2446 = vmatpush2.msra.mxu0 0.0
    %2447 = vmatprep.subr.mxu0 0.0
    %2448 = vmatpush2.msra.mxu0 0.0
    %2449 = vmatprep.subr.mxu0 0.0
    %2450 = vmatpush2.msra.mxu0 0.0
    %2451 = vmatprep.subr.mxu0 0.0
    %2452 = vmatpush2.msra.mxu0 0.0
    %2453 = vmatprep.subr.mxu0 0.0
    %2454 = vmatpush2.msra.mxu0 0.0
    %2455 = vmatprep.subr.mxu0 0.0
    %2456 = vmatpush2.msra.mxu0 0.0
    %2457 = vmatprep.subr.mxu0 0.0
    %2458 = vmatpush2.msra.mxu0 0.0
    %2459 = vmatprep.subr.mxu0 0.0
    %2460 = vmatpush2.msra.mxu0 0.0
    %2461 = vmatprep.subr.mxu0 0.0
    %2462 = vmatpush2.msra.mxu0 0.0
    %2463 = vmatprep.subr.mxu0 0.0
    %2464 = vmatpush2.msra.mxu0 0.0
    %2465 = vmatprep.subr.mxu0 0.0
    %2466 = vmatpush2.msra.mxu0 0.0
    %2467 = vmatprep.subr.mxu0 0.0
    %2468 = vmatpush2.msra.mxu0 0.0
    %2469 = vmatprep.subr.mxu0 0.0
    %2470 = vmatpush2.msra.mxu0 0.0
    %2471 = vmatprep.subr.mxu0 0.0
    %2472 = vmatpush2.msra.mxu0 0.0
    %2473 = vmatprep.subr.mxu0 0.0
    %2474 = vmatpush2.msra.mxu0 0.0
    %2475 = vmatprep.subr.mxu0 0.0
    %2476 = vmatpush2.msra.mxu0 0.0
    %2477 = vmatprep.mubr.f32.mxu0 0.0
    %2478 = vmatmul.mubr.f32.gmra.mxu0 %v2335
    %v2479 = vpop.f32.mrf.mxu0
    %v2480 = vadd.f32 0.0, %v2479
    %v2481 = vpop.f32.mrf.mxu0
    %v2482 = vadd.f32 0.0, %v2481
    %2483 = vdwg.mxu0
    %v2484 = vadd.f32 %v2338, %v2409
    %v2485 = vadd.f32 %v2339, %v2411
    %v2486 = vadd.f32 %v2340, %v2480
    %v2487 = vadd.f32 %v2341, %v2482
    %v2488 = vmul.f32 %v2484, 0.5
    %v2489 = vtanh.pop %v2488
    %v2490 = vmul.f32 %v2489, 0.5
    %v2491 = vadd.f32 %v2490, 0.5
    %v2492 = vmul.f32 %v2485, 0.5
    %v2493 = vtanh.pop %v2492
    %v2494 = vmul.f32 %v2493, 0.5
    %v2495 = vadd.f32 %v2494, 0.5
    %v2496 = vtanh.pop %v2486
    %v2497 = vmul.f32 %v2487, 0.5
    %v2498 = vtanh.pop %v2497
    %v2499 = vmul.f32 %v2498, 0.5
    %v2500 = vadd.f32 %v2499, 0.5
    %v2501 = vmul.f32 %v2495, %v2333
    %v2502 = vmul.f32 %v2491, %v2496
    %v2503 = vadd.f32 %v2501, %v2502
    %v2504 = vtanh.pop %v2503
    %v2505 = vmul.f32 %v2500, %v2504
    %s2506 = scalar_lea.vmem [#allocation3], 32
    %2507 = vst [vmem:[%s2506] sm:$0xff] %v2505
    %v2508 = vld [vmem:[%s1298] sm:$0xff]
    %v2509 = vld [vmem:[%s1298 + $0x8] sm:$0xff]
    %v2510 = vld [vmem:[%s1298 + $0x10] sm:$0xff]
    %v2511 = vld [vmem:[%s1298 + $0x18] sm:$0xff]
    %2512 = vmatprep.subr.mxu0 %v204
    %2513 = vmatpush1.msra.mxu0 %v203
    %2514 = vmatprep.subr.mxu0 %v200
    %2515 = vmatpush1.msra.mxu0 %v199
    %2516 = vmatprep.subr.mxu0 %v196
    %2517 = vmatpush1.msra.mxu0 %v195
    %2518 = vmatprep.subr.mxu0 %v192
    %2519 = vmatpush1.msra.mxu0 %v191
    %2520 = vmatprep.subr.mxu0 %v188
    %2521 = vmatpush1.msra.mxu0 %v187
    %2522 = vmatprep.subr.mxu0 %v184
    %2523 = vmatpush1.msra.mxu0 %v183
    %2524 = vmatprep.subr.mxu0 %v180
    %2525 = vmatpush1.msra.mxu0 %v179
    %2526 = vmatprep.subr.mxu0 %v176
    %2527 = vmatpush1.msra.mxu0 %v175
    %2528 = vmatprep.subr.mxu0 %v172
    %2529 = vmatpush1.msra.mxu0 %v171
    %2530 = vmatprep.subr.mxu0 %v168
    %2531 = vmatpush1.msra.mxu0 %v167
    %2532 = vmatprep.subr.mxu0 %v164
    %2533 = vmatpush1.msra.mxu0 %v163
    %2534 = vmatprep.subr.mxu0 %v160
    %2535 = vmatpush1.msra.mxu0 %v159
    %2536 = vmatprep.subr.mxu0 %v156
    %2537 = vmatpush1.msra.mxu0 %v155
    %2538 = vmatprep.subr.mxu0 %v152
    %2539 = vmatpush1.msra.mxu0 %v151
    %2540 = vmatprep.subr.mxu0 %v148
    %2541 = vmatpush1.msra.mxu0 %v147
    %2542 = vmatprep.subr.mxu0 %v144
    %2543 = vmatpush1.msra.mxu0 %v143
    %2544 = vmatprep.subr.mxu0 0.0
    %2545 = vmatpush2.msra.mxu0 0.0
    %2546 = vmatprep.subr.mxu0 0.0
    %2547 = vmatpush2.msra.mxu0 0.0
    %2548 = vmatprep.subr.mxu0 0.0
    %2549 = vmatpush2.msra.mxu0 0.0
    %2550 = vmatprep.subr.mxu0 0.0
    %2551 = vmatpush2.msra.mxu0 0.0
    %2552 = vmatprep.subr.mxu0 0.0
    %2553 = vmatpush2.msra.mxu0 0.0
    %2554 = vmatprep.subr.mxu0 0.0
    %2555 = vmatpush2.msra.mxu0 0.0
    %2556 = vmatprep.subr.mxu0 0.0
    %2557 = vmatpush2.msra.mxu0 0.0
    %2558 = vmatprep.subr.mxu0 0.0
    %2559 = vmatpush2.msra.mxu0 0.0
    %2560 = vmatprep.subr.mxu0 0.0
    %2561 = vmatpush2.msra.mxu0 0.0
    %2562 = vmatprep.subr.mxu0 0.0
    %2563 = vmatpush2.msra.mxu0 0.0
    %2564 = vmatprep.subr.mxu0 0.0
    %2565 = vmatpush2.msra.mxu0 0.0
    %2566 = vmatprep.subr.mxu0 0.0
    %2567 = vmatpush2.msra.mxu0 0.0
    %2568 = vmatprep.subr.mxu0 0.0
    %2569 = vmatpush2.msra.mxu0 0.0
    %2570 = vmatprep.subr.mxu0 0.0
    %2571 = vmatpush2.msra.mxu0 0.0
    %2572 = vmatprep.subr.mxu0 0.0
    %2573 = vmatpush2.msra.mxu0 0.0
    %2574 = vmatprep.subr.mxu0 0.0
    %2575 = vmatpush2.msra.mxu0 0.0
    %2576 = vmatprep.mubr.f32.mxu0 0.0
    %2577 = vmatmul.mubr.f32.gmra.mxu0 %v2505
    %v2578 = vpop.f32.mrf.mxu0
    %v2579 = vadd.f32 0.0, %v2578
    %v2580 = vpop.f32.mrf.mxu0
    %v2581 = vadd.f32 0.0, %v2580
    %2582 = vdwg.mxu0
    %2583 = vmatprep.subr.mxu0 %v206
    %2584 = vmatpush1.msra.mxu0 %v205
    %2585 = vmatprep.subr.mxu0 %v202
    %2586 = vmatpush1.msra.mxu0 %v201
    %2587 = vmatprep.subr.mxu0 %v198
    %2588 = vmatpush1.msra.mxu0 %v197
    %2589 = vmatprep.subr.mxu0 %v194
    %2590 = vmatpush1.msra.mxu0 %v193
    %2591 = vmatprep.subr.mxu0 %v190
    %2592 = vmatpush1.msra.mxu0 %v189
    %2593 = vmatprep.subr.mxu0 %v186
    %2594 = vmatpush1.msra.mxu0 %v185
    %2595 = vmatprep.subr.mxu0 %v182
    %2596 = vmatpush1.msra.mxu0 %v181
    %2597 = vmatprep.subr.mxu0 %v178
    %2598 = vmatpush1.msra.mxu0 %v177
    %2599 = vmatprep.subr.mxu0 %v174
    %2600 = vmatpush1.msra.mxu0 %v173
    %2601 = vmatprep.subr.mxu0 %v170
    %2602 = vmatpush1.msra.mxu0 %v169
    %2603 = vmatprep.subr.mxu0 %v166
    %2604 = vmatpush1.msra.mxu0 %v165
    %2605 = vmatprep.subr.mxu0 %v162
    %2606 = vmatpush1.msra.mxu0 %v161
    %2607 = vmatprep.subr.mxu0 %v158
    %2608 = vmatpush1.msra.mxu0 %v157
    %2609 = vmatprep.subr.mxu0 %v154
    %2610 = vmatpush1.msra.mxu0 %v153
    %2611 = vmatprep.subr.mxu0 %v150
    %2612 = vmatpush1.msra.mxu0 %v149
    %2613 = vmatprep.subr.mxu0 %v146
    %2614 = vmatpush1.msra.mxu0 %v145
    %2615 = vmatprep.subr.mxu0 0.0
    %2616 = vmatpush2.msra.mxu0 0.0
    %2617 = vmatprep.subr.mxu0 0.0
    %2618 = vmatpush2.msra.mxu0 0.0
    %2619 = vmatprep.subr.mxu0 0.0
    %2620 = vmatpush2.msra.mxu0 0.0
    %2621 = vmatprep.subr.mxu0 0.0
    %2622 = vmatpush2.msra.mxu0 0.0
    %2623 = vmatprep.subr.mxu0 0.0
    %2624 = vmatpush2.msra.mxu0 0.0
    %2625 = vmatprep.subr.mxu0 0.0
    %2626 = vmatpush2.msra.mxu0 0.0
    %2627 = vmatprep.subr.mxu0 0.0
    %2628 = vmatpush2.msra.mxu0 0.0
    %2629 = vmatprep.subr.mxu0 0.0
    %2630 = vmatpush2.msra.mxu0 0.0
    %2631 = vmatprep.subr.mxu0 0.0
    %2632 = vmatpush2.msra.mxu0 0.0
    %2633 = vmatprep.subr.mxu0 0.0
    %2634 = vmatpush2.msra.mxu0 0.0
    %2635 = vmatprep.subr.mxu0 0.0
    %2636 = vmatpush2.msra.mxu0 0.0
    %2637 = vmatprep.subr.mxu0 0.0
    %2638 = vmatpush2.msra.mxu0 0.0
    %2639 = vmatprep.subr.mxu0 0.0
    %2640 = vmatpush2.msra.mxu0 0.0
    %2641 = vmatprep.subr.mxu0 0.0
    %2642 = vmatpush2.msra.mxu0 0.0
    %2643 = vmatprep.subr.mxu0 0.0
    %2644 = vmatpush2.msra.mxu0 0.0
    %2645 = vmatprep.subr.mxu0 0.0
    %2646 = vmatpush2.msra.mxu0 0.0
    %2647 = vmatprep.mubr.f32.mxu0 0.0
    %2648 = vmatmul.mubr.f32.gmra.mxu0 %v2505
    %v2649 = vpop.f32.mrf.mxu0
    %v2650 = vadd.f32 0.0, %v2649
    %v2651 = vpop.f32.mrf.mxu0
    %v2652 = vadd.f32 0.0, %v2651
    %2653 = vdwg.mxu0
    %v2654 = vadd.f32 %v2508, %v2579
    %v2655 = vadd.f32 %v2509, %v2581
    %v2656 = vadd.f32 %v2510, %v2650
    %v2657 = vadd.f32 %v2511, %v2652
    %v2658 = vmul.f32 %v2654, 0.5
    %v2659 = vtanh.pop %v2658
    %v2660 = vmul.f32 %v2659, 0.5
    %v2661 = vadd.f32 %v2660, 0.5
    %v2662 = vmul.f32 %v2655, 0.5
    %v2663 = vtanh.pop %v2662
    %v2664 = vmul.f32 %v2663, 0.5
    %v2665 = vadd.f32 %v2664, 0.5
    %v2666 = vtanh.pop %v2656
    %v2667 = vmul.f32 %v2657, 0.5
    %v2668 = vtanh.pop %v2667
    %v2669 = vmul.f32 %v2668, 0.5
    %v2670 = vadd.f32 %v2669, 0.5
    %v2671 = vmul.f32 %v2665, %v2503
    %v2672 = vmul.f32 %v2661, %v2666
    %v2673 = vadd.f32 %v2671, %v2672
    %v2674 = vtanh.pop %v2673
    %v2675 = vmul.f32 %v2670, %v2674
    %s2676 = scalar_lea.vmem [#allocation3], 40
    %2677 = vst [vmem:[%s2676] sm:$0xff] %v2675
    %v2678 = vld [vmem:[%s1476] sm:$0xff]
    %v2679 = vld [vmem:[%s1476 + $0x8] sm:$0xff]
    %v2680 = vld [vmem:[%s1476 + $0x10] sm:$0xff]
    %v2681 = vld [vmem:[%s1476 + $0x18] sm:$0xff]
    %2682 = vmatprep.subr.mxu0 %v204
    %2683 = vmatpush1.msra.mxu0 %v203
    %2684 = vmatprep.subr.mxu0 %v200
    %2685 = vmatpush1.msra.mxu0 %v199
    %2686 = vmatprep.subr.mxu0 %v196
    %2687 = vmatpush1.msra.mxu0 %v195
    %2688 = vmatprep.subr.mxu0 %v192
    %2689 = vmatpush1.msra.mxu0 %v191
    %2690 = vmatprep.subr.mxu0 %v188
    %2691 = vmatpush1.msra.mxu0 %v187
    %2692 = vmatprep.subr.mxu0 %v184
    %2693 = vmatpush1.msra.mxu0 %v183
    %2694 = vmatprep.subr.mxu0 %v180
    %2695 = vmatpush1.msra.mxu0 %v179
    %2696 = vmatprep.subr.mxu0 %v176
    %2697 = vmatpush1.msra.mxu0 %v175
    %2698 = vmatprep.subr.mxu0 %v172
    %2699 = vmatpush1.msra.mxu0 %v171
    %2700 = vmatprep.subr.mxu0 %v168
    %2701 = vmatpush1.msra.mxu0 %v167
    %2702 = vmatprep.subr.mxu0 %v164
    %2703 = vmatpush1.msra.mxu0 %v163
    %2704 = vmatprep.subr.mxu0 %v160
    %2705 = vmatpush1.msra.mxu0 %v159
    %2706 = vmatprep.subr.mxu0 %v156
    %2707 = vmatpush1.msra.mxu0 %v155
    %2708 = vmatprep.subr.mxu0 %v152
    %2709 = vmatpush1.msra.mxu0 %v151
    %2710 = vmatprep.subr.mxu0 %v148
    %2711 = vmatpush1.msra.mxu0 %v147
    %2712 = vmatprep.subr.mxu0 %v144
    %2713 = vmatpush1.msra.mxu0 %v143
    %2714 = vmatprep.subr.mxu0 0.0
    %2715 = vmatpush2.msra.mxu0 0.0
    %2716 = vmatprep.subr.mxu0 0.0
    %2717 = vmatpush2.msra.mxu0 0.0
    %2718 = vmatprep.subr.mxu0 0.0
    %2719 = vmatpush2.msra.mxu0 0.0
    %2720 = vmatprep.subr.mxu0 0.0
    %2721 = vmatpush2.msra.mxu0 0.0
    %2722 = vmatprep.subr.mxu0 0.0
    %2723 = vmatpush2.msra.mxu0 0.0
    %2724 = vmatprep.subr.mxu0 0.0
    %2725 = vmatpush2.msra.mxu0 0.0
    %2726 = vmatprep.subr.mxu0 0.0
    %2727 = vmatpush2.msra.mxu0 0.0
    %2728 = vmatprep.subr.mxu0 0.0
    %2729 = vmatpush2.msra.mxu0 0.0
    %2730 = vmatprep.subr.mxu0 0.0
    %2731 = vmatpush2.msra.mxu0 0.0
    %2732 = vmatprep.subr.mxu0 0.0
    %2733 = vmatpush2.msra.mxu0 0.0
    %2734 = vmatprep.subr.mxu0 0.0
    %2735 = vmatpush2.msra.mxu0 0.0
    %2736 = vmatprep.subr.mxu0 0.0
    %2737 = vmatpush2.msra.mxu0 0.0
    %2738 = vmatprep.subr.mxu0 0.0
    %2739 = vmatpush2.msra.mxu0 0.0
    %2740 = vmatprep.subr.mxu0 0.0
    %2741 = vmatpush2.msra.mxu0 0.0
    %2742 = vmatprep.subr.mxu0 0.0
    %2743 = vmatpush2.msra.mxu0 0.0
    %2744 = vmatprep.subr.mxu0 0.0
    %2745 = vmatpush2.msra.mxu0 0.0
    %2746 = vmatprep.mubr.f32.mxu0 0.0
    %2747 = vmatmul.mubr.f32.gmra.mxu0 %v2675
    %v2748 = vpop.f32.mrf.mxu0
    %v2749 = vadd.f32 0.0, %v2748
    %v2750 = vpop.f32.mrf.mxu0
    %v2751 = vadd.f32 0.0, %v2750
    %2752 = vdwg.mxu0
    %2753 = vmatprep.subr.mxu0 %v206
    %2754 = vmatpush1.msra.mxu0 %v205
    %2755 = vmatprep.subr.mxu0 %v202
    %2756 = vmatpush1.msra.mxu0 %v201
    %2757 = vmatprep.subr.mxu0 %v198
    %2758 = vmatpush1.msra.mxu0 %v197
    %2759 = vmatprep.subr.mxu0 %v194
    %2760 = vmatpush1.msra.mxu0 %v193
    %2761 = vmatprep.subr.mxu0 %v190
    %2762 = vmatpush1.msra.mxu0 %v189
    %2763 = vmatprep.subr.mxu0 %v186
    %2764 = vmatpush1.msra.mxu0 %v185
    %2765 = vmatprep.subr.mxu0 %v182
    %2766 = vmatpush1.msra.mxu0 %v181
    %2767 = vmatprep.subr.mxu0 %v178
    %2768 = vmatpush1.msra.mxu0 %v177
    %2769 = vmatprep.subr.mxu0 %v174
    %2770 = vmatpush1.msra.mxu0 %v173
    %2771 = vmatprep.subr.mxu0 %v170
    %2772 = vmatpush1.msra.mxu0 %v169
    %2773 = vmatprep.subr.mxu0 %v166
    %2774 = vmatpush1.msra.mxu0 %v165
    %2775 = vmatprep.subr.mxu0 %v162
    %2776 = vmatpush1.msra.mxu0 %v161
    %2777 = vmatprep.subr.mxu0 %v158
    %2778 = vmatpush1.msra.mxu0 %v157
    %2779 = vmatprep.subr.mxu0 %v154
    %2780 = vmatpush1.msra.mxu0 %v153
    %2781 = vmatprep.subr.mxu0 %v150
    %2782 = vmatpush1.msra.mxu0 %v149
    %2783 = vmatprep.subr.mxu0 %v146
    %2784 = vmatpush1.msra.mxu0 %v145
    %2785 = vmatprep.subr.mxu0 0.0
    %2786 = vmatpush2.msra.mxu0 0.0
    %2787 = vmatprep.subr.mxu0 0.0
    %2788 = vmatpush2.msra.mxu0 0.0
    %2789 = vmatprep.subr.mxu0 0.0
    %2790 = vmatpush2.msra.mxu0 0.0
    %2791 = vmatprep.subr.mxu0 0.0
    %2792 = vmatpush2.msra.mxu0 0.0
    %2793 = vmatprep.subr.mxu0 0.0
    %2794 = vmatpush2.msra.mxu0 0.0
    %2795 = vmatprep.subr.mxu0 0.0
    %2796 = vmatpush2.msra.mxu0 0.0
    %2797 = vmatprep.subr.mxu0 0.0
    %2798 = vmatpush2.msra.mxu0 0.0
    %2799 = vmatprep.subr.mxu0 0.0
    %2800 = vmatpush2.msra.mxu0 0.0
    %2801 = vmatprep.subr.mxu0 0.0
    %2802 = vmatpush2.msra.mxu0 0.0
    %2803 = vmatprep.subr.mxu0 0.0
    %2804 = vmatpush2.msra.mxu0 0.0
    %2805 = vmatprep.subr.mxu0 0.0
    %2806 = vmatpush2.msra.mxu0 0.0
    %2807 = vmatprep.subr.mxu0 0.0
    %2808 = vmatpush2.msra.mxu0 0.0
    %2809 = vmatprep.subr.mxu0 0.0
    %2810 = vmatpush2.msra.mxu0 0.0
    %2811 = vmatprep.subr.mxu0 0.0
    %2812 = vmatpush2.msra.mxu0 0.0
    %2813 = vmatprep.subr.mxu0 0.0
    %2814 = vmatpush2.msra.mxu0 0.0
    %2815 = vmatprep.subr.mxu0 0.0
    %2816 = vmatpush2.msra.mxu0 0.0
    %2817 = vmatprep.mubr.f32.mxu0 0.0
    %2818 = vmatmul.mubr.f32.gmra.mxu0 %v2675
    %v2819 = vpop.f32.mrf.mxu0
    %v2820 = vadd.f32 0.0, %v2819
    %v2821 = vpop.f32.mrf.mxu0
    %v2822 = vadd.f32 0.0, %v2821
    %2823 = vdwg.mxu0
    %v2824 = vadd.f32 %v2678, %v2749
    %v2825 = vadd.f32 %v2679, %v2751
    %v2826 = vadd.f32 %v2680, %v2820
    %v2827 = vadd.f32 %v2681, %v2822
    %v2828 = vmul.f32 %v2824, 0.5
    %v2829 = vtanh.pop %v2828
    %v2830 = vmul.f32 %v2829, 0.5
    %v2831 = vadd.f32 %v2830, 0.5
    %v2832 = vmul.f32 %v2825, 0.5
    %v2833 = vtanh.pop %v2832
    %v2834 = vmul.f32 %v2833, 0.5
    %v2835 = vadd.f32 %v2834, 0.5
    %v2836 = vtanh.pop %v2826
    %v2837 = vmul.f32 %v2827, 0.5
    %v2838 = vtanh.pop %v2837
    %v2839 = vmul.f32 %v2838, 0.5
    %v2840 = vadd.f32 %v2839, 0.5
    %v2841 = vmul.f32 %v2835, %v2673
    %v2842 = vmul.f32 %v2831, %v2836
    %v2843 = vadd.f32 %v2841, %v2842
    %v2844 = vtanh.pop %v2843
    %v2845 = vmul.f32 %v2840, %v2844
    %s2846 = scalar_lea.vmem [#allocation3], 48
    %2847 = vst [vmem:[%s2846] sm:$0xff] %v2845
    %v2848 = vld [vmem:[%s1654] sm:$0xff]
    %v2849 = vld [vmem:[%s1654 + $0x8] sm:$0xff]
    %v2850 = vld [vmem:[%s1654 + $0x10] sm:$0xff]
    %v2851 = vld [vmem:[%s1654 + $0x18] sm:$0xff]
    %2852 = vmatprep.subr.mxu0 %v204
    %2853 = vmatpush1.msra.mxu0 %v203
    %2854 = vmatprep.subr.mxu0 %v200
    %2855 = vmatpush1.msra.mxu0 %v199
    %2856 = vmatprep.subr.mxu0 %v196
    %2857 = vmatpush1.msra.mxu0 %v195
    %2858 = vmatprep.subr.mxu0 %v192
    %2859 = vmatpush1.msra.mxu0 %v191
    %2860 = vmatprep.subr.mxu0 %v188
    %2861 = vmatpush1.msra.mxu0 %v187
    %2862 = vmatprep.subr.mxu0 %v184
    %2863 = vmatpush1.msra.mxu0 %v183
    %2864 = vmatprep.subr.mxu0 %v180
    %2865 = vmatpush1.msra.mxu0 %v179
    %2866 = vmatprep.subr.mxu0 %v176
    %2867 = vmatpush1.msra.mxu0 %v175
    %2868 = vmatprep.subr.mxu0 %v172
    %2869 = vmatpush1.msra.mxu0 %v171
    %2870 = vmatprep.subr.mxu0 %v168
    %2871 = vmatpush1.msra.mxu0 %v167
    %2872 = vmatprep.subr.mxu0 %v164
    %2873 = vmatpush1.msra.mxu0 %v163
    %2874 = vmatprep.subr.mxu0 %v160
    %2875 = vmatpush1.msra.mxu0 %v159
    %2876 = vmatprep.subr.mxu0 %v156
    %2877 = vmatpush1.msra.mxu0 %v155
    %2878 = vmatprep.subr.mxu0 %v152
    %2879 = vmatpush1.msra.mxu0 %v151
    %2880 = vmatprep.subr.mxu0 %v148
    %2881 = vmatpush1.msra.mxu0 %v147
    %2882 = vmatprep.subr.mxu0 %v144
    %2883 = vmatpush1.msra.mxu0 %v143
    %2884 = vmatprep.subr.mxu0 0.0
    %2885 = vmatpush2.msra.mxu0 0.0
    %2886 = vmatprep.subr.mxu0 0.0
    %2887 = vmatpush2.msra.mxu0 0.0
    %2888 = vmatprep.subr.mxu0 0.0
    %2889 = vmatpush2.msra.mxu0 0.0
    %2890 = vmatprep.subr.mxu0 0.0
    %2891 = vmatpush2.msra.mxu0 0.0
    %2892 = vmatprep.subr.mxu0 0.0
    %2893 = vmatpush2.msra.mxu0 0.0
    %2894 = vmatprep.subr.mxu0 0.0
    %2895 = vmatpush2.msra.mxu0 0.0
    %2896 = vmatprep.subr.mxu0 0.0
    %2897 = vmatpush2.msra.mxu0 0.0
    %2898 = vmatprep.subr.mxu0 0.0
    %2899 = vmatpush2.msra.mxu0 0.0
    %2900 = vmatprep.subr.mxu0 0.0
    %2901 = vmatpush2.msra.mxu0 0.0
    %2902 = vmatprep.subr.mxu0 0.0
    %2903 = vmatpush2.msra.mxu0 0.0
    %2904 = vmatprep.subr.mxu0 0.0
    %2905 = vmatpush2.msra.mxu0 0.0
    %2906 = vmatprep.subr.mxu0 0.0
    %2907 = vmatpush2.msra.mxu0 0.0
    %2908 = vmatprep.subr.mxu0 0.0
    %2909 = vmatpush2.msra.mxu0 0.0
    %2910 = vmatprep.subr.mxu0 0.0
    %2911 = vmatpush2.msra.mxu0 0.0
    %2912 = vmatprep.subr.mxu0 0.0
    %2913 = vmatpush2.msra.mxu0 0.0
    %2914 = vmatprep.subr.mxu0 0.0
    %2915 = vmatpush2.msra.mxu0 0.0
    %2916 = vmatprep.mubr.f32.mxu0 0.0
    %2917 = vmatmul.mubr.f32.gmra.mxu0 %v2845
    %v2918 = vpop.f32.mrf.mxu0
    %v2919 = vadd.f32 0.0, %v2918
    %v2920 = vpop.f32.mrf.mxu0
    %v2921 = vadd.f32 0.0, %v2920
    %2922 = vdwg.mxu0
    %2923 = vmatprep.subr.mxu0 %v206
    %2924 = vmatpush1.msra.mxu0 %v205
    %2925 = vmatprep.subr.mxu0 %v202
    %2926 = vmatpush1.msra.mxu0 %v201
    %2927 = vmatprep.subr.mxu0 %v198
    %2928 = vmatpush1.msra.mxu0 %v197
    %2929 = vmatprep.subr.mxu0 %v194
    %2930 = vmatpush1.msra.mxu0 %v193
    %2931 = vmatprep.subr.mxu0 %v190
    %2932 = vmatpush1.msra.mxu0 %v189
    %2933 = vmatprep.subr.mxu0 %v186
    %2934 = vmatpush1.msra.mxu0 %v185
    %2935 = vmatprep.subr.mxu0 %v182
    %2936 = vmatpush1.msra.mxu0 %v181
    %2937 = vmatprep.subr.mxu0 %v178
    %2938 = vmatpush1.msra.mxu0 %v177
    %2939 = vmatprep.subr.mxu0 %v174
    %2940 = vmatpush1.msra.mxu0 %v173
    %2941 = vmatprep.subr.mxu0 %v170
    %2942 = vmatpush1.msra.mxu0 %v169
    %2943 = vmatprep.subr.mxu0 %v166
    %2944 = vmatpush1.msra.mxu0 %v165
    %2945 = vmatprep.subr.mxu0 %v162
    %2946 = vmatpush1.msra.mxu0 %v161
    %2947 = vmatprep.subr.mxu0 %v158
    %2948 = vmatpush1.msra.mxu0 %v157
    %2949 = vmatprep.subr.mxu0 %v154
    %2950 = vmatpush1.msra.mxu0 %v153
    %2951 = vmatprep.subr.mxu0 %v150
    %2952 = vmatpush1.msra.mxu0 %v149
    %2953 = vmatprep.subr.mxu0 %v146
    %2954 = vmatpush1.msra.mxu0 %v145
    %2955 = vmatprep.subr.mxu0 0.0
    %2956 = vmatpush2.msra.mxu0 0.0
    %2957 = vmatprep.subr.mxu0 0.0
    %2958 = vmatpush2.msra.mxu0 0.0
    %2959 = vmatprep.subr.mxu0 0.0
    %2960 = vmatpush2.msra.mxu0 0.0
    %2961 = vmatprep.subr.mxu0 0.0
    %2962 = vmatpush2.msra.mxu0 0.0
    %2963 = vmatprep.subr.mxu0 0.0
    %2964 = vmatpush2.msra.mxu0 0.0
    %2965 = vmatprep.subr.mxu0 0.0
    %2966 = vmatpush2.msra.mxu0 0.0
    %2967 = vmatprep.subr.mxu0 0.0
    %2968 = vmatpush2.msra.mxu0 0.0
    %2969 = vmatprep.subr.mxu0 0.0
    %2970 = vmatpush2.msra.mxu0 0.0
    %2971 = vmatprep.subr.mxu0 0.0
    %2972 = vmatpush2.msra.mxu0 0.0
    %2973 = vmatprep.subr.mxu0 0.0
    %2974 = vmatpush2.msra.mxu0 0.0
    %2975 = vmatprep.subr.mxu0 0.0
    %2976 = vmatpush2.msra.mxu0 0.0
    %2977 = vmatprep.subr.mxu0 0.0
    %2978 = vmatpush2.msra.mxu0 0.0
    %2979 = vmatprep.subr.mxu0 0.0
    %2980 = vmatpush2.msra.mxu0 0.0
    %2981 = vmatprep.subr.mxu0 0.0
    %2982 = vmatpush2.msra.mxu0 0.0
    %2983 = vmatprep.subr.mxu0 0.0
    %2984 = vmatpush2.msra.mxu0 0.0
    %2985 = vmatprep.subr.mxu0 0.0
    %2986 = vmatpush2.msra.mxu0 0.0
    %2987 = vmatprep.mubr.f32.mxu0 0.0
    %2988 = vmatmul.mubr.f32.gmra.mxu0 %v2845
    %v2989 = vpop.f32.mrf.mxu0
    %v2990 = vadd.f32 0.0, %v2989
    %v2991 = vpop.f32.mrf.mxu0
    %v2992 = vadd.f32 0.0, %v2991
    %2993 = vdwg.mxu0
    %v2994 = vadd.f32 %v2848, %v2919
    %v2995 = vadd.f32 %v2849, %v2921
    %v2996 = vadd.f32 %v2850, %v2990
    %v2997 = vadd.f32 %v2851, %v2992
    %v2998 = vmul.f32 %v2994, 0.5
    %v2999 = vtanh.pop %v2998
    %v3000 = vmul.f32 %v2999, 0.5
    %v3001 = vadd.f32 %v3000, 0.5
    %v3002 = vmul.f32 %v2995, 0.5
    %v3003 = vtanh.pop %v3002
    %v3004 = vmul.f32 %v3003, 0.5
    %v3005 = vadd.f32 %v3004, 0.5
    %v3006 = vtanh.pop %v2996
    %v3007 = vmul.f32 %v2997, 0.5
    %v3008 = vtanh.pop %v3007
    %v3009 = vmul.f32 %v3008, 0.5
    %v3010 = vadd.f32 %v3009, 0.5
    %v3011 = vmul.f32 %v3005, %v2843
    %v3012 = vmul.f32 %v3001, %v3006
    %v3013 = vadd.f32 %v3011, %v3012
    %v3014 = vtanh.pop %v3013
    %v3015 = vmul.f32 %v3010, %v3014
    %s3016 = scalar_lea.vmem [#allocation3], 56
    %3017 = vst [vmem:[%s3016] sm:$0xff] %v3015
    %v3018 = vld [vmem:[#allocation3] sm:$0xff]
    %v3019 = vmul.f32 %v3018, %v3015
    %3020 = vadd.xlane.f32.xlu0 %v3019
    %v3021 = vpop.xlane.xlu0 %3020
    %v3022 = vld [vmem:[%s1996] sm:$0xff]
    %v3023 = vmul.f32 %v3022, %v3015
    %3024 = vadd.xlane.f32.xlu0 %v3023
    %v3025 = vpop.xlane.xlu0 %3024
    %v3026 = vld [vmem:[%s2166] sm:$0xff]
    %v3027 = vmul.f32 %v3026, %v3015
    %3028 = vadd.xlane.f32.xlu0 %v3027
    %v3029 = vpop.xlane.xlu0 %3028
    %v3030 = vld [vmem:[%s2336] sm:$0xff]
    %v3031 = vmul.f32 %v3030, %v3015
    %3032 = vadd.xlane.f32.xlu0 %v3031
    %v3033 = vpop.xlane.xlu0 %3032
    %v3034 = vld [vmem:[%s2506] sm:$0xff]
    %v3035 = vmul.f32 %v3034, %v3015
    %3036 = vadd.xlane.f32.xlu0 %v3035
    %v3037 = vpop.xlane.xlu0 %3036
    %v3038 = vld [vmem:[%s2676] sm:$0xff]
    %v3039 = vmul.f32 %v3038, %v3015
    %3040 = vadd.xlane.f32.xlu0 %v3039
    %v3041 = vpop.xlane.xlu0 %3040
    %v3042 = vld [vmem:[%s2846] sm:$0xff]
    %v3043 = vmul.f32 %v3042, %v3015
    %3044 = vadd.xlane.f32.xlu0 %v3043
    %v3045 = vpop.xlane.xlu0 %3044
    %v3046 = vld [vmem:[%s3016] sm:$0xff]
    %v3047 = vmul.f32 %v3046, %v3015
    %3048 = vadd.xlane.f32.xlu0 %v3047
    %v3049 = vpop.xlane.xlu0 %3048
    %v3050 = vmax.f32 %v3021, %v3025
    %v3051 = vmax.f32 %v3050, %v3029
    %v3052 = vmax.f32 %v3051, %v3033
    %v3053 = vmax.f32 %v3052, %v3037
    %v3054 = vmax.f32 %v3053, %v3041
    %v3055 = vmax.f32 %v3054, %v3045
    %v3056 = vmax.f32 %v3055, %v3049
    %v3057 = vsub.f32 %v3021, %v3056
    %v3058 = vmul.f32 %v3057, 1.442695
    %v3059 = vpow.pop %v3058
    %v3060 = vadd.f32 %v3059, 0.0
    %v3061 = vmul.f32 %v3059, %v3018
    %v3062 = vadd.f32 %v3061, 0.0
    %v3063 = vsub.f32 %v3025, %v3056
    %v3064 = vmul.f32 %v3063, 1.442695
    %v3065 = vpow.pop %v3064
    %v3066 = vadd.f32 %v3060, %v3065
    %v3067 = vmul.f32 %v3065, %v3022
    %v3068 = vadd.f32 %v3062, %v3067
    %v3069 = vsub.f32 %v3029, %v3056
    %v3070 = vmul.f32 %v3069, 1.442695
    %v3071 = vpow.pop %v3070
    %v3072 = vadd.f32 %v3066, %v3071
    %v3073 = vmul.f32 %v3071, %v3026
    %v3074 = vadd.f32 %v3068, %v3073
    %v3075 = vsub.f32 %v3033, %v3056
    %v3076 = vmul.f32 %v3075, 1.442695
    %v3077 = vpow.pop %v3076
    %v3078 = vadd.f32 %v3072, %v3077
    %v3079 = vmul.f32 %v3077, %v3030
    %v3080 = vadd.f32 %v3074, %v3079
    %v3081 = vsub.f32 %v3037, %v3056
    %v3082 = vmul.f32 %v3081, 1.442695
    %v3083 = vpow.pop %v3082
    %v3084 = vadd.f32 %v3078, %v3083
    %v3085 = vmul.f32 %v3083, %v3034
    %v3086 = vadd.f32 %v3080, %v3085
    %v3087 = vsub.f32 %v3041, %v3056
    %v3088 = vmul.f32 %v3087, 1.442695
    %v3089 = vpow.pop %v3088
    %v3090 = vadd.f32 %v3084, %v3089
    %v3091 = vmul.f32 %v3089, %v3038
    %v3092 = vadd.f32 %v3086, %v3091
    %v3093 = vsub.f32 %v3045, %v3056
    %v3094 = vmul.f32 %v3093, 1.442695
    %v3095 = vpow.pop %v3094
    %v3096 = vadd.f32 %v3090, %v3095
    %v3097 = vmul.f32 %v3095, %v3042
    %v3098 = vadd.f32 %v3092, %v3097
    %v3099 = vsub.f32 %v3049, %v3056
    %v3100 = vmul.f32 %v3099, 1.442695
    %v3101 = vpow.pop %v3100
    %v3102 = vadd.f32 %v3096, %v3101
    %v3103 = vmul.f32 %v3101, %v3046
    %v3104 = vadd.f32 %v3098, %v3103
    %v3105 = vrcp.pop %v3102
    %v3106 = vmul.f32 1.0, %v3105
    %v3107 = vmul.f32 %v3104, %v3106
    %v3108 = vld [vmem:[#allocation10] sm:$0xff]
    %v3109 = vld [vmem:[#allocation10 + $0x8] sm:$0xff]
    %v3110 = vld [vmem:[#allocation10 + $0x10] sm:$0xff]
    %v3111 = vld [vmem:[#allocation10 + $0x18] sm:$0xff]
    %v3112 = vld [vmem:[#allocation10 + $0x20] sm:$0xff]
    %v3113 = vld [vmem:[#allocation10 + $0x28] sm:$0xff]
    %v3114 = vld [vmem:[#allocation10 + $0x30] sm:$0xff]
    %v3115 = vld [vmem:[#allocation10 + $0x38] sm:$0xff]
    %v3116 = vld [vmem:[#allocation10 + $0x40] sm:$0xff]
    %v3117 = vld [vmem:[#allocation10 + $0x48] sm:$0xff]
    %v3118 = vld [vmem:[#allocation10 + $0x50] sm:$0xff]
    %v3119 = vld [vmem:[#allocation10 + $0x58] sm:$0xff]
    %v3120 = vld [vmem:[#allocation10 + $0x60] sm:$0xff]
    %v3121 = vld [vmem:[#allocation10 + $0x68] sm:$0xff]
    %v3122 = vld [vmem:[#allocation10 + $0x70] sm:$0xff]
    %v3123 = vld [vmem:[#allocation10 + $0x78] sm:$0xff]
    %v3124 = vld [vmem:[%s5] sm:$0x1]
    %v3126 = vlaneseq
    %v3127 = vshrl.u32 %v3126, 7
    %v3128 = vsub.s32 0, %v3127
    %v3129 = vrot.slane %v3124, %v3128
    %3131 = vmatprep.subr.mxu0 0.0
    %3132 = vmatpush1.msra.mxu0 %v3123
    %3133 = vmatprep.subr.mxu0 0.0
    %3134 = vmatpush1.msra.mxu0 %v3122
    %3135 = vmatprep.subr.mxu0 0.0
    %3136 = vmatpush1.msra.mxu0 %v3121
    %3137 = vmatprep.subr.mxu0 0.0
    %3138 = vmatpush1.msra.mxu0 %v3120
    %3139 = vmatprep.subr.mxu0 0.0
    %3140 = vmatpush1.msra.mxu0 %v3119
    %3141 = vmatprep.subr.mxu0 0.0
    %3142 = vmatpush1.msra.mxu0 %v3118
    %3143 = vmatprep.subr.mxu0 0.0
    %3144 = vmatpush1.msra.mxu0 %v3117
    %3145 = vmatprep.subr.mxu0 0.0
    %3146 = vmatpush1.msra.mxu0 %v3116
    %3147 = vmatprep.subr.mxu0 0.0
    %3148 = vmatpush1.msra.mxu0 %v3115
    %3149 = vmatprep.subr.mxu0 0.0
    %3150 = vmatpush1.msra.mxu0 %v3114
    %3151 = vmatprep.subr.mxu0 0.0
    %3152 = vmatpush1.msra.mxu0 %v3113
    %3153 = vmatprep.subr.mxu0 0.0
    %3154 = vmatpush1.msra.mxu0 %v3112
    %3155 = vmatprep.subr.mxu0 0.0
    %3156 = vmatpush1.msra.mxu0 %v3111
    %3157 = vmatprep.subr.mxu0 0.0
    %3158 = vmatpush1.msra.mxu0 %v3110
    %3159 = vmatprep.subr.mxu0 0.0
    %3160 = vmatpush1.msra.mxu0 %v3109
    %3161 = vmatprep.subr.mxu0 0.0
    %3162 = vmatpush1.msra.mxu0 %v3108
    %3163 = vmatprep.subr.mxu0 0.0
    %3164 = vmatpush2.msra.mxu0 0.0
    %3165 = vmatprep.subr.mxu0 0.0
    %3166 = vmatpush2.msra.mxu0 0.0
    %3167 = vmatprep.subr.mxu0 0.0
    %3168 = vmatpush2.msra.mxu0 0.0
    %3169 = vmatprep.subr.mxu0 0.0
    %3170 = vmatpush2.msra.mxu0 0.0
    %3171 = vmatprep.subr.mxu0 0.0
    %3172 = vmatpush2.msra.mxu0 0.0
    %3173 = vmatprep.subr.mxu0 0.0
    %3174 = vmatpush2.msra.mxu0 0.0
    %3175 = vmatprep.subr.mxu0 0.0
    %3176 = vmatpush2.msra.mxu0 0.0
    %3177 = vmatprep.subr.mxu0 0.0
    %3178 = vmatpush2.msra.mxu0 0.0
    %3179 = vmatprep.subr.mxu0 0.0
    %3180 = vmatpush2.msra.mxu0 0.0
    %3181 = vmatprep.subr.mxu0 0.0
    %3182 = vmatpush2.msra.mxu0 0.0
    %3183 = vmatprep.subr.mxu0 0.0
    %3184 = vmatpush2.msra.mxu0 0.0
    %3185 = vmatprep.subr.mxu0 0.0
    %3186 = vmatpush2.msra.mxu0 0.0
    %3187 = vmatprep.subr.mxu0 0.0
    %3188 = vmatpush2.msra.mxu0 0.0
    %3189 = vmatprep.subr.mxu0 0.0
    %3190 = vmatpush2.msra.mxu0 0.0
    %3191 = vmatprep.subr.mxu0 0.0
    %3192 = vmatpush2.msra.mxu0 0.0
    %3193 = vmatprep.subr.mxu0 0.0
    %3194 = vmatpush2.msra.mxu0 0.0
    %3195 = vmatprep.mubr.f32.mxu0 0.0
    %3196 = vmatmul.mubr.f32.gmra.mxu0 %v3107
    %v3197 = vpop.f32.mrf.mxu0
    %v3198 = vadd.f32 %v3129, %v3197
    %v3199 = vpop.f32.mrf.mxu0
    %3200 = vdwg.mxu0
    %3201 = vst [vmem:[#allocation12] sm:$0xff] %v3198
    // Predicated region
    $region42: #{tpu_custom_call.1} parent=1 // pred_check
      _
    $region43: #{tpu_custom_call.1} parent=1 // pred_check_branch
      %3203 = sbr.rel (0) target = $region45
    $region44: #{tpu_custom_call.1} parent=1 // pred_region
      %s3205 = ssub.s32 128, 128
      %3206 = vsyncadd [#allocation6], %s3205
      %s3208 = sshll.u32 [#allocation12], 4
      %s3209 = int_to_ptr.vmem [resolvable:$true] %s3208
      %3211 = dma.vmem_to_hbm [thread:$0]  %s3209, 128, %s6, [#allocation6]
    $region45: #{tpu_custom_call.1} parent=1 // pred_fallthru
      _
    // Predicated region
    $region46: #{tpu_custom_call.1} parent=1 // pred_check
      _
    $region47: #{tpu_custom_call.1} parent=1 // pred_check_branch
      %3213 = sbr.rel (0) target = $region49
    $region48: #{tpu_custom_call.1} parent=1 // pred_region
      %3214 = dma.done [#allocation6], 128
    $region49: #{tpu_custom_call.1} parent=1 // pred_fallthru
      _
    %3215 = vsyncpa [#allocation5], 1
    %3216 = vsyncpa [#allocation8], 1
    %3217 = vsyncpa [#allocation11], 1
    %3218 = vsyncpa [#allocation6], 1

</llo_original>
